<compile_context>
chip_gen: v7x
topology: tpu7x:2x2x1
jax: 0.10.0
libtpu: 0.0.40
codegen_flags: <defaults>
</compile_context>

<pallas_src>
import functools

import numpy as np
import jax
import jax.numpy as jnp
from jax import lax
from jax.experimental import pallas as pl
from jax.experimental.pallas import tpu as pltpu


# --------------------------------------------------------------------------
# sincos positional embedding (numpy, identical to the PyTorch reference)
# --------------------------------------------------------------------------
def get_1d_sincos_pos_embed_from_grid(embed_dim, pos):
    assert embed_dim % 2 == 0
    omega = np.arange(embed_dim // 2, dtype=np.float64)
    omega /= embed_dim / 2.0
    omega = 1.0 / 10000 ** omega
    pos = pos.reshape(-1)
    out = np.einsum("m,d->md", pos, omega)
    return np.concatenate([np.sin(out), np.cos(out)], axis=1)


def get_2d_sincos_pos_embed(embed_dim, grid_size):
    assert embed_dim % 2 == 0
    grid_h = np.arange(grid_size[0], dtype=np.float32)
    grid_w = np.arange(grid_size[1], dtype=np.float32)
    grid = np.meshgrid(grid_w, grid_h)
    grid = np.stack(grid, axis=0).reshape([2, 1, grid_size[0], grid_size[1]])
    emb_h = get_1d_sincos_pos_embed_from_grid(embed_dim // 2, grid[0])
    emb_w = get_1d_sincos_pos_embed_from_grid(embed_dim // 2, grid[1])
    return np.concatenate([emb_h, emb_w], axis=1)


# --------------------------------------------------------------------------
# in-kernel helpers
# --------------------------------------------------------------------------
def _gelu_tanh(x):
    # TODO(synk): tanh-form GELU (rides the EUP slot) vs PyTorch's exact-erf
    #             GELU: max abs deviation ~1e-3, fine for f32 inference.
    c = 0.7978845608028654  # sqrt(2/pi)
    return 0.5 * x * (1.0 + jnp.tanh(c * (x + 0.044715 * (x * x * x))))


def _layernorm(x, g, b, eps=1e-5):
    mu = jnp.mean(x, axis=-1, keepdims=True)
    xc = x - mu
    var = jnp.mean(xc * xc, axis=-1, keepdims=True)
    return xc * lax.rsqrt(var + eps) * g + b


def _const_spec(shape):
    nd = len(shape)
    if nd == 2:
        return pl.BlockSpec(shape, lambda i, j: (0, 0))
    return pl.BlockSpec(shape, lambda i, j: (0,) * nd)


_CPARAMS_1D = pltpu.CompilerParams(
    dimension_semantics=("parallel",), vmem_limit_bytes=32 * 1024 * 1024)
_CPARAMS_2D = pltpu.CompilerParams(
    dimension_semantics=("parallel", "parallel"),
    vmem_limit_bytes=32 * 1024 * 1024)


# --------------------------------------------------------------------------
# kernel 1: decoder_embed + pos_embed  (pos passed once, never broadcast to B)
# --------------------------------------------------------------------------
def _embed_kernel(x_ref, w_ref, b_ref, pos_ref, o_ref):
    x = x_ref[0].astype(jnp.bfloat16)
    y = jnp.dot(x, w_ref[...], preferred_element_type=jnp.float32)
    o_ref[0] = (y + b_ref[...] + pos_ref[...]).astype(o_ref.dtype)


def decoder_embed(x, w_bf16, b, pos):
    bsz, l, cd = x.shape
    e = w_bf16.shape[1]
    return pl.pallas_call(
        _embed_kernel,
        out_shape=jax.ShapeDtypeStruct((bsz, l, e), jnp.float32),
        grid=(bsz,),
        in_specs=[
            pl.BlockSpec((1, l, cd), lambda i: (i, 0, 0)),
            pl.BlockSpec((cd, e), lambda i: (0, 0)),
            pl.BlockSpec((1, e), lambda i: (0, 0)),
            pl.BlockSpec((l, e), lambda i: (0, 0)),
        ],
        out_specs=pl.BlockSpec((1, l, e), lambda i: (i, 0, 0)),
        compiler_params=_CPARAMS_1D,
    )(x, w_bf16, b, pos)


# --------------------------------------------------------------------------
# kernel 2: one fused Swin block (per batch element, per window)
# --------------------------------------------------------------------------
def _swin_block_kernel(x_ref, bias_ref,
                       n1g_ref, n1b_ref,
                       qw_ref, qb_ref, kw_ref, kb_ref, vw_ref, vb_ref,
                       pw_ref, pb_ref,
                       n2g_ref, n2b_ref,
                       f1w_ref, f1b_ref, f2w_ref, f2b_ref,
                       o_ref, *, num_heads, scale):
    x = x_ref[0, 0]                                         # (N, C) f32
    n, c = x.shape

    # ---- windowed multi-head self-attention (pre-LN) ----
    y = _layernorm(x, n1g_ref[...], n1b_ref[...])
    yb = y.astype(jnp.bfloat16)

    attn = jnp.zeros((n, c), jnp.float32)
    for h in range(num_heads):                              # static unroll
        qh = jnp.dot(yb, qw_ref[h], preferred_element_type=jnp.float32) + qb_ref[h]
        kh = jnp.dot(yb, kw_ref[h], preferred_element_type=jnp.float32) + kb_ref[h]
        vh = jnp.dot(yb, vw_ref[h], preferred_element_type=jnp.float32) + vb_ref[h]
        s = lax.dot_general(qh.astype(jnp.bfloat16), kh.astype(jnp.bfloat16),
                            (((1,), (1,)), ((), ())),
                            preferred_element_type=jnp.float32)
        s = s * scale + bias_ref[0, h]                      # rel-pos bias (+mask)
        s = s - jnp.max(s, axis=-1, keepdims=True)
        p = jnp.exp(s)
        p = p * pl.reciprocal(jnp.sum(p, axis=-1, keepdims=True), approx=True)
        oh = jnp.dot(p.astype(jnp.bfloat16), vh.astype(jnp.bfloat16),
                     preferred_element_type=jnp.float32)
        # per-head slice of the output projection -> no in-kernel concat
        attn = attn + jnp.dot(oh.astype(jnp.bfloat16), pw_ref[h],
                              preferred_element_type=jnp.float32)

    x = x + attn + pb_ref[...]                              # residual 1

    # ---- MLP (pre-LN, fc1 + tanh-GELU + fc2) ----
    y = _layernorm(x, n2g_ref[...], n2b_ref[...])
    hmid = jnp.dot(y.astype(jnp.bfloat16), f1w_ref[...],
                   preferred_element_type=jnp.float32) + f1b_ref[...]
    hmid = _gelu_tanh(hmid)
    y2 = jnp.dot(hmid.astype(jnp.bfloat16), f2w_ref[...],
                 preferred_element_type=jnp.float32) + f2b_ref[...]

    o_ref[0, 0] = (x + y2).astype(o_ref.dtype)              # residual 2


def swin_block(xw, bp, *, num_heads):
    """xw: (B, nW, N, C) window-layout activations."""
    b, nw, n, c = xw.shape
    dh = c // num_heads
    kernel = functools.partial(_swin_block_kernel, num_heads=num_heads,
                               scale=float(dh) ** -0.5)
    in_specs = [
        pl.BlockSpec((1, 1, n, c), lambda i, j: (i, j, 0, 0)),          # x
        pl.BlockSpec((1, num_heads, n, n), lambda i, j: (j, 0, 0, 0)),  # bias
        _const_spec(bp["n1g"].shape), _const_spec(bp["n1b"].shape),
        _const_spec(bp["qw"].shape), _const_spec(bp["qb"].shape),
        _const_spec(bp["kw"].shape), _const_spec(bp["kb"].shape),
        _const_spec(bp["vw"].shape), _const_spec(bp["vb"].shape),
        _const_spec(bp["pw"].shape), _const_spec(bp["pb"].shape),
        _const_spec(bp["n2g"].shape), _const_spec(bp["n2b"].shape),
        _const_spec(bp["f1w"].shape), _const_spec(bp["f1b"].shape),
        _const_spec(bp["f2w"].shape), _const_spec(bp["f2b"].shape),
    ]
    return pl.pallas_call(
        kernel,
        out_shape=jax.ShapeDtypeStruct((b, nw, n, c), jnp.float32),
        grid=(b, nw),
        in_specs=in_specs,
        out_specs=pl.BlockSpec((1, 1, n, c), lambda i, j: (i, j, 0, 0)),
        compiler_params=_CPARAMS_2D,
    )(xw, bp["bias"],
      bp["n1g"], bp["n1b"],
      bp["qw"], bp["qb"], bp["kw"], bp["kb"], bp["vw"], bp["vb"],
      bp["pw"], bp["pb"],
      bp["n2g"], bp["n2b"],
      bp["f1w"], bp["f1b"], bp["f2w"], bp["f2b"])


# --------------------------------------------------------------------------
# kernel 3: final LayerNorm + GELU + pred linear (lane-dense p*p*cin output)
# --------------------------------------------------------------------------
def _norm_pred_kernel(x_ref, g_ref, b_ref, w_ref, pb_ref, o_ref):
    x = x_ref[0]
    y = _gelu_tanh(_layernorm(x, g_ref[...], b_ref[...]))
    o = jnp.dot(y.astype(jnp.bfloat16), w_ref[...],
                preferred_element_type=jnp.float32) + pb_ref[...]
    o_ref[0] = o.astype(o_ref.dtype)


def norm_pred(x, g, b, w_bf16, pb):
    bsz, l, e = x.shape
    pdim = w_bf16.shape[1]
    return pl.pallas_call(
        _norm_pred_kernel,
        out_shape=jax.ShapeDtypeStruct((bsz, l, pdim), jnp.float32),
        grid=(bsz,),
        in_specs=[
            pl.BlockSpec((1, l, e), lambda i: (i, 0, 0)),
            pl.BlockSpec((1, e), lambda i: (0, 0)),
            pl.BlockSpec((1, e), lambda i: (0, 0)),
            pl.BlockSpec((e, pdim), lambda i: (0, 0)),
            pl.BlockSpec((1, pdim), lambda i: (0, 0)),
        ],
        out_specs=pl.BlockSpec((1, l, pdim), lambda i: (i, 0, 0)),
        compiler_params=_CPARAMS_1D,
    )(x, g, b, w_bf16, pb)


# --------------------------------------------------------------------------
# XLA layout glue (pure permutations): window partition / reverse, unpatchify
# --------------------------------------------------------------------------
def _to_windows(x, h, w, ws):
    b, _, c = x.shape
    y = x.reshape(b, h // ws, ws, w // ws, ws, c).transpose(0, 1, 3, 2, 4, 5)
    return y.reshape(b, (h // ws) * (w // ws), ws * ws, c)


def _from_windows(xw, h, w, ws):
    b, c = xw.shape[0], xw.shape[-1]
    y = xw.reshape(b, h // ws, w // ws, ws, ws, c).transpose(0, 1, 3, 2, 4, 5)
    return y.reshape(b, h * w, c)


def vq_decoder_forward(x, params, cfg):
    """x: (B, num_patches, codebook_dim) -> image (B, in_chans, H, W)  [NCHW]."""
    b, l, _ = x.shape
    e = cfg["embed_dim"]
    h, w, p, cin = cfg["h"], cfg["w"], cfg["patch_size"], cfg["in_chans"]
    ws = cfg["window_size_eff"]
    nh = cfg["num_heads"]

    # decoder_embed + pos_embed (one fused kernel)
    x = decoder_embed(x, params["dec_w"], params["dec_b"], params["pos_embed"])

    for i, bp in enumerate(params["blocks"]):
        shift = cfg["shifts"][i]
        xs = x
        if shift > 0:
            # TODO(synk): fuse the cyclic shift into the block kernel with
            #             pltpu.roll instead of XLA roll glue.
            xs = jnp.roll(x.reshape(b, h, w, e), (-shift, -shift),
                          (1, 2)).reshape(b, l, e)
        xw = _to_windows(xs, h, w, ws)           # (B, nW, N, C)
        yw = swin_block(xw, bp, num_heads=nh)    # entire block fused in VMEM
        y = _from_windows(yw, h, w, ws)
        if shift > 0:
            y = jnp.roll(y.reshape(b, h, w, e), (shift, shift),
                         (1, 2)).reshape(b, l, e)
        x = y

    # norm (LayerNorm + GELU) + pred (one fused kernel, 256-lane output)
    x = norm_pred(x, params["norm_g"], params["norm_b"],
                  params["pred_w"], params["pred_b"])

    # unpatchify (pure layout, XLA)
    x = x.reshape(b, h, w, p, p, cin)
    x = jnp.einsum("nhwpqc->nchpwq", x)
    return x.reshape(b, cin, h * p, w * p)


# --------------------------------------------------------------------------
# deterministic parameter initialization (mirrors the module's __init__);
# weights are pre-packed head-major and pre-cast to bf16, the relative
# position bias gather (+ shift mask) is hoisted here out of the forward.
# --------------------------------------------------------------------------
def _relative_position_index(ws):
    coords = np.stack(np.meshgrid(np.arange(ws), np.arange(ws), indexing="ij"))
    flat = coords.reshape(2, -1)
    rel = (flat[:, :, None] - flat[:, None, :]).transpose(1, 2, 0).astype(np.int64)
    rel[:, :, 0] += ws - 1
    rel[:, :, 1] += ws - 1
    rel[:, :, 0] *= 2 * ws - 1
    return rel.sum(-1)  # (N, N)


def _attn_mask_np(h, w, ws, shift):
    nw, n = (h // ws) * (w // ws), ws * ws
    if shift == 0:
        return np.zeros((nw, n, n), np.float32)
    img_mask = np.zeros((1, h, w, 1), np.float32)
    cnt = 0
    for hs in (slice(0, -ws), slice(-ws, -shift), slice(-shift, None)):
        for wsl in (slice(0, -ws), slice(-ws, -shift), slice(-shift, None)):
            img_mask[:, hs, wsl, :] = cnt
            cnt += 1
    mw = img_mask.reshape(1, h // ws, ws, w // ws, ws, 1)
    mw = mw.transpose(0, 1, 3, 2, 4, 5).reshape(-1, ws * ws)
    attn_mask = mw[:, None, :] - mw[:, :, None]
    return np.where(attn_mask != 0, -100.0, 0.0).astype(np.float32)


def init_model(key, cfg):
    ih, iw = cfg["img_size"]
    p, e, nh = cfg["patch_size"], cfg["embed_dim"], cfg["num_heads"]
    depth, cd, cin = cfg["depth"], cfg["codebook_dim"], cfg["in_chans"]
    h, w = ih // p, iw // p
    num_patches = h * w
    dh = e // nh

    # standard Swin rule: window can't exceed the feature-map resolution
    ws = cfg["window_size"]
    if min(h, w) <= ws:
        ws_eff, shifts = min(h, w), [0] * depth
    else:
        ws_eff = ws
        shifts = [0 if i % 2 == 0 else ws // 2 for i in range(depth)]
    n = ws_eff * ws_eff

    keys = iter(jax.random.split(key, 4 + depth * 6))

    def xavier(k, fi, fo):
        a = float(np.sqrt(6.0 / (fi + fo)))
        return jax.random.uniform(k, (fi, fo), jnp.float32, -a, a)

    params = {
        "dec_w": xavier(next(keys), cd, e).astype(jnp.bfloat16),
        "dec_b": jnp.zeros((1, e), jnp.float32),
        "pos_embed": jnp.asarray(get_2d_sincos_pos_embed(e, (h, w)),
                                 jnp.float32),                      # (L, E)
        "norm_g": jnp.ones((1, e), jnp.float32),
        "norm_b": jnp.zeros((1, e), jnp.float32),
        "pred_w": xavier(next(keys), e, p * p * cin).astype(jnp.bfloat16),
        "pred_b": jnp.full((1, p * p * cin), cfg["bias_init"], jnp.float32),
    }

    rel_index = _relative_position_index(ws_eff)
    hidden = 4 * e
    blocks = []
    for i in range(depth):
        qkv_w = xavier(next(keys), e, 3 * e)       # PyTorch-style joint qkv init
        q_w, k_w, v_w = qkv_w[:, :e], qkv_w[:, e:2 * e], qkv_w[:, 2 * e:]
        proj_w = xavier(next(keys), e, e)
        rel_table = 0.02 * jax.random.normal(
            next(keys), ((2 * ws_eff - 1) ** 2, nh), jnp.float32)
        rel_bias = rel_table[jnp.asarray(rel_index.reshape(-1), jnp.int32)]
        rel_bias = rel_bias.reshape(n, n, nh).transpose(2, 0, 1)    # (nh, N, N)
        mask = jnp.asarray(_attn_mask_np(h, w, ws_eff, shifts[i]))  # (nW, N, N)
        bias = rel_bias[None, :, :, :] + mask[:, None, :, :]        # (nW, nh, N, N)

        def heads_first(m):  # (E, E) -> (nh, E, dh)
            return m.reshape(e, nh, dh).transpose(1, 0, 2)

        blocks.append({
            "n1g": jnp.ones((1, e), jnp.float32),
            "n1b": jnp.zeros((1, e), jnp.float32),
            "qw": heads_first(q_w).astype(jnp.bfloat16),
            "qb": jnp.zeros((nh, 1, dh), jnp.float32),
            "kw": heads_first(k_w).astype(jnp.bfloat16),
            "kb": jnp.zeros((nh, 1, dh), jnp.float32),
            "vw": heads_first(v_w).astype(jnp.bfloat16),
            "vb": jnp.zeros((nh, 1, dh), jnp.float32),
            "pw": proj_w.reshape(nh, dh, e).astype(jnp.bfloat16),
            "pb": jnp.zeros((1, e), jnp.float32),
            "bias": jnp.asarray(bias, jnp.float32),
            "n2g": jnp.ones((1, e), jnp.float32),
            "n2b": jnp.zeros((1, e), jnp.float32),
            "f1w": xavier(next(keys), e, hidden).astype(jnp.bfloat16),
            "f1b": jnp.zeros((1, hidden), jnp.float32),
            "f2w": xavier(next(keys), hidden, e).astype(jnp.bfloat16),
            "f2b": jnp.zeros((1, e), jnp.float32),
        })
    params["blocks"] = blocks

    cfg = dict(cfg)
    cfg.update(h=h, w=w, num_patches=num_patches,
               window_size_eff=ws_eff, shifts=shifts)
    return params, cfg


# --------------------------------------------------------------------------
if __name__ == "__main__":
    cfg = dict(img_size=(16, 16), patch_size=8, window_size=8, in_chans=4,
               embed_dim=32, num_heads=4, depth=2, codebook_dim=16,
               bias_init=-3.0)

    key = jax.random.PRNGKey(0)
    k_param, k_x = jax.random.split(key)
    params, cfg = init_model(k_param, cfg)

    B = 2
    x = jax.random.normal(k_x, (B, cfg["num_patches"], cfg["codebook_dim"]),
                          jnp.float32)

    fwd = jax.jit(functools.partial(vq_decoder_forward, cfg=cfg))
    out = fwd(x, params)
    out = jax.block_until_ready(out)

    assert out.shape == (B, cfg["in_chans"], cfg["img_size"][0], cfg["img_size"][1])
    assert out.dtype == jnp.float32
    assert bool(jnp.all(jnp.isfinite(out)))
    print("KERNEL_OK")
</pallas_src>

<mosaic_0001>
module attributes {stable_mosaic.version = 11 : i64} {
  func.func @_embed_kernel(%arg0: i32, %arg1: memref<1x4x16xf32, #tpu.memory_space<vmem>>, %arg2: memref<16x32xbf16, #tpu.memory_space<vmem>>, %arg3: memref<1x32xf32, #tpu.memory_space<vmem>>, %arg4: memref<4x32xf32, #tpu.memory_space<vmem>>, %arg5: memref<1x4x32xf32, #tpu.memory_space<vmem>>) attributes {dimension_semantics = [#tpu.dimension_semantics<parallel>], iteration_bounds = array<i64: 2>, scalar_prefetch = 0 : i64, scratch_operands = 0 : i64, tpu.core_type = #tpu.core_type<tc>, window_params = [{transform_indices = @transform_0, window_bounds = array<i64: 1, 4, 16>}, {pipeline_mode = #tpu.pipeline_mode<synchronous>, transform_indices = @transform_1, window_bounds = array<i64: 16, 32>}, {pipeline_mode = #tpu.pipeline_mode<synchronous>, transform_indices = @transform_2, window_bounds = array<i64: 1, 32>}, {pipeline_mode = #tpu.pipeline_mode<synchronous>, transform_indices = @transform_3, window_bounds = array<i64: 4, 32>}, {transform_indices = @transform_4, window_bounds = array<i64: 1, 4, 32>}]} {
    %c0 = arith.constant 0 : index
    %c0_0 = arith.constant 0 : index
    %c0_1 = arith.constant 0 : index
    %0 = vector.load %arg1[%c0, %c0_0, %c0_1] : memref<1x4x16xf32, #tpu.memory_space<vmem>>, vector<1x4x16xf32>
    %1 = vector.shape_cast %0 : vector<1x4x16xf32> to vector<4x16xf32>
    %2 = arith.truncf %1 : vector<4x16xf32> to vector<4x16xbf16>
    %c0_2 = arith.constant 0 : index
    %c0_3 = arith.constant 0 : index
    %3 = vector.load %arg2[%c0_2, %c0_3] : memref<16x32xbf16, #tpu.memory_space<vmem>>, vector<16x32xbf16>
    %cst = arith.constant dense<0.000000e+00> : vector<4x32xf32>
    %4 = tpu.matmul %2, %3, %cst {dimension_numbers = #tpu.dot_dimension_numbers<[1], [0], [0], [1], [0, 0, 1, 1], [], []>} : vector<4x16xbf16>, vector<16x32xbf16>, vector<4x32xf32> -> vector<4x32xf32>
    %c0_4 = arith.constant 0 : index
    %c0_5 = arith.constant 0 : index
    %5 = vector.load %arg3[%c0_4, %c0_5] : memref<1x32xf32, #tpu.memory_space<vmem>>, vector<1x32xf32>
    %6 = vector.broadcast %5 : vector<1x32xf32> to vector<4x32xf32>
    %7 = arith.addf %4, %6 : vector<4x32xf32>
    %c0_6 = arith.constant 0 : index
    %c0_7 = arith.constant 0 : index
    %8 = vector.load %arg4[%c0_6, %c0_7] : memref<4x32xf32, #tpu.memory_space<vmem>>, vector<4x32xf32>
    %9 = arith.addf %7, %8 : vector<4x32xf32>
    %c0_8 = arith.constant 0 : index
    %c0_9 = arith.constant 0 : index
    %c0_10 = arith.constant 0 : index
    %10 = vector.load %arg5[%c0_8, %c0_9, %c0_10] : memref<1x4x32xf32, #tpu.memory_space<vmem>>, vector<1x4x32xf32>
    %11 = vector.shape_cast %10 : vector<1x4x32xf32> to vector<4x32xf32>
    %12 = vector.shape_cast %9 : vector<4x32xf32> to vector<1x4x32xf32>
    tpu.vector_store %arg5[%c0_8, %c0_9, %c0_10], %12 {strides = array<i32>} : memref<1x4x32xf32, #tpu.memory_space<vmem>>, vector<1x4x32xf32>,
    return
  }
  func.func @transform_0(%arg0: i32) -> (i32, i32, i32) {
    %c0_i32 = arith.constant 0 : i32
    %c0_i32_0 = arith.constant 0 : i32
    %c0_i32_1 = arith.constant 0 : i32
    return %arg0, %c0_i32, %c0_i32_0 : i32, i32, i32
  }
  func.func @transform_1(%arg0: i32) -> (i32, i32) {
    %c0_i32 = arith.constant 0 : i32
    %c0_i32_0 = arith.constant 0 : i32
    %c0_i32_1 = arith.constant 0 : i32
    return %c0_i32, %c0_i32_0 : i32, i32
  }
  func.func @transform_2(%arg0: i32) -> (i32, i32) {
    %c0_i32 = arith.constant 0 : i32
    %c0_i32_0 = arith.constant 0 : i32
    %c0_i32_1 = arith.constant 0 : i32
    return %c0_i32, %c0_i32_0 : i32, i32
  }
  func.func @transform_3(%arg0: i32) -> (i32, i32) {
    %c0_i32 = arith.constant 0 : i32
    %c0_i32_0 = arith.constant 0 : i32
    %c0_i32_1 = arith.constant 0 : i32
    return %c0_i32, %c0_i32_0 : i32, i32
  }
  func.func @transform_4(%arg0: i32) -> (i32, i32, i32) {
    %c0_i32 = arith.constant 0 : i32
    %c0_i32_0 = arith.constant 0 : i32
    %c0_i32_1 = arith.constant 0 : i32
    return %arg0, %c0_i32, %c0_i32_0 : i32, i32, i32
  }
}

module attributes {stable_mosaic.version = 11 : i64} {
  func.func @_swin_block_kernel(%arg0: i32, %arg1: i32, %arg2: memref<1x1x4x32xf32, #tpu.memory_space<vmem>>, %arg3: memref<1x4x4x4xf32, #tpu.memory_space<vmem>>, %arg4: memref<1x32xf32, #tpu.memory_space<vmem>>, %arg5: memref<1x32xf32, #tpu.memory_space<vmem>>, %arg6: memref<4x32x8xbf16, #tpu.memory_space<vmem>>, %arg7: memref<4x1x8xf32, #tpu.memory_space<vmem>>, %arg8: memref<4x32x8xbf16, #tpu.memory_space<vmem>>, %arg9: memref<4x1x8xf32, #tpu.memory_space<vmem>>, %arg10: memref<4x32x8xbf16, #tpu.memory_space<vmem>>, %arg11: memref<4x1x8xf32, #tpu.memory_space<vmem>>, %arg12: memref<4x8x32xbf16, #tpu.memory_space<vmem>>, %arg13: memref<1x32xf32, #tpu.memory_space<vmem>>, %arg14: memref<1x32xf32, #tpu.memory_space<vmem>>, %arg15: memref<1x32xf32, #tpu.memory_space<vmem>>, %arg16: memref<32x128xbf16, #tpu.memory_space<vmem>>, %arg17: memref<1x128xf32, #tpu.memory_space<vmem>>, %arg18: memref<128x32xbf16, #tpu.memory_space<vmem>>, %arg19: memref<1x32xf32, #tpu.memory_space<vmem>>, %arg20: memref<1x1x4x32xf32, #tpu.memory_space<vmem>>) attributes {dimension_semantics = [#tpu.dimension_semantics<parallel>, #tpu.dimension_semantics<parallel>], iteration_bounds = array<i64: 2, 1>, scalar_prefetch = 0 : i64, scratch_operands = 0 : i64, tpu.core_type = #tpu.core_type<tc>, window_params = [{transform_indices = @transform_0, window_bounds = array<i64: 1, 1, 4, 32>}, {transform_indices = @transform_1, window_bounds = array<i64: 1, 4, 4, 4>}, {pipeline_mode = #tpu.pipeline_mode<synchronous>, transform_indices = @transform_2, window_bounds = array<i64: 1, 32>}, {pipeline_mode = #tpu.pipeline_mode<synchronous>, transform_indices = @transform_3, window_bounds = array<i64: 1, 32>}, {pipeline_mode = #tpu.pipeline_mode<synchronous>, transform_indices = @transform_4, window_bounds = array<i64: 4, 32, 8>}, {pipeline_mode = #tpu.pipeline_mode<synchronous>, transform_indices = @transform_5, window_bounds = array<i64: 4, 1, 8>}, {pipeline_mode = #tpu.pipeline_mode<synchronous>, transform_indices = @transform_6, window_bounds = array<i64: 4, 32, 8>}, {pipeline_mode = #tpu.pipeline_mode<synchronous>, transform_indices = @transform_7, window_bounds = array<i64: 4, 1, 8>}, {pipeline_mode = #tpu.pipeline_mode<synchronous>, transform_indices = @transform_8, window_bounds = array<i64: 4, 32, 8>}, {pipeline_mode = #tpu.pipeline_mode<synchronous>, transform_indices = @transform_9, window_bounds = array<i64: 4, 1, 8>}, {pipeline_mode = #tpu.pipeline_mode<synchronous>, transform_indices = @transform_10, window_bounds = array<i64: 4, 8, 32>}, {pipeline_mode = #tpu.pipeline_mode<synchronous>, transform_indices = @transform_11, window_bounds = array<i64: 1, 32>}, {pipeline_mode = #tpu.pipeline_mode<synchronous>, transform_indices = @transform_12, window_bounds = array<i64: 1, 32>}, {pipeline_mode = #tpu.pipeline_mode<synchronous>, transform_indices = @transform_13, window_bounds = array<i64: 1, 32>}, {pipeline_mode = #tpu.pipeline_mode<synchronous>, transform_indices = @transform_14, window_bounds = array<i64: 32, 128>}, {pipeline_mode = #tpu.pipeline_mode<synchronous>, transform_indices = @transform_15, window_bounds = array<i64: 1, 128>}, {pipeline_mode = #tpu.pipeline_mode<synchronous>, transform_indices = @transform_16, window_bounds = array<i64: 128, 32>}, {pipeline_mode = #tpu.pipeline_mode<synchronous>, transform_indices = @transform_17, window_bounds = array<i64: 1, 32>}, {transform_indices = @transform_18, window_bounds = array<i64: 1, 1, 4, 32>}]} {
    %c0 = arith.constant 0 : index
    %c0_0 = arith.constant 0 : index
    %c0_1 = arith.constant 0 : index
    %c0_2 = arith.constant 0 : index
    %0 = vector.load %arg2[%c0, %c0_0, %c0_1, %c0_2] : memref<1x1x4x32xf32, #tpu.memory_space<vmem>>, vector<1x1x4x32xf32>
    %1 = vector.shape_cast %0 : vector<1x1x4x32xf32> to vector<4x32xf32>
    %c0_3 = arith.constant 0 : index
    %c0_4 = arith.constant 0 : index
    %2 = vector.load %arg4[%c0_3, %c0_4] : memref<1x32xf32, #tpu.memory_space<vmem>>, vector<1x32xf32>
    %c0_5 = arith.constant 0 : index
    %c0_6 = arith.constant 0 : index
    %3 = vector.load %arg5[%c0_5, %c0_6] : memref<1x32xf32, #tpu.memory_space<vmem>>, vector<1x32xf32>
    %cst = arith.constant dense<0.000000e+00> : vector<4xf32>
    %4 = vector.multi_reduction <add>, %1, %cst [1] : vector<4x32xf32> to vector<4xf32>
    %5 = vector.shape_cast %4 : vector<4xf32> to vector<4x1xf32>
    %cst_7 = arith.constant 3.200000e+01 : f32
    %6 = vector.broadcast %cst_7 : f32 to vector<4x1xf32>
    %7 = arith.divf %5, %6 : vector<4x1xf32>
    %8 = vector.broadcast %7 : vector<4x1xf32> to vector<4x32xf32>
    %9 = arith.subf %1, %8 : vector<4x32xf32>
    %10 = arith.mulf %9, %9 : vector<4x32xf32>
    %cst_8 = arith.constant dense<0.000000e+00> : vector<4xf32>
    %11 = vector.multi_reduction <add>, %10, %cst_8 [1] : vector<4x32xf32> to vector<4xf32>
    %12 = vector.shape_cast %11 : vector<4xf32> to vector<4x1xf32>
    %cst_9 = arith.constant 3.200000e+01 : f32
    %13 = vector.broadcast %cst_9 : f32 to vector<4x1xf32>
    %14 = arith.divf %12, %13 : vector<4x1xf32>
    %cst_10 = arith.constant 9.99999974E-6 : f32
    %15 = vector.broadcast %cst_10 : f32 to vector<4x1xf32>
    %16 = arith.addf %14, %15 : vector<4x1xf32>
    %17 = math.rsqrt %16 : vector<4x1xf32>
    %18 = vector.broadcast %17 : vector<4x1xf32> to vector<4x32xf32>
    %19 = arith.mulf %9, %18 : vector<4x32xf32>
    %20 = vector.broadcast %2 : vector<1x32xf32> to vector<4x32xf32>
    %21 = arith.mulf %19, %20 : vector<4x32xf32>
    %22 = vector.broadcast %3 : vector<1x32xf32> to vector<4x32xf32>
    %23 = arith.addf %21, %22 : vector<4x32xf32>
    %24 = arith.truncf %23 : vector<4x32xf32> to vector<4x32xbf16>
    %cst_11 = arith.constant 0.000000e+00 : f32
    %25 = vector.broadcast %cst_11 : f32 to vector<4x32xf32>
    %c0_12 = arith.constant 0 : index
    %c0_13 = arith.constant 0 : index
    %c0_14 = arith.constant 0 : index
    %26 = vector.load %arg6[%c0_12, %c0_13, %c0_14] : memref<4x32x8xbf16, #tpu.memory_space<vmem>>, vector<1x32x8xbf16>
    %27 = vector.shape_cast %26 : vector<1x32x8xbf16> to vector<32x8xbf16>
    %cst_15 = arith.constant dense<0.000000e+00> : vector<4x8xf32>
    %28 = tpu.matmul %24, %27, %cst_15 {dimension_numbers = #tpu.dot_dimension_numbers<[1], [0], [0], [1], [0, 0, 1, 1], [], []>} : vector<4x32xbf16>, vector<32x8xbf16>, vector<4x8xf32> -> vector<4x8xf32>
    %c0_16 = arith.constant 0 : index
    %c0_17 = arith.constant 0 : index
    %c0_18 = arith.constant 0 : index
    %29 = vector.load %arg7[%c0_16, %c0_17, %c0_18] : memref<4x1x8xf32, #tpu.memory_space<vmem>>, vector<1x1x8xf32>
    %30 = vector.shape_cast %29 : vector<1x1x8xf32> to vector<1x8xf32>
    %31 = vector.broadcast %30 : vector<1x8xf32> to vector<4x8xf32>
    %32 = arith.addf %28, %31 : vector<4x8xf32>
    %c0_19 = arith.constant 0 : index
    %c0_20 = arith.constant 0 : index
    %c0_21 = arith.constant 0 : index
    %33 = vector.load %arg8[%c0_19, %c0_20, %c0_21] : memref<4x32x8xbf16, #tpu.memory_space<vmem>>, vector<1x32x8xbf16>
    %34 = vector.shape_cast %33 : vector<1x32x8xbf16> to vector<32x8xbf16>
    %cst_22 = arith.constant dense<0.000000e+00> : vector<4x8xf32>
    %35 = tpu.matmul %24, %34, %cst_22 {dimension_numbers = #tpu.dot_dimension_numbers<[1], [0], [0], [1], [0, 0, 1, 1], [], []>} : vector<4x32xbf16>, vector<32x8xbf16>, vector<4x8xf32> -> vector<4x8xf32>
    %c0_23 = arith.constant 0 : index
    %c0_24 = arith.constant 0 : index
    %c0_25 = arith.constant 0 : index
    %36 = vector.load %arg9[%c0_23, %c0_24, %c0_25] : memref<4x1x8xf32, #tpu.memory_space<vmem>>, vector<1x1x8xf32>
    %37 = vector.shape_cast %36 : vector<1x1x8xf32> to vector<1x8xf32>
    %38 = vector.broadcast %37 : vector<1x8xf32> to vector<4x8xf32>
    %39 = arith.addf %35, %38 : vector<4x8xf32>
    %c0_26 = arith.constant 0 : index
    %c0_27 = arith.constant 0 : index
    %c0_28 = arith.constant 0 : index
    %40 = vector.load %arg10[%c0_26, %c0_27, %c0_28] : memref<4x32x8xbf16, #tpu.memory_space<vmem>>, vector<1x32x8xbf16>
    %41 = vector.shape_cast %40 : vector<1x32x8xbf16> to vector<32x8xbf16>
    %cst_29 = arith.constant dense<0.000000e+00> : vector<4x8xf32>
    %42 = tpu.matmul %24, %41, %cst_29 {dimension_numbers = #tpu.dot_dimension_numbers<[1], [0], [0], [1], [0, 0, 1, 1], [], []>} : vector<4x32xbf16>, vector<32x8xbf16>, vector<4x8xf32> -> vector<4x8xf32>
    %c0_30 = arith.constant 0 : index
    %c0_31 = arith.constant 0 : index
    %c0_32 = arith.constant 0 : index
    %43 = vector.load %arg11[%c0_30, %c0_31, %c0_32] : memref<4x1x8xf32, #tpu.memory_space<vmem>>, vector<1x1x8xf32>
    %44 = vector.shape_cast %43 : vector<1x1x8xf32> to vector<1x8xf32>
    %45 = vector.broadcast %44 : vector<1x8xf32> to vector<4x8xf32>
    %46 = arith.addf %42, %45 : vector<4x8xf32>
    %47 = arith.truncf %32 : vector<4x8xf32> to vector<4x8xbf16>
    %48 = arith.truncf %39 : vector<4x8xf32> to vector<4x8xbf16>
    %cst_33 = arith.constant dense<0.000000e+00> : vector<4x4xf32>
    %49 = tpu.matmul %47, %48, %cst_33 {dimension_numbers = #tpu.dot_dimension_numbers<[1], [1], [0], [0], [0, 0, 1, 0], [], []>} : vector<4x8xbf16>, vector<4x8xbf16>, vector<4x4xf32> -> vector<4x4xf32>
    %cst_34 = arith.constant 0.353553385 : f32
    %50 = vector.broadcast %cst_34 : f32 to vector<4x4xf32>
    %51 = arith.mulf %49, %50 : vector<4x4xf32>
    %c0_35 = arith.constant 0 : index
    %c0_36 = arith.constant 0 : index
    %c0_37 = arith.constant 0 : index
    %c0_38 = arith.constant 0 : index
    %52 = vector.load %arg3[%c0_35, %c0_36, %c0_37, %c0_38] : memref<1x4x4x4xf32, #tpu.memory_space<vmem>>, vector<1x1x4x4xf32>
    %53 = vector.shape_cast %52 : vector<1x1x4x4xf32> to vector<4x4xf32>
    %54 = arith.addf %51, %53 : vector<4x4xf32>
    %cst_39 = arith.constant dense<0xFF800000> : vector<4xf32>
    %55 = vector.multi_reduction <maximumf>, %54, %cst_39 [1] : vector<4x4xf32> to vector<4xf32>
    %56 = vector.shape_cast %55 : vector<4xf32> to vector<4x1xf32>
    %57 = vector.broadcast %56 : vector<4x1xf32> to vector<4x4xf32>
    %58 = arith.subf %54, %57 : vector<4x4xf32>
    %59 = math.exp %58 : vector<4x4xf32>
    %cst_40 = arith.constant dense<0.000000e+00> : vector<4xf32>
    %60 = vector.multi_reduction <add>, %59, %cst_40 [1] : vector<4x4xf32> to vector<4xf32>
    %61 = vector.shape_cast %60 : vector<4xf32> to vector<4x1xf32>
    %62 = tpu.reciprocal %61 {approx = true} : vector<4x1xf32> -> vector<4x1xf32>
    %63 = vector.broadcast %62 : vector<4x1xf32> to vector<4x4xf32>
    %64 = arith.mulf %59, %63 : vector<4x4xf32>
    %65 = arith.truncf %64 : vector<4x4xf32> to vector<4x4xbf16>
    %66 = arith.truncf %46 : vector<4x8xf32> to vector<4x8xbf16>
    %cst_41 = arith.constant dense<0.000000e+00> : vector<4x8xf32>
    %67 = tpu.matmul %65, %66, %cst_41 {dimension_numbers = #tpu.dot_dimension_numbers<[1], [0], [0], [1], [0, 0, 1, 1], [], []>} : vector<4x4xbf16>, vector<4x8xbf16>, vector<4x8xf32> -> vector<4x8xf32>
    %68 = arith.truncf %67 : vector<4x8xf32> to vector<4x8xbf16>
    %c0_42 = arith.constant 0 : index
    %c0_43 = arith.constant 0 : index
    %c0_44 = arith.constant 0 : index
    %69 = vector.load %arg12[%c0_42, %c0_43, %c0_44] : memref<4x8x32xbf16, #tpu.memory_space<vmem>>, vector<1x8x32xbf16>
    %70 = vector.shape_cast %69 : vector<1x8x32xbf16> to vector<8x32xbf16>
    %cst_45 = arith.constant dense<0.000000e+00> : vector<4x32xf32>
    %71 = tpu.matmul %68, %70, %cst_45 {dimension_numbers = #tpu.dot_dimension_numbers<[1], [0], [0], [1], [0, 0, 1, 1], [], []>} : vector<4x8xbf16>, vector<8x32xbf16>, vector<4x32xf32> -> vector<4x32xf32>
    %72 = arith.addf %25, %71 : vector<4x32xf32>
    %c1 = arith.constant 1 : index
    %c0_46 = arith.constant 0 : index
    %c0_47 = arith.constant 0 : index
    %73 = vector.load %arg6[%c1, %c0_46, %c0_47] : memref<4x32x8xbf16, #tpu.memory_space<vmem>>, vector<1x32x8xbf16>
    %74 = vector.shape_cast %73 : vector<1x32x8xbf16> to vector<32x8xbf16>
    %cst_48 = arith.constant dense<0.000000e+00> : vector<4x8xf32>
    %75 = tpu.matmul %24, %74, %cst_48 {dimension_numbers = #tpu.dot_dimension_numbers<[1], [0], [0], [1], [0, 0, 1, 1], [], []>} : vector<4x32xbf16>, vector<32x8xbf16>, vector<4x8xf32> -> vector<4x8xf32>
    %c1_49 = arith.constant 1 : index
    %c0_50 = arith.constant 0 : index
    %c0_51 = arith.constant 0 : index
    %76 = vector.load %arg7[%c1_49, %c0_50, %c0_51] : memref<4x1x8xf32, #tpu.memory_space<vmem>>, vector<1x1x8xf32>
    %77 = vector.shape_cast %76 : vector<1x1x8xf32> to vector<1x8xf32>
    %78 = vector.broadcast %77 : vector<1x8xf32> to vector<4x8xf32>
    %79 = arith.addf %75, %78 : vector<4x8xf32>
    %c1_52 = arith.constant 1 : index
    %c0_53 = arith.constant 0 : index
    %c0_54 = arith.constant 0 : index
    %80 = vector.load %arg8[%c1_52, %c0_53, %c0_54] : memref<4x32x8xbf16, #tpu.memory_space<vmem>>, vector<1x32x8xbf16>
    %81 = vector.shape_cast %80 : vector<1x32x8xbf16> to vector<32x8xbf16>
    %cst_55 = arith.constant dense<0.000000e+00> : vector<4x8xf32>
    %82 = tpu.matmul %24, %81, %cst_55 {dimension_numbers = #tpu.dot_dimension_numbers<[1], [0], [0], [1], [0, 0, 1, 1], [], []>} : vector<4x32xbf16>, vector<32x8xbf16>, vector<4x8xf32> -> vector<4x8xf32>
    %c1_56 = arith.constant 1 : index
    %c0_57 = arith.constant 0 : index
    %c0_58 = arith.constant 0 : index
    %83 = vector.load %arg9[%c1_56, %c0_57, %c0_58] : memref<4x1x8xf32, #tpu.memory_space<vmem>>, vector<1x1x8xf32>
    %84 = vector.shape_cast %83 : vector<1x1x8xf32> to vector<1x8xf32>
    %85 = vector.broadcast %84 : vector<1x8xf32> to vector<4x8xf32>
    %86 = arith.addf %82, %85 : vector<4x8xf32>
    %c1_59 = arith.constant 1 : index
    %c0_60 = arith.constant 0 : index
    %c0_61 = arith.constant 0 : index
    %87 = vector.load %arg10[%c1_59, %c0_60, %c0_61] : memref<4x32x8xbf16, #tpu.memory_space<vmem>>, vector<1x32x8xbf16>
    %88 = vector.shape_cast %87 : vector<1x32x8xbf16> to vector<32x8xbf16>
    %cst_62 = arith.constant dense<0.000000e+00> : vector<4x8xf32>
    %89 = tpu.matmul %24, %88, %cst_62 {dimension_numbers = #tpu.dot_dimension_numbers<[1], [0], [0], [1], [0, 0, 1, 1], [], []>} : vector<4x32xbf16>, vector<32x8xbf16>, vector<4x8xf32> -> vector<4x8xf32>
    %c1_63 = arith.constant 1 : index
    %c0_64 = arith.constant 0 : index
    %c0_65 = arith.constant 0 : index
    %90 = vector.load %arg11[%c1_63, %c0_64, %c0_65] : memref<4x1x8xf32, #tpu.memory_space<vmem>>, vector<1x1x8xf32>
    %91 = vector.shape_cast %90 : vector<1x1x8xf32> to vector<1x8xf32>
    %92 = vector.broadcast %91 : vector<1x8xf32> to vector<4x8xf32>
    %93 = arith.addf %89, %92 : vector<4x8xf32>
    %94 = arith.truncf %79 : vector<4x8xf32> to vector<4x8xbf16>
    %95 = arith.truncf %86 : vector<4x8xf32> to vector<4x8xbf16>
    %cst_66 = arith.constant dense<0.000000e+00> : vector<4x4xf32>
    %96 = tpu.matmul %94, %95, %cst_66 {dimension_numbers = #tpu.dot_dimension_numbers<[1], [1], [0], [0], [0, 0, 1, 0], [], []>} : vector<4x8xbf16>, vector<4x8xbf16>, vector<4x4xf32> -> vector<4x4xf32>
    %cst_67 = arith.constant 0.353553385 : f32
    %97 = vector.broadcast %cst_67 : f32 to vector<4x4xf32>
    %98 = arith.mulf %96, %97 : vector<4x4xf32>
    %c0_68 = arith.constant 0 : index
    %c1_69 = arith.constant 1 : index
    %c0_70 = arith.constant 0 : index
    %c0_71 = arith.constant 0 : index
    %99 = vector.load %arg3[%c0_68, %c1_69, %c0_70, %c0_71] : memref<1x4x4x4xf32, #tpu.memory_space<vmem>>, vector<1x1x4x4xf32>
    %100 = vector.shape_cast %99 : vector<1x1x4x4xf32> to vector<4x4xf32>
    %101 = arith.addf %98, %100 : vector<4x4xf32>
    %cst_72 = arith.constant dense<0xFF800000> : vector<4xf32>
    %102 = vector.multi_reduction <maximumf>, %101, %cst_72 [1] : vector<4x4xf32> to vector<4xf32>
    %103 = vector.shape_cast %102 : vector<4xf32> to vector<4x1xf32>
    %104 = vector.broadcast %103 : vector<4x1xf32> to vector<4x4xf32>
    %105 = arith.subf %101, %104 : vector<4x4xf32>
    %106 = math.exp %105 : vector<4x4xf32>
    %cst_73 = arith.constant dense<0.000000e+00> : vector<4xf32>
    %107 = vector.multi_reduction <add>, %106, %cst_73 [1] : vector<4x4xf32> to vector<4xf32>
    %108 = vector.shape_cast %107 : vector<4xf32> to vector<4x1xf32>
    %109 = tpu.reciprocal %108 {approx = true} : vector<4x1xf32> -> vector<4x1xf32>
    %110 = vector.broadcast %109 : vector<4x1xf32> to vector<4x4xf32>
    %111 = arith.mulf %106, %110 : vector<4x4xf32>
    %112 = arith.truncf %111 : vector<4x4xf32> to vector<4x4xbf16>
    %113 = arith.truncf %93 : vector<4x8xf32> to vector<4x8xbf16>
    %cst_74 = arith.constant dense<0.000000e+00> : vector<4x8xf32>
    %114 = tpu.matmul %112, %113, %cst_74 {dimension_numbers = #tpu.dot_dimension_numbers<[1], [0], [0], [1], [0, 0, 1, 1], [], []>} : vector<4x4xbf16>, vector<4x8xbf16>, vector<4x8xf32> -> vector<4x8xf32>
    %115 = arith.truncf %114 : vector<4x8xf32> to vector<4x8xbf16>
    %c1_75 = arith.constant 1 : index
    %c0_76 = arith.constant 0 : index
    %c0_77 = arith.constant 0 : index
    %116 = vector.load %arg12[%c1_75, %c0_76, %c0_77] : memref<4x8x32xbf16, #tpu.memory_space<vmem>>, vector<1x8x32xbf16>
    %117 = vector.shape_cast %116 : vector<1x8x32xbf16> to vector<8x32xbf16>
    %cst_78 = arith.constant dense<0.000000e+00> : vector<4x32xf32>
    %118 = tpu.matmul %115, %117, %cst_78 {dimension_numbers = #tpu.dot_dimension_numbers<[1], [0], [0], [1], [0, 0, 1, 1], [], []>} : vector<4x8xbf16>, vector<8x32xbf16>, vector<4x32xf32> -> vector<4x32xf32>
    %119 = arith.addf %72, %118 : vector<4x32xf32>
    %c2 = arith.constant 2 : index
    %c0_79 = arith.constant 0 : index
    %c0_80 = arith.constant 0 : index
    %120 = vector.load %arg6[%c2, %c0_79, %c0_80] : memref<4x32x8xbf16, #tpu.memory_space<vmem>>, vector<1x32x8xbf16>
    %121 = vector.shape_cast %120 : vector<1x32x8xbf16> to vector<32x8xbf16>
    %cst_81 = arith.constant dense<0.000000e+00> : vector<4x8xf32>
    %122 = tpu.matmul %24, %121, %cst_81 {dimension_numbers = #tpu.dot_dimension_numbers<[1], [0], [0], [1], [0, 0, 1, 1], [], []>} : vector<4x32xbf16>, vector<32x8xbf16>, vector<4x8xf32> -> vector<4x8xf32>
    %c2_82 = arith.constant 2 : index
    %c0_83 = arith.constant 0 : index
    %c0_84 = arith.constant 0 : index
    %123 = vector.load %arg7[%c2_82, %c0_83, %c0_84] : memref<4x1x8xf32, #tpu.memory_space<vmem>>, vector<1x1x8xf32>
    %124 = vector.shape_cast %123 : vector<1x1x8xf32> to vector<1x8xf32>
    %125 = vector.broadcast %124 : vector<1x8xf32> to vector<4x8xf32>
    %126 = arith.addf %122, %125 : vector<4x8xf32>
    %c2_85 = arith.constant 2 : index
    %c0_86 = arith.constant 0 : index
    %c0_87 = arith.constant 0 : index
    %127 = vector.load %arg8[%c2_85, %c0_86, %c0_87] : memref<4x32x8xbf16, #tpu.memory_space<vmem>>, vector<1x32x8xbf16>
    %128 = vector.shape_cast %127 : vector<1x32x8xbf16> to vector<32x8xbf16>
    %cst_88 = arith.constant dense<0.000000e+00> : vector<4x8xf32>
    %129 = tpu.matmul %24, %128, %cst_88 {dimension_numbers = #tpu.dot_dimension_numbers<[1], [0], [0], [1], [0, 0, 1, 1], [], []>} : vector<4x32xbf16>, vector<32x8xbf16>, vector<4x8xf32> -> vector<4x8xf32>
    %c2_89 = arith.constant 2 : index
    %c0_90 = arith.constant 0 : index
    %c0_91 = arith.constant 0 : index
    %130 = vector.load %arg9[%c2_89, %c0_90, %c0_91] : memref<4x1x8xf32, #tpu.memory_space<vmem>>, vector<1x1x8xf32>
    %131 = vector.shape_cast %130 : vector<1x1x8xf32> to vector<1x8xf32>
    %132 = vector.broadcast %131 : vector<1x8xf32> to vector<4x8xf32>
    %133 = arith.addf %129, %132 : vector<4x8xf32>
    %c2_92 = arith.constant 2 : index
    %c0_93 = arith.constant 0 : index
    %c0_94 = arith.constant 0 : index
    %134 = vector.load %arg10[%c2_92, %c0_93, %c0_94] : memref<4x32x8xbf16, #tpu.memory_space<vmem>>, vector<1x32x8xbf16>
    %135 = vector.shape_cast %134 : vector<1x32x8xbf16> to vector<32x8xbf16>
    %cst_95 = arith.constant dense<0.000000e+00> : vector<4x8xf32>
    %136 = tpu.matmul %24, %135, %cst_95 {dimension_numbers = #tpu.dot_dimension_numbers<[1], [0], [0], [1], [0, 0, 1, 1], [], []>} : vector<4x32xbf16>, vector<32x8xbf16>, vector<4x8xf32> -> vector<4x8xf32>
    %c2_96 = arith.constant 2 : index
    %c0_97 = arith.constant 0 : index
    %c0_98 = arith.constant 0 : index
    %137 = vector.load %arg11[%c2_96, %c0_97, %c0_98] : memref<4x1x8xf32, #tpu.memory_space<vmem>>, vector<1x1x8xf32>
    %138 = vector.shape_cast %137 : vector<1x1x8xf32> to vector<1x8xf32>
    %139 = vector.broadcast %138 : vector<1x8xf32> to vector<4x8xf32>
    %140 = arith.addf %136, %139 : vector<4x8xf32>
    %141 = arith.truncf %126 : vector<4x8xf32> to vector<4x8xbf16>
    %142 = arith.truncf %133 : vector<4x8xf32> to vector<4x8xbf16>
    %cst_99 = arith.constant dense<0.000000e+00> : vector<4x4xf32>
    %143 = tpu.matmul %141, %142, %cst_99 {dimension_numbers = #tpu.dot_dimension_numbers<[1], [1], [0], [0], [0, 0, 1, 0], [], []>} : vector<4x8xbf16>, vector<4x8xbf16>, vector<4x4xf32> -> vector<4x4xf32>
    %cst_100 = arith.constant 0.353553385 : f32
    %144 = vector.broadcast %cst_100 : f32 to vector<4x4xf32>
    %145 = arith.mulf %143, %144 : vector<4x4xf32>
    %c0_101 = arith.constant 0 : index
    %c2_102 = arith.constant 2 : index
    %c0_103 = arith.constant 0 : index
    %c0_104 = arith.constant 0 : index
    %146 = vector.load %arg3[%c0_101, %c2_102, %c0_103, %c0_104] : memref<1x4x4x4xf32, #tpu.memory_space<vmem>>, vector<1x1x4x4xf32>
    %147 = vector.shape_cast %146 : vector<1x1x4x4xf32> to vector<4x4xf32>
    %148 = arith.addf %145, %147 : vector<4x4xf32>
    %cst_105 = arith.constant dense<0xFF800000> : vector<4xf32>
    %149 = vector.multi_reduction <maximumf>, %148, %cst_105 [1] : vector<4x4xf32> to vector<4xf32>
    %150 = vector.shape_cast %149 : vector<4xf32> to vector<4x1xf32>
    %151 = vector.broadcast %150 : vector<4x1xf32> to vector<4x4xf32>
    %152 = arith.subf %148, %151 : vector<4x4xf32>
    %153 = math.exp %152 : vector<4x4xf32>
    %cst_106 = arith.constant dense<0.000000e+00> : vector<4xf32>
    %154 = vector.multi_reduction <add>, %153, %cst_106 [1] : vector<4x4xf32> to vector<4xf32>
    %155 = vector.shape_cast %154 : vector<4xf32> to vector<4x1xf32>
    %156 = tpu.reciprocal %155 {approx = true} : vector<4x1xf32> -> vector<4x1xf32>
    %157 = vector.broadcast %156 : vector<4x1xf32> to vector<4x4xf32>
    %158 = arith.mulf %153, %157 : vector<4x4xf32>
    %159 = arith.truncf %158 : vector<4x4xf32> to vector<4x4xbf16>
    %160 = arith.truncf %140 : vector<4x8xf32> to vector<4x8xbf16>
    %cst_107 = arith.constant dense<0.000000e+00> : vector<4x8xf32>
    %161 = tpu.matmul %159, %160, %cst_107 {dimension_numbers = #tpu.dot_dimension_numbers<[1], [0], [0], [1], [0, 0, 1, 1], [], []>} : vector<4x4xbf16>, vector<4x8xbf16>, vector<4x8xf32> -> vector<4x8xf32>
    %162 = arith.truncf %161 : vector<4x8xf32> to vector<4x8xbf16>
    %c2_108 = arith.constant 2 : index
    %c0_109 = arith.constant 0 : index
    %c0_110 = arith.constant 0 : index
    %163 = vector.load %arg12[%c2_108, %c0_109, %c0_110] : memref<4x8x32xbf16, #tpu.memory_space<vmem>>, vector<1x8x32xbf16>
    %164 = vector.shape_cast %163 : vector<1x8x32xbf16> to vector<8x32xbf16>
    %cst_111 = arith.constant dense<0.000000e+00> : vector<4x32xf32>
    %165 = tpu.matmul %162, %164, %cst_111 {dimension_numbers = #tpu.dot_dimension_numbers<[1], [0], [0], [1], [0, 0, 1, 1], [], []>} : vector<4x8xbf16>, vector<8x32xbf16>, vector<4x32xf32> -> vector<4x32xf32>
    %166 = arith.addf %119, %165 : vector<4x32xf32>
    %c3 = arith.constant 3 : index
    %c0_112 = arith.constant 0 : index
    %c0_113 = arith.constant 0 : index
    %167 = vector.load %arg6[%c3, %c0_112, %c0_113] : memref<4x32x8xbf16, #tpu.memory_space<vmem>>, vector<1x32x8xbf16>
    %168 = vector.shape_cast %167 : vector<1x32x8xbf16> to vector<32x8xbf16>
    %cst_114 = arith.constant dense<0.000000e+00> : vector<4x8xf32>
    %169 = tpu.matmul %24, %168, %cst_114 {dimension_numbers = #tpu.dot_dimension_numbers<[1], [0], [0], [1], [0, 0, 1, 1], [], []>} : vector<4x32xbf16>, vector<32x8xbf16>, vector<4x8xf32> -> vector<4x8xf32>
    %c3_115 = arith.constant 3 : index
    %c0_116 = arith.constant 0 : index
    %c0_117 = arith.constant 0 : index
    %170 = vector.load %arg7[%c3_115, %c0_116, %c0_117] : memref<4x1x8xf32, #tpu.memory_space<vmem>>, vector<1x1x8xf32>
    %171 = vector.shape_cast %170 : vector<1x1x8xf32> to vector<1x8xf32>
    %172 = vector.broadcast %171 : vector<1x8xf32> to vector<4x8xf32>
    %173 = arith.addf %169, %172 : vector<4x8xf32>
    %c3_118 = arith.constant 3 : index
    %c0_119 = arith.constant 0 : index
    %c0_120 = arith.constant 0 : index
    %174 = vector.load %arg8[%c3_118, %c0_119, %c0_120] : memref<4x32x8xbf16, #tpu.memory_space<vmem>>, vector<1x32x8xbf16>
    %175 = vector.shape_cast %174 : vector<1x32x8xbf16> to vector<32x8xbf16>
    %cst_121 = arith.constant dense<0.000000e+00> : vector<4x8xf32>
    %176 = tpu.matmul %24, %175, %cst_121 {dimension_numbers = #tpu.dot_dimension_numbers<[1], [0], [0], [1], [0, 0, 1, 1], [], []>} : vector<4x32xbf16>, vector<32x8xbf16>, vector<4x8xf32> -> vector<4x8xf32>
    %c3_122 = arith.constant 3 : index
    %c0_123 = arith.constant 0 : index
    %c0_124 = arith.constant 0 : index
    %177 = vector.load %arg9[%c3_122, %c0_123, %c0_124] : memref<4x1x8xf32, #tpu.memory_space<vmem>>, vector<1x1x8xf32>
    %178 = vector.shape_cast %177 : vector<1x1x8xf32> to vector<1x8xf32>
    %179 = vector.broadcast %178 : vector<1x8xf32> to vector<4x8xf32>
    %180 = arith.addf %176, %179 : vector<4x8xf32>
    %c3_125 = arith.constant 3 : index
    %c0_126 = arith.constant 0 : index
    %c0_127 = arith.constant 0 : index
    %181 = vector.load %arg10[%c3_125, %c0_126, %c0_127] : memref<4x32x8xbf16, #tpu.memory_space<vmem>>, vector<1x32x8xbf16>
    %182 = vector.shape_cast %181 : vector<1x32x8xbf16> to vector<32x8xbf16>
    %cst_128 = arith.constant dense<0.000000e+00> : vector<4x8xf32>
    %183 = tpu.matmul %24, %182, %cst_128 {dimension_numbers = #tpu.dot_dimension_numbers<[1], [0], [0], [1], [0, 0, 1, 1], [], []>} : vector<4x32xbf16>, vector<32x8xbf16>, vector<4x8xf32> -> vector<4x8xf32>
    %c3_129 = arith.constant 3 : index
    %c0_130 = arith.constant 0 : index
    %c0_131 = arith.constant 0 : index
    %184 = vector.load %arg11[%c3_129, %c0_130, %c0_131] : memref<4x1x8xf32, #tpu.memory_space<vmem>>, vector<1x1x8xf32>
    %185 = vector.shape_cast %184 : vector<1x1x8xf32> to vector<1x8xf32>
    %186 = vector.broadcast %185 : vector<1x8xf32> to vector<4x8xf32>
    %187 = arith.addf %183, %186 : vector<4x8xf32>
    %188 = arith.truncf %173 : vector<4x8xf32> to vector<4x8xbf16>
    %189 = arith.truncf %180 : vector<4x8xf32> to vector<4x8xbf16>
    %cst_132 = arith.constant dense<0.000000e+00> : vector<4x4xf32>
    %190 = tpu.matmul %188, %189, %cst_132 {dimension_numbers = #tpu.dot_dimension_numbers<[1], [1], [0], [0], [0, 0, 1, 0], [], []>} : vector<4x8xbf16>, vector<4x8xbf16>, vector<4x4xf32> -> vector<4x4xf32>
    %cst_133 = arith.constant 0.353553385 : f32
    %191 = vector.broadcast %cst_133 : f32 to vector<4x4xf32>
    %192 = arith.mulf %190, %191 : vector<4x4xf32>
    %c0_134 = arith.constant 0 : index
    %c3_135 = arith.constant 3 : index
    %c0_136 = arith.constant 0 : index
    %c0_137 = arith.constant 0 : index
    %193 = vector.load %arg3[%c0_134, %c3_135, %c0_136, %c0_137] : memref<1x4x4x4xf32, #tpu.memory_space<vmem>>, vector<1x1x4x4xf32>
    %194 = vector.shape_cast %193 : vector<1x1x4x4xf32> to vector<4x4xf32>
    %195 = arith.addf %192, %194 : vector<4x4xf32>
    %cst_138 = arith.constant dense<0xFF800000> : vector<4xf32>
    %196 = vector.multi_reduction <maximumf>, %195, %cst_138 [1] : vector<4x4xf32> to vector<4xf32>
    %197 = vector.shape_cast %196 : vector<4xf32> to vector<4x1xf32>
    %198 = vector.broadcast %197 : vector<4x1xf32> to vector<4x4xf32>
    %199 = arith.subf %195, %198 : vector<4x4xf32>
    %200 = math.exp %199 : vector<4x4xf32>
    %cst_139 = arith.constant dense<0.000000e+00> : vector<4xf32>
    %201 = vector.multi_reduction <add>, %200, %cst_139 [1] : vector<4x4xf32> to vector<4xf32>
    %202 = vector.shape_cast %201 : vector<4xf32> to vector<4x1xf32>
    %203 = tpu.reciprocal %202 {approx = true} : vector<4x1xf32> -> vector<4x1xf32>
    %204 = vector.broadcast %203 : vector<4x1xf32> to vector<4x4xf32>
    %205 = arith.mulf %200, %204 : vector<4x4xf32>
    %206 = arith.truncf %205 : vector<4x4xf32> to vector<4x4xbf16>
    %207 = arith.truncf %187 : vector<4x8xf32> to vector<4x8xbf16>
    %cst_140 = arith.constant dense<0.000000e+00> : vector<4x8xf32>
    %208 = tpu.matmul %206, %207, %cst_140 {dimension_numbers = #tpu.dot_dimension_numbers<[1], [0], [0], [1], [0, 0, 1, 1], [], []>} : vector<4x4xbf16>, vector<4x8xbf16>, vector<4x8xf32> -> vector<4x8xf32>
    %209 = arith.truncf %208 : vector<4x8xf32> to vector<4x8xbf16>
    %c3_141 = arith.constant 3 : index
    %c0_142 = arith.constant 0 : index
    %c0_143 = arith.constant 0 : index
    %210 = vector.load %arg12[%c3_141, %c0_142, %c0_143] : memref<4x8x32xbf16, #tpu.memory_space<vmem>>, vector<1x8x32xbf16>
    %211 = vector.shape_cast %210 : vector<1x8x32xbf16> to vector<8x32xbf16>
    %cst_144 = arith.constant dense<0.000000e+00> : vector<4x32xf32>
    %212 = tpu.matmul %209, %211, %cst_144 {dimension_numbers = #tpu.dot_dimension_numbers<[1], [0], [0], [1], [0, 0, 1, 1], [], []>} : vector<4x8xbf16>, vector<8x32xbf16>, vector<4x32xf32> -> vector<4x32xf32>
    %213 = arith.addf %166, %212 : vector<4x32xf32>
    %214 = arith.addf %1, %213 : vector<4x32xf32>
    %c0_145 = arith.constant 0 : index
    %c0_146 = arith.constant 0 : index
    %215 = vector.load %arg13[%c0_145, %c0_146] : memref<1x32xf32, #tpu.memory_space<vmem>>, vector<1x32xf32>
    %216 = vector.broadcast %215 : vector<1x32xf32> to vector<4x32xf32>
    %217 = arith.addf %214, %216 : vector<4x32xf32>
    %c0_147 = arith.constant 0 : index
    %c0_148 = arith.constant 0 : index
    %218 = vector.load %arg14[%c0_147, %c0_148] : memref<1x32xf32, #tpu.memory_space<vmem>>, vector<1x32xf32>
    %c0_149 = arith.constant 0 : index
    %c0_150 = arith.constant 0 : index
    %219 = vector.load %arg15[%c0_149, %c0_150] : memref<1x32xf32, #tpu.memory_space<vmem>>, vector<1x32xf32>
    %cst_151 = arith.constant dense<0.000000e+00> : vector<4xf32>
    %220 = vector.multi_reduction <add>, %217, %cst_151 [1] : vector<4x32xf32> to vector<4xf32>
    %221 = vector.shape_cast %220 : vector<4xf32> to vector<4x1xf32>
    %cst_152 = arith.constant 3.200000e+01 : f32
    %222 = vector.broadcast %cst_152 : f32 to vector<4x1xf32>
    %223 = arith.divf %221, %222 : vector<4x1xf32>
    %224 = vector.broadcast %223 : vector<4x1xf32> to vector<4x32xf32>
    %225 = arith.subf %217, %224 : vector<4x32xf32>
    %226 = arith.mulf %225, %225 : vector<4x32xf32>
    %cst_153 = arith.constant dense<0.000000e+00> : vector<4xf32>
    %227 = vector.multi_reduction <add>, %226, %cst_153 [1] : vector<4x32xf32> to vector<4xf32>
    %228 = vector.shape_cast %227 : vector<4xf32> to vector<4x1xf32>
    %cst_154 = arith.constant 3.200000e+01 : f32
    %229 = vector.broadcast %cst_154 : f32 to vector<4x1xf32>
    %230 = arith.divf %228, %229 : vector<4x1xf32>
    %cst_155 = arith.constant 9.99999974E-6 : f32
    %231 = vector.broadcast %cst_155 : f32 to vector<4x1xf32>
    %232 = arith.addf %230, %231 : vector<4x1xf32>
    %233 = math.rsqrt %232 : vector<4x1xf32>
    %234 = vector.broadcast %233 : vector<4x1xf32> to vector<4x32xf32>
    %235 = arith.mulf %225, %234 : vector<4x32xf32>
    %236 = vector.broadcast %218 : vector<1x32xf32> to vector<4x32xf32>
    %237 = arith.mulf %235, %236 : vector<4x32xf32>
    %238 = vector.broadcast %219 : vector<1x32xf32> to vector<4x32xf32>
    %239 = arith.addf %237, %238 : vector<4x32xf32>
    %240 = arith.truncf %239 : vector<4x32xf32> to vector<4x32xbf16>
    %c0_156 = arith.constant 0 : index
    %c0_157 = arith.constant 0 : index
    %241 = vector.load %arg16[%c0_156, %c0_157] : memref<32x128xbf16, #tpu.memory_space<vmem>>, vector<32x128xbf16>
    %cst_158 = arith.constant dense<0.000000e+00> : vector<4x128xf32>
    %242 = tpu.matmul %240, %241, %cst_158 {dimension_numbers = #tpu.dot_dimension_numbers<[1], [0], [0], [1], [0, 0, 1, 1], [], []>} : vector<4x32xbf16>, vector<32x128xbf16>, vector<4x128xf32> -> vector<4x128xf32>
    %c0_159 = arith.constant 0 : index
    %c0_160 = arith.constant 0 : index
    %243 = vector.load %arg17[%c0_159, %c0_160] : memref<1x128xf32, #tpu.memory_space<vmem>>, vector<1x128xf32>
    %244 = vector.broadcast %243 : vector<1x128xf32> to vector<4x128xf32>
    %245 = arith.addf %242, %244 : vector<4x128xf32>
    %cst_161 = arith.constant 5.000000e-01 : f32
    %246 = vector.broadcast %cst_161 : f32 to vector<4x128xf32>
    %247 = arith.mulf %246, %245 : vector<4x128xf32>
    %248 = arith.mulf %245, %245 : vector<4x128xf32>
    %249 = arith.mulf %248, %245 : vector<4x128xf32>
    %cst_162 = arith.constant 4.471500e-02 : f32
    %250 = vector.broadcast %cst_162 : f32 to vector<4x128xf32>
    %251 = arith.mulf %250, %249 : vector<4x128xf32>
    %252 = arith.addf %245, %251 : vector<4x128xf32>
    %cst_163 = arith.constant 0.797884583 : f32
    %253 = vector.broadcast %cst_163 : f32 to vector<4x128xf32>
    %254 = arith.mulf %253, %252 : vector<4x128xf32>
    %255 = math.tanh %254 : vector<4x128xf32>
    %cst_164 = arith.constant 1.000000e+00 : f32
    %256 = vector.broadcast %cst_164 : f32 to vector<4x128xf32>
    %257 = arith.addf %256, %255 : vector<4x128xf32>
    %258 = arith.mulf %247, %257 : vector<4x128xf32>
    %259 = arith.truncf %258 : vector<4x128xf32> to vector<4x128xbf16>
    %c0_165 = arith.constant 0 : index
    %c0_166 = arith.constant 0 : index
    %260 = vector.load %arg18[%c0_165, %c0_166] : memref<128x32xbf16, #tpu.memory_space<vmem>>, vector<128x32xbf16>
    %cst_167 = arith.constant dense<0.000000e+00> : vector<4x32xf32>
    %261 = tpu.matmul %259, %260, %cst_167 {dimension_numbers = #tpu.dot_dimension_numbers<[1], [0], [0], [1], [0, 0, 1, 1], [], []>} : vector<4x128xbf16>, vector<128x32xbf16>, vector<4x32xf32> -> vector<4x32xf32>
    %c0_168 = arith.constant 0 : index
    %c0_169 = arith.constant 0 : index
    %262 = vector.load %arg19[%c0_168, %c0_169] : memref<1x32xf32, #tpu.memory_space<vmem>>, vector<1x32xf32>
    %263 = vector.broadcast %262 : vector<1x32xf32> to vector<4x32xf32>
    %264 = arith.addf %261, %263 : vector<4x32xf32>
    %265 = arith.addf %217, %264 : vector<4x32xf32>
    %c0_170 = arith.constant 0 : index
    %c0_171 = arith.constant 0 : index
    %c0_172 = arith.constant 0 : index
    %c0_173 = arith.constant 0 : index
    %266 = vector.load %arg20[%c0_170, %c0_171, %c0_172, %c0_173] : memref<1x1x4x32xf32, #tpu.memory_space<vmem>>, vector<1x1x4x32xf32>
    %267 = vector.shape_cast %266 : vector<1x1x4x32xf32> to vector<4x32xf32>
    %268 = vector.shape_cast %265 : vector<4x32xf32> to vector<1x1x4x32xf32>
    tpu.vector_store %arg20[%c0_170, %c0_171, %c0_172, %c0_173], %268 {strides = array<i32>} : memref<1x1x4x32xf32, #tpu.memory_space<vmem>>, vector<1x1x4x32xf32>,
    return
  }
  func.func @transform_0(%arg0: i32, %arg1: i32) -> (i32, i32, i32, i32) {
    %c0_i32 = arith.constant 0 : i32
    %c0_i32_0 = arith.constant 0 : i32
    %c0_i32_1 = arith.constant 0 : i32
    return %arg0, %arg1, %c0_i32, %c0_i32_0 : i32, i32, i32, i32
  }
  func.func @transform_1(%arg0: i32, %arg1: i32) -> (i32, i32, i32, i32) {
    %c0_i32 = arith.constant 0 : i32
    %c0_i32_0 = arith.constant 0 : i32
    %c0_i32_1 = arith.constant 0 : i32
    %c0_i32_2 = arith.constant 0 : i32
    return %arg1, %c0_i32, %c0_i32_0, %c0_i32_1 : i32, i32, i32, i32
  }
  func.func @transform_2(%arg0: i32, %arg1: i32) -> (i32, i32) {
    %c0_i32 = arith.constant 0 : i32
    %c0_i32_0 = arith.constant 0 : i32
    %c0_i32_1 = arith.constant 0 : i32
    return %c0_i32, %c0_i32_0 : i32, i32
  }
  func.func @transform_3(%arg0: i32, %arg1: i32) -> (i32, i32) {
    %c0_i32 = arith.constant 0 : i32
    %c0_i32_0 = arith.constant 0 : i32
    %c0_i32_1 = arith.constant 0 : i32
    return %c0_i32, %c0_i32_0 : i32, i32
  }
  func.func @transform_4(%arg0: i32, %arg1: i32) -> (i32, i32, i32) {
    %c0_i32 = arith.constant 0 : i32
    %c0_i32_0 = arith.constant 0 : i32
    %c0_i32_1 = arith.constant 0 : i32
    %c0_i32_2 = arith.constant 0 : i32
    return %c0_i32, %c0_i32_0, %c0_i32_1 : i32, i32, i32
  }
  func.func @transform_5(%arg0: i32, %arg1: i32) -> (i32, i32, i32) {
    %c0_i32 = arith.constant 0 : i32
    %c0_i32_0 = arith.constant 0 : i32
    %c0_i32_1 = arith.constant 0 : i32
    %c0_i32_2 = arith.constant 0 : i32
    return %c0_i32, %c0_i32_0, %c0_i32_1 : i32, i32, i32
  }
  func.func @transform_6(%arg0: i32, %arg1: i32) -> (i32, i32, i32) {
    %c0_i32 = arith.constant 0 : i32
    %c0_i32_0 = arith.constant 0 : i32
    %c0_i32_1 = arith.constant 0 : i32
    %c0_i32_2 = arith.constant 0 : i32
    return %c0_i32, %c0_i32_0, %c0_i32_1 : i32, i32, i32
  }
  func.func @transform_7(%arg0: i32, %arg1: i32) -> (i32, i32, i32) {
    %c0_i32 = arith.constant 0 : i32
    %c0_i32_0 = arith.constant 0 : i32
    %c0_i32_1 = arith.constant 0 : i32
    %c0_i32_2 = arith.constant 0 : i32
    return %c0_i32, %c0_i32_0, %c0_i32_1 : i32, i32, i32
  }
  func.func @transform_8(%arg0: i32, %arg1: i32) -> (i32, i32, i32) {
    %c0_i32 = arith.constant 0 : i32
    %c0_i32_0 = arith.constant 0 : i32
    %c0_i32_1 = arith.constant 0 : i32
    %c0_i32_2 = arith.constant 0 : i32
    return %c0_i32, %c0_i32_0, %c0_i32_1 : i32, i32, i32
  }
  func.func @transform_9(%arg0: i32, %arg1: i32) -> (i32, i32, i32) {
    %c0_i32 = arith.constant 0 : i32
    %c0_i32_0 = arith.constant 0 : i32
    %c0_i32_1 = arith.constant 0 : i32
    %c0_i32_2 = arith.constant 0 : i32
    return %c0_i32, %c0_i32_0, %c0_i32_1 : i32, i32, i32
  }
  func.func @transform_10(%arg0: i32, %arg1: i32) -> (i32, i32, i32) {
    %c0_i32 = arith.constant 0 : i32
    %c0_i32_0 = arith.constant 0 : i32
    %c0_i32_1 = arith.constant 0 : i32
    %c0_i32_2 = arith.constant 0 : i32
    return %c0_i32, %c0_i32_0, %c0_i32_1 : i32, i32, i32
  }
  func.func @transform_11(%arg0: i32, %arg1: i32) -> (i32, i32) {
    %c0_i32 = arith.constant 0 : i32
    %c0_i32_0 = arith.constant 0 : i32
    %c0_i32_1 = arith.constant 0 : i32
    return %c0_i32, %c0_i32_0 : i32, i32
  }
  func.func @transform_12(%arg0: i32, %arg1: i32) -> (i32, i32) {
    %c0_i32 = arith.constant 0 : i32
    %c0_i32_0 = arith.constant 0 : i32
    %c0_i32_1 = arith.constant 0 : i32
    return %c0_i32, %c0_i32_0 : i32, i32
  }
  func.func @transform_13(%arg0: i32, %arg1: i32) -> (i32, i32) {
    %c0_i32 = arith.constant 0 : i32
    %c0_i32_0 = arith.constant 0 : i32
    %c0_i32_1 = arith.constant 0 : i32
    return %c0_i32, %c0_i32_0 : i32, i32
  }
  func.func @transform_14(%arg0: i32, %arg1: i32) -> (i32, i32) {
    %c0_i32 = arith.constant 0 : i32
    %c0_i32_0 = arith.constant 0 : i32
    %c0_i32_1 = arith.constant 0 : i32
    return %c0_i32, %c0_i32_0 : i32, i32
  }
  func.func @transform_15(%arg0: i32, %arg1: i32) -> (i32, i32) {
    %c0_i32 = arith.constant 0 : i32
    %c0_i32_0 = arith.constant 0 : i32
    %c0_i32_1 = arith.constant 0 : i32
    return %c0_i32, %c0_i32_0 : i32, i32
  }
  func.func @transform_16(%arg0: i32, %arg1: i32) -> (i32, i32) {
    %c0_i32 = arith.constant 0 : i32
    %c0_i32_0 = arith.constant 0 : i32
    %c0_i32_1 = arith.constant 0 : i32
    return %c0_i32, %c0_i32_0 : i32, i32
  }
  func.func @transform_17(%arg0: i32, %arg1: i32) -> (i32, i32) {
    %c0_i32 = arith.constant 0 : i32
    %c0_i32_0 = arith.constant 0 : i32
    %c0_i32_1 = arith.constant 0 : i32
    return %c0_i32, %c0_i32_0 : i32, i32
  }
  func.func @transform_18(%arg0: i32, %arg1: i32) -> (i32, i32, i32, i32) {
    %c0_i32 = arith.constant 0 : i32
    %c0_i32_0 = arith.constant 0 : i32
    %c0_i32_1 = arith.constant 0 : i32
    return %arg0, %arg1, %c0_i32, %c0_i32_0 : i32, i32, i32, i32
  }
}

module attributes {stable_mosaic.version = 11 : i64} {
  func.func @_norm_pred_kernel(%arg0: i32, %arg1: memref<1x4x32xf32, #tpu.memory_space<vmem>>, %arg2: memref<1x32xf32, #tpu.memory_space<vmem>>, %arg3: memref<1x32xf32, #tpu.memory_space<vmem>>, %arg4: memref<32x256xbf16, #tpu.memory_space<vmem>>, %arg5: memref<1x256xf32, #tpu.memory_space<vmem>>, %arg6: memref<1x4x256xf32, #tpu.memory_space<vmem>>) attributes {dimension_semantics = [#tpu.dimension_semantics<parallel>], iteration_bounds = array<i64: 2>, scalar_prefetch = 0 : i64, scratch_operands = 0 : i64, tpu.core_type = #tpu.core_type<tc>, window_params = [{transform_indices = @transform_0, window_bounds = array<i64: 1, 4, 32>}, {pipeline_mode = #tpu.pipeline_mode<synchronous>, transform_indices = @transform_1, window_bounds = array<i64: 1, 32>}, {pipeline_mode = #tpu.pipeline_mode<synchronous>, transform_indices = @transform_2, window_bounds = array<i64: 1, 32>}, {pipeline_mode = #tpu.pipeline_mode<synchronous>, transform_indices = @transform_3, window_bounds = array<i64: 32, 256>}, {pipeline_mode = #tpu.pipeline_mode<synchronous>, transform_indices = @transform_4, window_bounds = array<i64: 1, 256>}, {transform_indices = @transform_5, window_bounds = array<i64: 1, 4, 256>}]} {
    %c0 = arith.constant 0 : index
    %c0_0 = arith.constant 0 : index
    %c0_1 = arith.constant 0 : index
    %0 = vector.load %arg1[%c0, %c0_0, %c0_1] : memref<1x4x32xf32, #tpu.memory_space<vmem>>, vector<1x4x32xf32>
    %1 = vector.shape_cast %0 : vector<1x4x32xf32> to vector<4x32xf32>
    %c0_2 = arith.constant 0 : index
    %c0_3 = arith.constant 0 : index
    %2 = vector.load %arg2[%c0_2, %c0_3] : memref<1x32xf32, #tpu.memory_space<vmem>>, vector<1x32xf32>
    %c0_4 = arith.constant 0 : index
    %c0_5 = arith.constant 0 : index
    %3 = vector.load %arg3[%c0_4, %c0_5] : memref<1x32xf32, #tpu.memory_space<vmem>>, vector<1x32xf32>
    %cst = arith.constant dense<0.000000e+00> : vector<4xf32>
    %4 = vector.multi_reduction <add>, %1, %cst [1] : vector<4x32xf32> to vector<4xf32>
    %5 = vector.shape_cast %4 : vector<4xf32> to vector<4x1xf32>
    %cst_6 = arith.constant 3.200000e+01 : f32
    %6 = vector.broadcast %cst_6 : f32 to vector<4x1xf32>
    %7 = arith.divf %5, %6 : vector<4x1xf32>
    %8 = vector.broadcast %7 : vector<4x1xf32> to vector<4x32xf32>
    %9 = arith.subf %1, %8 : vector<4x32xf32>
    %10 = arith.mulf %9, %9 : vector<4x32xf32>
    %cst_7 = arith.constant dense<0.000000e+00> : vector<4xf32>
    %11 = vector.multi_reduction <add>, %10, %cst_7 [1] : vector<4x32xf32> to vector<4xf32>
    %12 = vector.shape_cast %11 : vector<4xf32> to vector<4x1xf32>
    %cst_8 = arith.constant 3.200000e+01 : f32
    %13 = vector.broadcast %cst_8 : f32 to vector<4x1xf32>
    %14 = arith.divf %12, %13 : vector<4x1xf32>
    %cst_9 = arith.constant 9.99999974E-6 : f32
    %15 = vector.broadcast %cst_9 : f32 to vector<4x1xf32>
    %16 = arith.addf %14, %15 : vector<4x1xf32>
    %17 = math.rsqrt %16 : vector<4x1xf32>
    %18 = vector.broadcast %17 : vector<4x1xf32> to vector<4x32xf32>
    %19 = arith.mulf %9, %18 : vector<4x32xf32>
    %20 = vector.broadcast %2 : vector<1x32xf32> to vector<4x32xf32>
    %21 = arith.mulf %19, %20 : vector<4x32xf32>
    %22 = vector.broadcast %3 : vector<1x32xf32> to vector<4x32xf32>
    %23 = arith.addf %21, %22 : vector<4x32xf32>
    %cst_10 = arith.constant 5.000000e-01 : f32
    %24 = vector.broadcast %cst_10 : f32 to vector<4x32xf32>
    %25 = arith.mulf %24, %23 : vector<4x32xf32>
    %26 = arith.mulf %23, %23 : vector<4x32xf32>
    %27 = arith.mulf %26, %23 : vector<4x32xf32>
    %cst_11 = arith.constant 4.471500e-02 : f32
    %28 = vector.broadcast %cst_11 : f32 to vector<4x32xf32>
    %29 = arith.mulf %28, %27 : vector<4x32xf32>
    %30 = arith.addf %23, %29 : vector<4x32xf32>
    %cst_12 = arith.constant 0.797884583 : f32
    %31 = vector.broadcast %cst_12 : f32 to vector<4x32xf32>
    %32 = arith.mulf %31, %30 : vector<4x32xf32>
    %33 = math.tanh %32 : vector<4x32xf32>
    %cst_13 = arith.constant 1.000000e+00 : f32
    %34 = vector.broadcast %cst_13 : f32 to vector<4x32xf32>
    %35 = arith.addf %34, %33 : vector<4x32xf32>
    %36 = arith.mulf %25, %35 : vector<4x32xf32>
    %37 = arith.truncf %36 : vector<4x32xf32> to vector<4x32xbf16>
    %c0_14 = arith.constant 0 : index
    %c0_15 = arith.constant 0 : index
    %38 = vector.load %arg4[%c0_14, %c0_15] : memref<32x256xbf16, #tpu.memory_space<vmem>>, vector<32x256xbf16>
    %cst_16 = arith.constant dense<0.000000e+00> : vector<4x256xf32>
    %39 = tpu.matmul %37, %38, %cst_16 {dimension_numbers = #tpu.dot_dimension_numbers<[1], [0], [0], [1], [0, 0, 1, 1], [], []>} : vector<4x32xbf16>, vector<32x256xbf16>, vector<4x256xf32> -> vector<4x256xf32>
    %c0_17 = arith.constant 0 : index
    %c0_18 = arith.constant 0 : index
    %40 = vector.load %arg5[%c0_17, %c0_18] : memref<1x256xf32, #tpu.memory_space<vmem>>, vector<1x256xf32>
    %41 = vector.broadcast %40 : vector<1x256xf32> to vector<4x256xf32>
    %42 = arith.addf %39, %41 : vector<4x256xf32>
    %c0_19 = arith.constant 0 : index
    %c0_20 = arith.constant 0 : index
    %c0_21 = arith.constant 0 : index
    %43 = vector.load %arg6[%c0_19, %c0_20, %c0_21] : memref<1x4x256xf32, #tpu.memory_space<vmem>>, vector<1x4x256xf32>
    %44 = vector.shape_cast %43 : vector<1x4x256xf32> to vector<4x256xf32>
    %45 = vector.shape_cast %42 : vector<4x256xf32> to vector<1x4x256xf32>
    tpu.vector_store %arg6[%c0_19, %c0_20, %c0_21], %45 {strides = array<i32>} : memref<1x4x256xf32, #tpu.memory_space<vmem>>, vector<1x4x256xf32>,
    return
  }
  func.func @transform_0(%arg0: i32) -> (i32, i32, i32) {
    %c0_i32 = arith.constant 0 : i32
    %c0_i32_0 = arith.constant 0 : i32
    %c0_i32_1 = arith.constant 0 : i32
    return %arg0, %c0_i32, %c0_i32_0 : i32, i32, i32
  }
  func.func @transform_1(%arg0: i32) -> (i32, i32) {
    %c0_i32 = arith.constant 0 : i32
    %c0_i32_0 = arith.constant 0 : i32
    %c0_i32_1 = arith.constant 0 : i32
    return %c0_i32, %c0_i32_0 : i32, i32
  }
  func.func @transform_2(%arg0: i32) -> (i32, i32) {
    %c0_i32 = arith.constant 0 : i32
    %c0_i32_0 = arith.constant 0 : i32
    %c0_i32_1 = arith.constant 0 : i32
    return %c0_i32, %c0_i32_0 : i32, i32
  }
  func.func @transform_3(%arg0: i32) -> (i32, i32) {
    %c0_i32 = arith.constant 0 : i32
    %c0_i32_0 = arith.constant 0 : i32
    %c0_i32_1 = arith.constant 0 : i32
    return %c0_i32, %c0_i32_0 : i32, i32
  }
  func.func @transform_4(%arg0: i32) -> (i32, i32) {
    %c0_i32 = arith.constant 0 : i32
    %c0_i32_0 = arith.constant 0 : i32
    %c0_i32_1 = arith.constant 0 : i32
    return %c0_i32, %c0_i32_0 : i32, i32
  }
  func.func @transform_5(%arg0: i32) -> (i32, i32, i32) {
    %c0_i32 = arith.constant 0 : i32
    %c0_i32_0 = arith.constant 0 : i32
    %c0_i32_1 = arith.constant 0 : i32
    return %arg0, %c0_i32, %c0_i32_0 : i32, i32, i32
  }
}

</mosaic_0001>

<llo_original>
// kernel: vq_decoder_forward.4
$region0: #{vq_decoder_forward.4}
  #allocation0 [shape = 'u32[]', space=smem, size = 0x4, offset = 0x4, fixed_abs, tag = 'smem constant byte address 0x4 - core index']
  #allocation1 [shape = 'u32[144,128]{1,0:T(1,128)}', space=vmem, size = 0x12000, scoped, tag = 'internal scratch']
  %s0 = inlined_call_operand.hbm [shape: f32[2,4,16], index: 0, kind: input, shape index: {}]
  %s1 = inlined_call_operand.vmem [shape: bf16[16,32], index: 1, kind: input, shape index: {}]
  %s2 = inlined_call_operand.vmem [shape: f32[1,32], index: 2, kind: input, shape index: {}]
  %s3 = inlined_call_operand.vmem [shape: f32[4,32], index: 3, kind: input, shape index: {}]
  %s4 = inlined_call_operand.vmem [shape: f32[2,4,32], index: 4, kind: output, shape index: {}]
  %s5 = sld [smem:[#allocation0]]
  $region53: #{vq_decoder_forward.4} parent=0
    _
  %s7 = ssub.s32 1, %s5
  %s8 = scalar_select 0, %s7, %s5
  $region1: #{vq_decoder_forward.4} parent=0
    #allocation2 [shape = 'u8[4096]{0}', space=vmem, size = 0x1000, scoped, tag = 'input window, operand 0']
    #allocation3 [shape = 's32[2]{0}', space=sflag, size = 0x8, scoped, tag = 'scoped memory for vq_decoder_forward.4']
    %9 = vsyncpa [#allocation3], 0
    %s10 = scalar_lea.sflag [#allocation3], 1
    %11 = vsyncpa %s10, 0
    loop: start=0, step=1, limit=4
    $region2: #{vq_decoder_forward.4} parent=1 // loop_pre_header
      _
    $region3: #{vq_decoder_forward.4} parent=1 // loop_header
      %s13 = sphi 0, %s17
      %p14 = scmp.ge.s32.totalorder %s13, 4
      %s23 = sphi 0, %s25
      %s26 = sphi 0, %s23
      %s27 = sphi 0, %s26
      %s43 = sphi 0, %s27
      %s47 = sphi 0, %s47
      %s49 = sphi 0, %s47
      %s50 = sphi 0, %s49
      %s64 = sphi 0, %s50
      %s68 = sphi 0, %s68
      %s70 = sphi 0, %s68
      %s71 = sphi 0, %s70
      %s85 = sphi 0, %s71
      %s89 = sphi 0, %s89
      %s91 = sphi 0, %s89
      %s92 = sphi 0, %s91
      %s106 = sphi 0, %s92
      %s112 = sphi 0, %s114
      %s115 = sphi 0, %s112
      %s116 = sphi 0, %s115
      %s132 = sphi 0, %s116
    $region4: #{vq_decoder_forward.4} parent=1 // loop_header_branch
      %16 = sbr.rel (%p14) target = $region8
    $region5: #{vq_decoder_forward.4} parent=1 // loop_body
      %s18 = ssub.s32 %s13, 1
      %s19 = ssub.s32 %s13, 2
      %s20 = sadd.s32 %s13, 1
      %s21 = ssub.s32 %s13, %s20
      %p22 = scmp.eq.s32.totalorder %s21, 0
      %s24 = sadd.s32 %s23, 1
      %s25 = scalar_select %p22, %s23, %s24
      %p28 = pneg %p22
      %p29 = scmp.eq.s32.totalorder %s13, 1
      %p30 = por %p28, %p29
      %p31 = scmp.ne.s32.totalorder %s23, %s26
      %p32 = scmp.eq.s32.totalorder %s13, 0
      %p33 = por %p31, %p32
      %p34 = scmp.ne.s32.totalorder %s23, %s26
      %p35 = scmp.eq.s32.totalorder %s18, 1
      %p36 = por %p34, %p35
      %p37 = scmp.ne.s32.totalorder %s26, %s27
      %p38 = scmp.eq.s32.totalorder %s18, 0
      %p39 = por %p37, %p38
      %p40 = scmp.ne.s32.totalorder %s26, %s27
      %p41 = scmp.eq.s32.totalorder %s19, 1
      %p42 = por %p40, %p41
      %p44 = scmp.ne.s32.totalorder %s27, %s43
      %p45 = scmp.eq.s32.totalorder %s19, 0
      %p46 = por %p44, %p45
      %s48 = sadd.s32 %s47, 1
      %p51 = scmp.eq.s32.totalorder %s13, 1
      %p52 = scmp.ne.s32.totalorder %s47, %s49
      %p53 = scmp.eq.s32.totalorder %s13, 0
      %p54 = por %p52, %p53
      %p55 = scmp.ne.s32.totalorder %s47, %s49
      %p56 = scmp.eq.s32.totalorder %s18, 1
      %p57 = por %p55, %p56
      %p58 = scmp.ne.s32.totalorder %s49, %s50
      %p59 = scmp.eq.s32.totalorder %s18, 0
      %p60 = por %p58, %p59
      %p61 = scmp.ne.s32.totalorder %s49, %s50
      %p62 = scmp.eq.s32.totalorder %s19, 1
      %p63 = por %p61, %p62
      %p65 = scmp.ne.s32.totalorder %s50, %s64
      %p66 = scmp.eq.s32.totalorder %s19, 0
      %p67 = por %p65, %p66
      %s69 = sadd.s32 %s68, 1
      %p72 = scmp.eq.s32.totalorder %s13, 1
      %p73 = scmp.ne.s32.totalorder %s68, %s70
      %p74 = scmp.eq.s32.totalorder %s13, 0
      %p75 = por %p73, %p74
      %p76 = scmp.ne.s32.totalorder %s68, %s70
      %p77 = scmp.eq.s32.totalorder %s18, 1
      %p78 = por %p76, %p77
      %p79 = scmp.ne.s32.totalorder %s70, %s71
      %p80 = scmp.eq.s32.totalorder %s18, 0
      %p81 = por %p79, %p80
      %p82 = scmp.ne.s32.totalorder %s70, %s71
      %p83 = scmp.eq.s32.totalorder %s19, 1
      %p84 = por %p82, %p83
      %p86 = scmp.ne.s32.totalorder %s71, %s85
      %p87 = scmp.eq.s32.totalorder %s19, 0
      %p88 = por %p86, %p87
      %s90 = sadd.s32 %s89, 1
      %p93 = scmp.eq.s32.totalorder %s13, 1
      %p94 = scmp.ne.s32.totalorder %s89, %s91
      %p95 = scmp.eq.s32.totalorder %s13, 0
      %p96 = por %p94, %p95
      %p97 = scmp.ne.s32.totalorder %s89, %s91
      %p98 = scmp.eq.s32.totalorder %s18, 1
      %p99 = por %p97, %p98
      %p100 = scmp.ne.s32.totalorder %s91, %s92
      %p101 = scmp.eq.s32.totalorder %s18, 0
      %p102 = por %p100, %p101
      %p103 = scmp.ne.s32.totalorder %s91, %s92
      %p104 = scmp.eq.s32.totalorder %s19, 1
      %p105 = por %p103, %p104
      %p107 = scmp.ne.s32.totalorder %s92, %s106
      %p108 = scmp.eq.s32.totalorder %s19, 0
      %p109 = por %p107, %p108
      %s110 = ssub.s32 %s13, %s20
      %p111 = scmp.eq.s32.totalorder %s110, 0
      %s113 = sadd.s32 %s112, 1
      %s114 = scalar_select %p111, %s112, %s113
      %p117 = pneg %p111
      %p118 = scmp.eq.s32.totalorder %s13, 1
      %p119 = por %p117, %p118
      %p120 = scmp.ne.s32.totalorder %s112, %s115
      %p121 = scmp.eq.s32.totalorder %s13, 0
      %p122 = por %p120, %p121
      %p123 = scmp.ne.s32.totalorder %s112, %s115
      %p124 = scmp.eq.s32.totalorder %s18, 1
      %p125 = por %p123, %p124
      %p126 = scmp.ne.s32.totalorder %s115, %s116
      %p127 = scmp.eq.s32.totalorder %s18, 0
      %p128 = por %p126, %p127
      %p129 = scmp.ne.s32.totalorder %s115, %s116
      %p130 = scmp.eq.s32.totalorder %s19, 1
      %p131 = por %p129, %p130
      %p133 = scmp.ne.s32.totalorder %s116, %s132
      %p134 = scmp.eq.s32.totalorder %s19, 0
      %p135 = por %p133, %p134
      %p136 = scmp.le.s32.totalorder 1, %s13
      %p137 = scmp.lt.s32.totalorder %s13, 3
      %p138 = pnand %p136, %p137
      %p139 = pneg %p138
      // Predicated region
      $region9: #{vq_decoder_forward.4} parent=5 // pred_check
        _
      $region10: #{vq_decoder_forward.4} parent=5 // pred_check_branch
        %141 = sbr.rel (%p138) target = $region12
      $region11: #{vq_decoder_forward.4} parent=5 // pred_region
        %s142 = ssub.s32 %s13, 1
        // Predicated region
        $region13: #{vq_decoder_forward.4} parent=11 // pred_check
          %p143 = pneg %p60
        $region14: #{vq_decoder_forward.4} parent=11 // pred_check_branch
          %145 = sbr.rel (%p143) target = $region16
        $region15: #{vq_decoder_forward.4} parent=11 // pred_region
          _
        $region16: #{vq_decoder_forward.4} parent=11 // pred_fallthru
          _
        // Predicated region
        $region17: #{vq_decoder_forward.4} parent=11 // pred_check
          %p146 = pneg %p81
        $region18: #{vq_decoder_forward.4} parent=11 // pred_check_branch
          %148 = sbr.rel (%p146) target = $region20
        $region19: #{vq_decoder_forward.4} parent=11 // pred_region
          _
        $region20: #{vq_decoder_forward.4} parent=11 // pred_fallthru
          _
        // Predicated region
        $region21: #{vq_decoder_forward.4} parent=11 // pred_check
          %p149 = pneg %p102
        $region22: #{vq_decoder_forward.4} parent=11 // pred_check_branch
          %151 = sbr.rel (%p149) target = $region24
        $region23: #{vq_decoder_forward.4} parent=11 // pred_region
          _
        $region24: #{vq_decoder_forward.4} parent=11 // pred_fallthru
          _
      $region12: #{vq_decoder_forward.4} parent=5 // pred_fallthru
        _
      %p152 = scmp.lt.s32.totalorder %s13, 2
      // Predicated region
      $region25: #{vq_decoder_forward.4} parent=5 // pred_check
        %p153 = pneg %p152
      $region26: #{vq_decoder_forward.4} parent=5 // pred_check_branch
        %155 = sbr.rel (%p153) target = $region28
      $region27: #{vq_decoder_forward.4} parent=5 // pred_region
        // Predicated region
        $region29: #{vq_decoder_forward.4} parent=27 // pred_check
          %p156 = pneg %p33
        $region30: #{vq_decoder_forward.4} parent=27 // pred_check_branch
          %158 = sbr.rel (%p156) target = $region32
        $region31: #{vq_decoder_forward.4} parent=27 // pred_region
          %s159 = sand.u32 %s23, 1
          %s160 = scalar_lea.sflag [#allocation3], %s159
          %s161 = sand.u32 %s23, 1
          %s162 = smul.addr %s161, 4
          %s163 = scalar_lea.vmem [#allocation2], %s162
          %s165 = ssub.s32 64, 64
          %166 = vsyncadd %s160, %s165
          %s167 = smul.addr %s13, 64
          %s168 = scalar_lea.hbm %s0, %s167
          %s170 = sshll.u32 %s163, 4
          %s171 = int_to_ptr.vmem [resolvable:$true] %s170
          %173 = dma.hbm_to_vmem [thread:$0]  %s168, 64, %s171, %s160
        $region32: #{vq_decoder_forward.4} parent=27 // pred_fallthru
          _
      $region28: #{vq_decoder_forward.4} parent=5 // pred_fallthru
        _
      %p174 = scmp.le.s32.totalorder 1, %s13
      %p175 = scmp.lt.s32.totalorder %s13, 3
      %p176 = pnand %p174, %p175
      %p177 = pneg %p176
      // Predicated region
      $region33: #{vq_decoder_forward.4} parent=5 // pred_check
        _
      $region34: #{vq_decoder_forward.4} parent=5 // pred_check_branch
        %179 = sbr.rel (%p176) target = $region36
      $region35: #{vq_decoder_forward.4} parent=5 // pred_region
        %s180 = ssub.s32 %s13, 1
        %s181 = sand.u32 %s26, 1
        %s182 = scalar_lea.sflag [#allocation3], %s181
        %s183 = sand.u32 %s26, 1
        %s184 = smul.addr %s183, 4
        %s185 = scalar_lea.vmem [#allocation2], %s184
        // Predicated region
        $region37: #{vq_decoder_forward.4} parent=35 // pred_check
          %p186 = pneg %p39
        $region38: #{vq_decoder_forward.4} parent=35 // pred_check_branch
          %188 = sbr.rel (%p186) target = $region40
        $region39: #{vq_decoder_forward.4} parent=35 // pred_region
          %189 = dma.done %s182, 64
        $region40: #{vq_decoder_forward.4} parent=35 // pred_fallthru
          _
        %s190 = sand.u32 %s26, 1
        %s191 = scalar_lea.sflag [#allocation3], %s190
        %s192 = sand.u32 %s26, 1
        %s193 = smul.addr %s192, 4
        %s194 = scalar_lea.vmem [#allocation2], %s193
        %p195 = pneg %p39
        %p196 = pneg %p36
        %p197 = pneg %p60
        %p198 = pneg %p57
        %p199 = pneg %p81
        %p200 = pneg %p78
        %p201 = pneg %p102
        %p202 = pneg %p99
        %p203 = pneg %p128
        %p204 = pneg %p125
        %p205 = scmp.lt.s32.totalorder %s18, 1
        %s206 = scalar_select %p205, %s18, 1
        %s207 = smul.addr %s206, 4
        %s208 = scalar_lea.vmem %s4, %s207
        %p209 = scmp.lt.s32.totalorder %s18, 1
        %s210 = scalar_select %p209, %s18, 1
        %s211 = smul.addr %s210, 4
        %s212 = scalar_lea.vmem %s4, %s211
        %v214 = vld [vmem:[%s185] sm:$0xf]
        %v215 = vpack.c.bf16 %v214, %v214
        %v216 = vld [vmem:[%s1] sm:$0xf]
        %v217 = vld [vmem:[%s1 + $0x4] sm:$0xf]
        %v218 = vld [vmem:[%s2] sm:$0x1]
        %v220 = vlaneseq
        %v221 = vshrl.u32 %v220, 7
        %v222 = vsub.s32 0, %v221
        %v223 = vrot.slane %v218, %v222
        %v227 = vunpack.c.l.b16 %v216
        %v228 = vunpack.c.l.b16 %v217
        %v229 = vpack.c.b16 %v228, %v227
        %vm231 = vcmask 130048
        %v233 = vsel %vm231, %v215, 0
        %235 = vmatprep.subr.bf16.mxu0 0
        %236 = vmatpush1.bf16.msra.mxu0 %v229
        %237 = vmatprep.subr.bf16.mxu0 0
        %238 = vmatpush1.bf16.msra.mxu0 0
        %239 = vmatprep.subr.bf16.mxu0 0
        %240 = vmatpush1.bf16.msra.mxu0 0
        %241 = vmatprep.subr.bf16.mxu0 0
        %242 = vmatpush1.bf16.msra.mxu0 0
        %243 = vmatprep.subr.bf16.mxu0 0
        %244 = vmatpush1.bf16.msra.mxu0 0
        %245 = vmatprep.subr.bf16.mxu0 0
        %246 = vmatpush1.bf16.msra.mxu0 0
        %247 = vmatprep.subr.bf16.mxu0 0
        %248 = vmatpush1.bf16.msra.mxu0 0
        %249 = vmatprep.subr.bf16.mxu0 0
        %250 = vmatpush1.bf16.msra.mxu0 0
        %251 = vmatprep.subr.bf16.mxu0 0
        %252 = vmatpush1.bf16.msra.mxu0 0
        %253 = vmatprep.subr.bf16.mxu0 0
        %254 = vmatpush1.bf16.msra.mxu0 0
        %255 = vmatprep.subr.bf16.mxu0 0
        %256 = vmatpush1.bf16.msra.mxu0 0
        %257 = vmatprep.subr.bf16.mxu0 0
        %258 = vmatpush1.bf16.msra.mxu0 0
        %259 = vmatprep.subr.bf16.mxu0 0
        %260 = vmatpush1.bf16.msra.mxu0 0
        %261 = vmatprep.subr.bf16.mxu0 0
        %262 = vmatpush1.bf16.msra.mxu0 0
        %263 = vmatprep.subr.bf16.mxu0 0
        %264 = vmatpush1.bf16.msra.mxu0 0
        %265 = vmatprep.subr.bf16.mxu0 0
        %266 = vmatpush1.bf16.msra.mxu0 0
        %267 = vmatprep.mubr.bf16.mxu0 0
        %268 = vmatmul.mubr.bf16.gmra.mrb[0].mxu0 %v233
        %v269 = vpop.f32.mrb[0].mxu0
        %v270 = vadd.f32 %v223, %v269
        %v271 = vpop.f32.mrb[0].mxu0
        %v272 = vpop.f32.mrb[0].mxu0
        %v273 = vpop.f32.mrb[0].mxu0
        %274 = vdwg.mxu0
        %v275 = vld [vmem:[%s3] sm:$0xf]
        %v276 = vadd.f32 %v270, %v275
        %vm277 = vcmask 257024
        %278 = vst.msk [vmem:[%s212] sm:$0xf] %vm277, %v276
        %p279 = scmp.lt.s32.totalorder %s18, 1
        %s280 = scalar_select %p279, %s18, 1
        %s281 = smul.addr %s280, 4
        %s282 = scalar_lea.vmem %s4, %s281
        // Predicated region
        $region41: #{vq_decoder_forward.4} parent=35 // pred_check
          %p283 = pneg %p125
        $region42: #{vq_decoder_forward.4} parent=35 // pred_check_branch
          %285 = sbr.rel (%p283) target = $region44
        $region43: #{vq_decoder_forward.4} parent=35 // pred_region
          _
        $region44: #{vq_decoder_forward.4} parent=35 // pred_fallthru
          _
      $region36: #{vq_decoder_forward.4} parent=5 // pred_fallthru
        _
      %p286 = scmp.le.s32.totalorder 2, %s13
      // Predicated region
      $region45: #{vq_decoder_forward.4} parent=5 // pred_check
        %p287 = pneg %p286
      $region46: #{vq_decoder_forward.4} parent=5 // pred_check_branch
        %289 = sbr.rel (%p287) target = $region48
      $region47: #{vq_decoder_forward.4} parent=5 // pred_region
        %s290 = ssub.s32 %s13, 2
        // Predicated region
        $region49: #{vq_decoder_forward.4} parent=47 // pred_check
          %p291 = pneg %p131
        $region50: #{vq_decoder_forward.4} parent=47 // pred_check_branch
          %293 = sbr.rel (%p291) target = $region52
        $region51: #{vq_decoder_forward.4} parent=47 // pred_region
          %p294 = scmp.lt.s32.totalorder %s19, 1
          %s295 = scalar_select %p294, %s19, 1
          %s296 = smul.addr %s295, 4
          %s297 = scalar_lea.vmem %s4, %s296
        $region52: #{vq_decoder_forward.4} parent=47 // pred_fallthru
          _
      $region48: #{vq_decoder_forward.4} parent=5 // pred_fallthru
        _
    $region6: #{vq_decoder_forward.4} parent=1 // loop_footer
      %s17 = sadd.s32 1, %s13
    $region7: #{vq_decoder_forward.4} parent=1 // loop_footer_branch
      %12 = sbr.rel target = $region3
    $region8: #{vq_decoder_forward.4} parent=1 // loop_exit
      _
    %298 = vsyncpa [#allocation3], 1
    %s299 = scalar_lea.sflag [#allocation3], 1
    %300 = vsyncpa %s299, 1

// kernel: vq_decoder_forward.7
$region0: #{vq_decoder_forward.7}
  #allocation0 [shape = 'u32[]', space=smem, size = 0x4, offset = 0x4, fixed_abs, tag = 'smem constant byte address 0x4 - core index']
  #allocation1 [shape = 'u32[144,128]{1,0:T(1,128)}', space=vmem, size = 0x12000, scoped, tag = 'internal scratch']
  %s0 = inlined_call_operand.vmem [shape: f32[2,4,32], index: 0, kind: input, shape index: {}]
  %s1 = inlined_call_operand.vmem [shape: f32[1,32], index: 1, kind: input, shape index: {}]
  %s2 = inlined_call_operand.vmem [shape: f32[1,32], index: 2, kind: input, shape index: {}]
  %s3 = inlined_call_operand.vmem [shape: bf16[32,256], index: 3, kind: input, shape index: {}]
  %s4 = inlined_call_operand.vmem [shape: f32[1,256], index: 4, kind: input, shape index: {}]
  %s5 = inlined_call_operand.vmem [shape: f32[2,4,256], index: 5, kind: output, shape index: {}]
  %s6 = sld [smem:[#allocation0]]
  $region53: #{vq_decoder_forward.7} parent=0
    _
  %s8 = ssub.s32 1, %s6
  %s9 = scalar_select 0, %s8, %s6
  loop: start=0, step=1, limit=4
  $region2: #{vq_decoder_forward.7} parent=0 // loop_pre_header
    _
  $region3: #{vq_decoder_forward.7} parent=0 // loop_header
    %s11 = sphi 0, %s15
    %p12 = scmp.ge.s32.totalorder %s11, 4
    %s21 = sphi 0, %s23
    %s24 = sphi 0, %s21
    %s25 = sphi 0, %s24
    %s41 = sphi 0, %s25
    %s45 = sphi 0, %s45
    %s47 = sphi 0, %s45
    %s48 = sphi 0, %s47
    %s62 = sphi 0, %s48
    %s66 = sphi 0, %s66
    %s68 = sphi 0, %s66
    %s69 = sphi 0, %s68
    %s83 = sphi 0, %s69
    %s87 = sphi 0, %s87
    %s89 = sphi 0, %s87
    %s90 = sphi 0, %s89
    %s104 = sphi 0, %s90
    %s108 = sphi 0, %s108
    %s110 = sphi 0, %s108
    %s111 = sphi 0, %s110
    %s125 = sphi 0, %s111
    %s131 = sphi 0, %s133
    %s134 = sphi 0, %s131
    %s135 = sphi 0, %s134
    %s151 = sphi 0, %s135
  $region4: #{vq_decoder_forward.7} parent=0 // loop_header_branch
    %14 = sbr.rel (%p12) target = $region8
  $region5: #{vq_decoder_forward.7} parent=0 // loop_body
    %s16 = ssub.s32 %s11, 1
    %s17 = ssub.s32 %s11, 2
    %s18 = sadd.s32 %s11, 1
    %s19 = ssub.s32 %s11, %s18
    %p20 = scmp.eq.s32.totalorder %s19, 0
    %s22 = sadd.s32 %s21, 1
    %s23 = scalar_select %p20, %s21, %s22
    %p26 = pneg %p20
    %p27 = scmp.eq.s32.totalorder %s11, 1
    %p28 = por %p26, %p27
    %p29 = scmp.ne.s32.totalorder %s21, %s24
    %p30 = scmp.eq.s32.totalorder %s11, 0
    %p31 = por %p29, %p30
    %p32 = scmp.ne.s32.totalorder %s21, %s24
    %p33 = scmp.eq.s32.totalorder %s16, 1
    %p34 = por %p32, %p33
    %p35 = scmp.ne.s32.totalorder %s24, %s25
    %p36 = scmp.eq.s32.totalorder %s16, 0
    %p37 = por %p35, %p36
    %p38 = scmp.ne.s32.totalorder %s24, %s25
    %p39 = scmp.eq.s32.totalorder %s17, 1
    %p40 = por %p38, %p39
    %p42 = scmp.ne.s32.totalorder %s25, %s41
    %p43 = scmp.eq.s32.totalorder %s17, 0
    %p44 = por %p42, %p43
    %s46 = sadd.s32 %s45, 1
    %p49 = scmp.eq.s32.totalorder %s11, 1
    %p50 = scmp.ne.s32.totalorder %s45, %s47
    %p51 = scmp.eq.s32.totalorder %s11, 0
    %p52 = por %p50, %p51
    %p53 = scmp.ne.s32.totalorder %s45, %s47
    %p54 = scmp.eq.s32.totalorder %s16, 1
    %p55 = por %p53, %p54
    %p56 = scmp.ne.s32.totalorder %s47, %s48
    %p57 = scmp.eq.s32.totalorder %s16, 0
    %p58 = por %p56, %p57
    %p59 = scmp.ne.s32.totalorder %s47, %s48
    %p60 = scmp.eq.s32.totalorder %s17, 1
    %p61 = por %p59, %p60
    %p63 = scmp.ne.s32.totalorder %s48, %s62
    %p64 = scmp.eq.s32.totalorder %s17, 0
    %p65 = por %p63, %p64
    %s67 = sadd.s32 %s66, 1
    %p70 = scmp.eq.s32.totalorder %s11, 1
    %p71 = scmp.ne.s32.totalorder %s66, %s68
    %p72 = scmp.eq.s32.totalorder %s11, 0
    %p73 = por %p71, %p72
    %p74 = scmp.ne.s32.totalorder %s66, %s68
    %p75 = scmp.eq.s32.totalorder %s16, 1
    %p76 = por %p74, %p75
    %p77 = scmp.ne.s32.totalorder %s68, %s69
    %p78 = scmp.eq.s32.totalorder %s16, 0
    %p79 = por %p77, %p78
    %p80 = scmp.ne.s32.totalorder %s68, %s69
    %p81 = scmp.eq.s32.totalorder %s17, 1
    %p82 = por %p80, %p81
    %p84 = scmp.ne.s32.totalorder %s69, %s83
    %p85 = scmp.eq.s32.totalorder %s17, 0
    %p86 = por %p84, %p85
    %s88 = sadd.s32 %s87, 1
    %p91 = scmp.eq.s32.totalorder %s11, 1
    %p92 = scmp.ne.s32.totalorder %s87, %s89
    %p93 = scmp.eq.s32.totalorder %s11, 0
    %p94 = por %p92, %p93
    %p95 = scmp.ne.s32.totalorder %s87, %s89
    %p96 = scmp.eq.s32.totalorder %s16, 1
    %p97 = por %p95, %p96
    %p98 = scmp.ne.s32.totalorder %s89, %s90
    %p99 = scmp.eq.s32.totalorder %s16, 0
    %p100 = por %p98, %p99
    %p101 = scmp.ne.s32.totalorder %s89, %s90
    %p102 = scmp.eq.s32.totalorder %s17, 1
    %p103 = por %p101, %p102
    %p105 = scmp.ne.s32.totalorder %s90, %s104
    %p106 = scmp.eq.s32.totalorder %s17, 0
    %p107 = por %p105, %p106
    %s109 = sadd.s32 %s108, 1
    %p112 = scmp.eq.s32.totalorder %s11, 1
    %p113 = scmp.ne.s32.totalorder %s108, %s110
    %p114 = scmp.eq.s32.totalorder %s11, 0
    %p115 = por %p113, %p114
    %p116 = scmp.ne.s32.totalorder %s108, %s110
    %p117 = scmp.eq.s32.totalorder %s16, 1
    %p118 = por %p116, %p117
    %p119 = scmp.ne.s32.totalorder %s110, %s111
    %p120 = scmp.eq.s32.totalorder %s16, 0
    %p121 = por %p119, %p120
    %p122 = scmp.ne.s32.totalorder %s110, %s111
    %p123 = scmp.eq.s32.totalorder %s17, 1
    %p124 = por %p122, %p123
    %p126 = scmp.ne.s32.totalorder %s111, %s125
    %p127 = scmp.eq.s32.totalorder %s17, 0
    %p128 = por %p126, %p127
    %s129 = ssub.s32 %s11, %s18
    %p130 = scmp.eq.s32.totalorder %s129, 0
    %s132 = sadd.s32 %s131, 1
    %s133 = scalar_select %p130, %s131, %s132
    %p136 = pneg %p130
    %p137 = scmp.eq.s32.totalorder %s11, 1
    %p138 = por %p136, %p137
    %p139 = scmp.ne.s32.totalorder %s131, %s134
    %p140 = scmp.eq.s32.totalorder %s11, 0
    %p141 = por %p139, %p140
    %p142 = scmp.ne.s32.totalorder %s131, %s134
    %p143 = scmp.eq.s32.totalorder %s16, 1
    %p144 = por %p142, %p143
    %p145 = scmp.ne.s32.totalorder %s134, %s135
    %p146 = scmp.eq.s32.totalorder %s16, 0
    %p147 = por %p145, %p146
    %p148 = scmp.ne.s32.totalorder %s134, %s135
    %p149 = scmp.eq.s32.totalorder %s17, 1
    %p150 = por %p148, %p149
    %p152 = scmp.ne.s32.totalorder %s135, %s151
    %p153 = scmp.eq.s32.totalorder %s17, 0
    %p154 = por %p152, %p153
    %p155 = scmp.le.s32.totalorder 1, %s11
    %p156 = scmp.lt.s32.totalorder %s11, 3
    %p157 = pnand %p155, %p156
    %p158 = pneg %p157
    // Predicated region
    $region9: #{vq_decoder_forward.7} parent=5 // pred_check
      _
    $region10: #{vq_decoder_forward.7} parent=5 // pred_check_branch
      %160 = sbr.rel (%p157) target = $region12
    $region11: #{vq_decoder_forward.7} parent=5 // pred_region
      %s161 = ssub.s32 %s11, 1
      // Predicated region
      $region13: #{vq_decoder_forward.7} parent=11 // pred_check
        %p162 = pneg %p58
      $region14: #{vq_decoder_forward.7} parent=11 // pred_check_branch
        %164 = sbr.rel (%p162) target = $region16
      $region15: #{vq_decoder_forward.7} parent=11 // pred_region
        _
      $region16: #{vq_decoder_forward.7} parent=11 // pred_fallthru
        _
      // Predicated region
      $region17: #{vq_decoder_forward.7} parent=11 // pred_check
        %p165 = pneg %p79
      $region18: #{vq_decoder_forward.7} parent=11 // pred_check_branch
        %167 = sbr.rel (%p165) target = $region20
      $region19: #{vq_decoder_forward.7} parent=11 // pred_region
        _
      $region20: #{vq_decoder_forward.7} parent=11 // pred_fallthru
        _
      // Predicated region
      $region21: #{vq_decoder_forward.7} parent=11 // pred_check
        %p168 = pneg %p100
      $region22: #{vq_decoder_forward.7} parent=11 // pred_check_branch
        %170 = sbr.rel (%p168) target = $region24
      $region23: #{vq_decoder_forward.7} parent=11 // pred_region
        _
      $region24: #{vq_decoder_forward.7} parent=11 // pred_fallthru
        _
      // Predicated region
      $region25: #{vq_decoder_forward.7} parent=11 // pred_check
        %p171 = pneg %p121
      $region26: #{vq_decoder_forward.7} parent=11 // pred_check_branch
        %173 = sbr.rel (%p171) target = $region28
      $region27: #{vq_decoder_forward.7} parent=11 // pred_region
        _
      $region28: #{vq_decoder_forward.7} parent=11 // pred_fallthru
        _
    $region12: #{vq_decoder_forward.7} parent=5 // pred_fallthru
      _
    %p174 = scmp.lt.s32.totalorder %s11, 2
    // Predicated region
    $region29: #{vq_decoder_forward.7} parent=5 // pred_check
      %p175 = pneg %p174
    $region30: #{vq_decoder_forward.7} parent=5 // pred_check_branch
      %177 = sbr.rel (%p175) target = $region32
    $region31: #{vq_decoder_forward.7} parent=5 // pred_region
      // Predicated region
      $region33: #{vq_decoder_forward.7} parent=31 // pred_check
        %p178 = pneg %p31
      $region34: #{vq_decoder_forward.7} parent=31 // pred_check_branch
        %180 = sbr.rel (%p178) target = $region36
      $region35: #{vq_decoder_forward.7} parent=31 // pred_region
        %p181 = scmp.lt.s32.totalorder %s11, 1
        %s182 = scalar_select %p181, %s11, 1
        %s183 = smul.addr %s182, 4
        %s184 = scalar_lea.vmem %s0, %s183
      $region36: #{vq_decoder_forward.7} parent=31 // pred_fallthru
        _
    $region32: #{vq_decoder_forward.7} parent=5 // pred_fallthru
      _
    %p185 = scmp.le.s32.totalorder 1, %s11
    %p186 = scmp.lt.s32.totalorder %s11, 3
    %p187 = pnand %p185, %p186
    %p188 = pneg %p187
    // Predicated region
    $region37: #{vq_decoder_forward.7} parent=5 // pred_check
      _
    $region38: #{vq_decoder_forward.7} parent=5 // pred_check_branch
      %190 = sbr.rel (%p187) target = $region40
    $region39: #{vq_decoder_forward.7} parent=5 // pred_region
      %s191 = ssub.s32 %s11, 1
      %p192 = scmp.lt.s32.totalorder %s16, 1
      %s193 = scalar_select %p192, %s16, 1
      %s194 = smul.addr %s193, 4
      %s195 = scalar_lea.vmem %s0, %s194
      %p196 = pneg %p37
      %p197 = pneg %p34
      %p198 = pneg %p58
      %p199 = pneg %p55
      %p200 = pneg %p79
      %p201 = pneg %p76
      %p202 = pneg %p100
      %p203 = pneg %p97
      %p204 = pneg %p121
      %p205 = pneg %p118
      %p206 = pneg %p147
      %p207 = pneg %p144
      %p208 = scmp.lt.s32.totalorder %s16, 1
      %s209 = scalar_select %p208, %s16, 1
      %s210 = smul.addr %s209, 2
      %s211 = smul.addr %s210, 4
      %s212 = scalar_lea.vmem %s5, %s211
      %p213 = scmp.lt.s32.totalorder %s16, 1
      %s214 = scalar_select %p213, %s16, 1
      %s215 = smul.addr %s214, 4
      %s216 = scalar_lea.vmem %s0, %s215
      %p217 = scmp.lt.s32.totalorder %s16, 1
      %s218 = scalar_select %p217, %s16, 1
      %s219 = smul.addr %s218, 2
      %s220 = smul.addr %s219, 4
      %s221 = scalar_lea.vmem %s5, %s220
      %v223 = vld [vmem:[%s216] sm:$0xf]
      %v224 = vld [vmem:[%s1] sm:$0x1]
      %v225 = vld [vmem:[%s2] sm:$0x1]
      %vm226 = vcmask 257024
      %v227 = vsel %vm226, %v223, 0.0
      %228 = vadd.xlane.f32.xlu0 %v227
      %v229 = vpop.xlane.xlu0 %228
      %v230 = vrcp.pop 32.0
      %v231 = vmul.f32 %v229, %v230
      %v232 = vsub.f32 %v223, %v231
      %v233 = vmul.f32 %v232, %v232
      %v234 = vsel %vm226, %v233, 0.0
      %235 = vadd.xlane.f32.xlu0 %v234
      %v236 = vpop.xlane.xlu0 %235
      %v237 = vmul.f32 %v236, %v230
      %v238 = vadd.f32 %v237, 1e-05
      %v239 = vrsqrt.pop %v238
      %v240 = vmul.f32 %v232, %v239
      %v242 = vlaneseq
      %v243 = vshrl.u32 %v242, 7
      %v244 = vsub.s32 0, %v243
      %v245 = vrot.slane %v224, %v244
      %v247 = vmul.f32 %v240, %v245
      %v249 = vlaneseq
      %v250 = vshrl.u32 %v249, 7
      %v251 = vsub.s32 0, %v250
      %v252 = vrot.slane %v225, %v251
      %v254 = vadd.f32 %v247, %v252
      %v255 = vmul.f32 %v254, 0.5
      %v256 = vmul.f32 %v254, %v254
      %v257 = vmul.f32 %v256, %v254
      %v258 = vmul.f32 %v257, 0.044715
      %v259 = vadd.f32 %v254, %v258
      %v260 = vmul.f32 %v259, 0.7978846
      %v261 = vtanh.pop %v260
      %v262 = vadd.f32 %v261, 1.0
      %v263 = vmul.f32 %v255, %v262
      %v264 = vpack.c.bf16 %v263, %v263
      %v265 = vld [vmem:[%s3] sm:$0xff]
      %v266 = vld [vmem:[%s3 + $0x8] sm:$0xff]
      %v267 = vld [vmem:[%s3 + $0x10] sm:$0xff]
      %v268 = vld [vmem:[%s3 + $0x18] sm:$0xff]
      %v269 = vld [vmem:[%s4] sm:$0x3]
      %v271 = vlaneseq
      %v272 = vshrl.u32 %v271, 7
      %v273 = vsub.s32 0, %v272
      %v274 = vrot.slane %v269, %v273
      %v275 = vlaneseq
      %v276 = vshrl.u32 %v275, 7
      %v277 = vsub.s32 1, %v276
      %v278 = vrot.slane %v269, %v277
      %v285 = vunpack.c.l.b16 %v265
      %v286 = vunpack.c.h.b16 %v265
      %v287 = vunpack.c.l.b16 %v266
      %v288 = vunpack.c.h.b16 %v266
      %v289 = vunpack.c.l.b16 %v267
      %v290 = vunpack.c.h.b16 %v267
      %v291 = vunpack.c.l.b16 %v268
      %v292 = vunpack.c.h.b16 %v268
      %v293 = vpack.c.b16 %v287, %v285
      %v294 = vpack.c.b16 %v288, %v286
      %v295 = vpack.c.b16 %v291, %v289
      %v296 = vpack.c.b16 %v292, %v290
      %vm301 = vcmask 261120
      %v303 = vsel %vm301, %v264, 0
      %305 = vmatprep.subr.bf16.mxu0 %v294
      %306 = vmatpush1.bf16.msra.mxu0 %v293
      %307 = vmatprep.subr.bf16.mxu0 %v296
      %308 = vmatpush1.bf16.msra.mxu0 %v295
      %309 = vmatprep.subr.bf16.mxu0 0
      %310 = vmatpush1.bf16.msra.mxu0 0
      %311 = vmatprep.subr.bf16.mxu0 0
      %312 = vmatpush1.bf16.msra.mxu0 0
      %313 = vmatprep.subr.bf16.mxu0 0
      %314 = vmatpush1.bf16.msra.mxu0 0
      %315 = vmatprep.subr.bf16.mxu0 0
      %316 = vmatpush1.bf16.msra.mxu0 0
      %317 = vmatprep.subr.bf16.mxu0 0
      %318 = vmatpush1.bf16.msra.mxu0 0
      %319 = vmatprep.subr.bf16.mxu0 0
      %320 = vmatpush1.bf16.msra.mxu0 0
      %321 = vmatprep.subr.bf16.mxu0 0
      %322 = vmatpush1.bf16.msra.mxu0 0
      %323 = vmatprep.subr.bf16.mxu0 0
      %324 = vmatpush1.bf16.msra.mxu0 0
      %325 = vmatprep.subr.bf16.mxu0 0
      %326 = vmatpush1.bf16.msra.mxu0 0
      %327 = vmatprep.subr.bf16.mxu0 0
      %328 = vmatpush1.bf16.msra.mxu0 0
      %329 = vmatprep.subr.bf16.mxu0 0
      %330 = vmatpush1.bf16.msra.mxu0 0
      %331 = vmatprep.subr.bf16.mxu0 0
      %332 = vmatpush1.bf16.msra.mxu0 0
      %333 = vmatprep.subr.bf16.mxu0 0
      %334 = vmatpush1.bf16.msra.mxu0 0
      %335 = vmatprep.subr.bf16.mxu0 0
      %336 = vmatpush1.bf16.msra.mxu0 0
      %337 = vmatprep.mubr.bf16.mxu0 0
      %338 = vmatmul.mubr.bf16.gmra.mrb[0].mxu0 %v303
      %v339 = vpop.f32.mrb[0].mxu0
      %v340 = vadd.f32 %v274, %v339
      %v341 = vpop.f32.mrb[0].mxu0
      %v342 = vadd.f32 %v278, %v341
      %v343 = vpop.f32.mrb[0].mxu0
      %v344 = vpop.f32.mrb[0].mxu0
      %345 = vdwg.mxu0
      %v348 = vcombine.low %v340, %v342
      %350 = vst [vmem:[%s221] sm:$0xff] %v348
      %p351 = scmp.lt.s32.totalorder %s16, 1
      %s352 = scalar_select %p351, %s16, 1
      %s353 = smul.addr %s352, 2
      %s354 = smul.addr %s353, 4
      %s355 = scalar_lea.vmem %s5, %s354
      // Predicated region
      $region41: #{vq_decoder_forward.7} parent=39 // pred_check
        %p356 = pneg %p144
      $region42: #{vq_decoder_forward.7} parent=39 // pred_check_branch
        %358 = sbr.rel (%p356) target = $region44
      $region43: #{vq_decoder_forward.7} parent=39 // pred_region
        _
      $region44: #{vq_decoder_forward.7} parent=39 // pred_fallthru
        _
    $region40: #{vq_decoder_forward.7} parent=5 // pred_fallthru
      _
    %p359 = scmp.le.s32.totalorder 2, %s11
    // Predicated region
    $region45: #{vq_decoder_forward.7} parent=5 // pred_check
      %p360 = pneg %p359
    $region46: #{vq_decoder_forward.7} parent=5 // pred_check_branch
      %362 = sbr.rel (%p360) target = $region48
    $region47: #{vq_decoder_forward.7} parent=5 // pred_region
      %s363 = ssub.s32 %s11, 2
      // Predicated region
      $region49: #{vq_decoder_forward.7} parent=47 // pred_check
        %p364 = pneg %p150
      $region50: #{vq_decoder_forward.7} parent=47 // pred_check_branch
        %366 = sbr.rel (%p364) target = $region52
      $region51: #{vq_decoder_forward.7} parent=47 // pred_region
        %p367 = scmp.lt.s32.totalorder %s17, 1
        %s368 = scalar_select %p367, %s17, 1
        %s369 = smul.addr %s368, 2
        %s370 = smul.addr %s369, 4
        %s371 = scalar_lea.vmem %s5, %s370
      $region52: #{vq_decoder_forward.7} parent=47 // pred_fallthru
        _
    $region48: #{vq_decoder_forward.7} parent=5 // pred_fallthru
      _
  $region6: #{vq_decoder_forward.7} parent=0 // loop_footer
    %s15 = sadd.s32 1, %s11
  $region7: #{vq_decoder_forward.7} parent=0 // loop_footer_branch
    %10 = sbr.rel target = $region3
  $region8: #{vq_decoder_forward.7} parent=0 // loop_exit
    _

// kernel: vq_decoder_forward.5
$region0: #{vq_decoder_forward.5}
  #allocation0 [shape = 'u32[]', space=smem, size = 0x4, offset = 0x4, fixed_abs, tag = 'smem constant byte address 0x4 - core index']
  #allocation1 [shape = 'u32[144,128]{1,0:T(1,128)}', space=vmem, size = 0x12000, scoped, tag = 'internal scratch']
  %s0 = inlined_call_operand.vmem [shape: f32[2,1,4,32], index: 0, kind: input, shape index: {}]
  %s1 = inlined_call_operand.vmem [shape: f32[1,4,4,4], index: 1, kind: input, shape index: {}]
  %s2 = inlined_call_operand.vmem [shape: f32[1,32], index: 2, kind: input, shape index: {}]
  %s3 = inlined_call_operand.vmem [shape: f32[1,32], index: 3, kind: input, shape index: {}]
  %s4 = inlined_call_operand.vmem [shape: bf16[4,32,8], index: 4, kind: input, shape index: {}]
  %s5 = inlined_call_operand.vmem [shape: f32[4,1,8], index: 5, kind: input, shape index: {}]
  %s6 = inlined_call_operand.vmem [shape: bf16[4,32,8], index: 6, kind: input, shape index: {}]
  %s7 = inlined_call_operand.vmem [shape: f32[4,1,8], index: 7, kind: input, shape index: {}]
  %s8 = inlined_call_operand.vmem [shape: bf16[4,32,8], index: 8, kind: input, shape index: {}]
  %s9 = inlined_call_operand.vmem [shape: f32[4,1,8], index: 9, kind: input, shape index: {}]
  %s10 = inlined_call_operand.vmem [shape: bf16[4,8,32], index: 10, kind: input, shape index: {}]
  %s11 = inlined_call_operand.vmem [shape: f32[1,32], index: 11, kind: input, shape index: {}]
  %s12 = inlined_call_operand.vmem [shape: f32[1,32], index: 12, kind: input, shape index: {}]
  %s13 = inlined_call_operand.vmem [shape: f32[1,32], index: 13, kind: input, shape index: {}]
  %s14 = inlined_call_operand.vmem [shape: bf16[32,128], index: 14, kind: input, shape index: {}]
  %s15 = inlined_call_operand.vmem [shape: f32[1,128], index: 15, kind: input, shape index: {}]
  %s16 = inlined_call_operand.vmem [shape: bf16[128,32], index: 16, kind: input, shape index: {}]
  %s17 = inlined_call_operand.vmem [shape: f32[1,32], index: 17, kind: input, shape index: {}]
  %s18 = inlined_call_operand.vmem [shape: f32[2,1,4,32], index: 18, kind: output, shape index: {}]
  %s19 = sld [smem:[#allocation0]]
  $region105: #{vq_decoder_forward.5} parent=0
    _
  %s21 = ssub.s32 1, %s19
  %s22 = scalar_select 0, %s21, %s19
  loop: start=0, step=1, limit=4
  $region2: #{vq_decoder_forward.5} parent=0 // loop_pre_header
    _
  $region3: #{vq_decoder_forward.5} parent=0 // loop_header
    %s24 = sphi 0, %s28
    %p25 = scmp.ge.s32.totalorder %s24, 4
    %s31 = sphi 0, %s43
    %s32 = sphi 0, %s39
    %s33 = sphi 0, %s31
    %s34 = sphi 0, %s32
    %s35 = sphi 0, %s33
    %s36 = sphi 0, %s34
    %s48 = sphi 0, %s50
    %s51 = sphi 0, %s48
    %s52 = sphi 0, %s51
    %s68 = sphi 0, %s52
    %s74 = sphi 0, %s76
    %s77 = sphi 0, %s74
    %s78 = sphi 0, %s77
    %s94 = sphi 0, %s78
    %s98 = sphi 0, %s98
    %s100 = sphi 0, %s98
    %s101 = sphi 0, %s100
    %s115 = sphi 0, %s101
    %s119 = sphi 0, %s119
    %s121 = sphi 0, %s119
    %s122 = sphi 0, %s121
    %s136 = sphi 0, %s122
    %s140 = sphi 0, %s140
    %s142 = sphi 0, %s140
    %s143 = sphi 0, %s142
    %s157 = sphi 0, %s143
    %s161 = sphi 0, %s161
    %s163 = sphi 0, %s161
    %s164 = sphi 0, %s163
    %s178 = sphi 0, %s164
    %s182 = sphi 0, %s182
    %s184 = sphi 0, %s182
    %s185 = sphi 0, %s184
    %s199 = sphi 0, %s185
    %s203 = sphi 0, %s203
    %s205 = sphi 0, %s203
    %s206 = sphi 0, %s205
    %s220 = sphi 0, %s206
    %s224 = sphi 0, %s224
    %s226 = sphi 0, %s224
    %s227 = sphi 0, %s226
    %s241 = sphi 0, %s227
    %s245 = sphi 0, %s245
    %s247 = sphi 0, %s245
    %s248 = sphi 0, %s247
    %s262 = sphi 0, %s248
    %s266 = sphi 0, %s266
    %s268 = sphi 0, %s266
    %s269 = sphi 0, %s268
    %s283 = sphi 0, %s269
    %s287 = sphi 0, %s287
    %s289 = sphi 0, %s287
    %s290 = sphi 0, %s289
    %s304 = sphi 0, %s290
    %s308 = sphi 0, %s308
    %s310 = sphi 0, %s308
    %s311 = sphi 0, %s310
    %s325 = sphi 0, %s311
    %s329 = sphi 0, %s329
    %s331 = sphi 0, %s329
    %s332 = sphi 0, %s331
    %s346 = sphi 0, %s332
    %s350 = sphi 0, %s350
    %s352 = sphi 0, %s350
    %s353 = sphi 0, %s352
    %s367 = sphi 0, %s353
    %s371 = sphi 0, %s371
    %s373 = sphi 0, %s371
    %s374 = sphi 0, %s373
    %s388 = sphi 0, %s374
    %s392 = sphi 0, %s392
    %s394 = sphi 0, %s392
    %s395 = sphi 0, %s394
    %s409 = sphi 0, %s395
    %s413 = sphi 0, %s413
    %s415 = sphi 0, %s413
    %s416 = sphi 0, %s415
    %s430 = sphi 0, %s416
    %s438 = sphi 0, %s440
    %s441 = sphi 0, %s438
    %s442 = sphi 0, %s441
    %s458 = sphi 0, %s442
  $region4: #{vq_decoder_forward.5} parent=0 // loop_header_branch
    %27 = sbr.rel (%p25) target = $region8
  $region5: #{vq_decoder_forward.5} parent=0 // loop_body
    %s29 = ssub.s32 %s24, 1
    %s30 = ssub.s32 %s24, 2
    %s37 = sadd.s32 1, %s32
    %p38 = scmp.ge.s32.totalorder %s37, 1
    %s39 = scalar_select %p38, 0, %s37
    %s40 = sadd.s32 1, %s31
    %s41 = scalar_select %p38, %s40, %s31
    %p42 = scmp.ge.s32.totalorder %s41, 2
    %s43 = scalar_select %p42, 0, %s41
    %s44 = ssub.s32 %s31, %s43
    %s45 = ssub.s32 %s32, %s39
    %s46 = sor.u32 %s44, %s45
    %p47 = scmp.eq.s32.totalorder %s46, 0
    %s49 = sadd.s32 %s48, 1
    %s50 = scalar_select %p47, %s48, %s49
    %p53 = pneg %p47
    %p54 = scmp.eq.s32.totalorder %s24, 1
    %p55 = por %p53, %p54
    %p56 = scmp.ne.s32.totalorder %s48, %s51
    %p57 = scmp.eq.s32.totalorder %s24, 0
    %p58 = por %p56, %p57
    %p59 = scmp.ne.s32.totalorder %s48, %s51
    %p60 = scmp.eq.s32.totalorder %s29, 1
    %p61 = por %p59, %p60
    %p62 = scmp.ne.s32.totalorder %s51, %s52
    %p63 = scmp.eq.s32.totalorder %s29, 0
    %p64 = por %p62, %p63
    %p65 = scmp.ne.s32.totalorder %s51, %s52
    %p66 = scmp.eq.s32.totalorder %s30, 1
    %p67 = por %p65, %p66
    %p69 = scmp.ne.s32.totalorder %s52, %s68
    %p70 = scmp.eq.s32.totalorder %s30, 0
    %p71 = por %p69, %p70
    %s72 = ssub.s32 %s32, %s39
    %p73 = scmp.eq.s32.totalorder %s72, 0
    %s75 = sadd.s32 %s74, 1
    %s76 = scalar_select %p73, %s74, %s75
    %p79 = pneg %p73
    %p80 = scmp.eq.s32.totalorder %s24, 1
    %p81 = por %p79, %p80
    %p82 = scmp.ne.s32.totalorder %s74, %s77
    %p83 = scmp.eq.s32.totalorder %s24, 0
    %p84 = por %p82, %p83
    %p85 = scmp.ne.s32.totalorder %s74, %s77
    %p86 = scmp.eq.s32.totalorder %s29, 1
    %p87 = por %p85, %p86
    %p88 = scmp.ne.s32.totalorder %s77, %s78
    %p89 = scmp.eq.s32.totalorder %s29, 0
    %p90 = por %p88, %p89
    %p91 = scmp.ne.s32.totalorder %s77, %s78
    %p92 = scmp.eq.s32.totalorder %s30, 1
    %p93 = por %p91, %p92
    %p95 = scmp.ne.s32.totalorder %s78, %s94
    %p96 = scmp.eq.s32.totalorder %s30, 0
    %p97 = por %p95, %p96
    %s99 = sadd.s32 %s98, 1
    %p102 = scmp.eq.s32.totalorder %s24, 1
    %p103 = scmp.ne.s32.totalorder %s98, %s100
    %p104 = scmp.eq.s32.totalorder %s24, 0
    %p105 = por %p103, %p104
    %p106 = scmp.ne.s32.totalorder %s98, %s100
    %p107 = scmp.eq.s32.totalorder %s29, 1
    %p108 = por %p106, %p107
    %p109 = scmp.ne.s32.totalorder %s100, %s101
    %p110 = scmp.eq.s32.totalorder %s29, 0
    %p111 = por %p109, %p110
    %p112 = scmp.ne.s32.totalorder %s100, %s101
    %p113 = scmp.eq.s32.totalorder %s30, 1
    %p114 = por %p112, %p113
    %p116 = scmp.ne.s32.totalorder %s101, %s115
    %p117 = scmp.eq.s32.totalorder %s30, 0
    %p118 = por %p116, %p117
    %s120 = sadd.s32 %s119, 1
    %p123 = scmp.eq.s32.totalorder %s24, 1
    %p124 = scmp.ne.s32.totalorder %s119, %s121
    %p125 = scmp.eq.s32.totalorder %s24, 0
    %p126 = por %p124, %p125
    %p127 = scmp.ne.s32.totalorder %s119, %s121
    %p128 = scmp.eq.s32.totalorder %s29, 1
    %p129 = por %p127, %p128
    %p130 = scmp.ne.s32.totalorder %s121, %s122
    %p131 = scmp.eq.s32.totalorder %s29, 0
    %p132 = por %p130, %p131
    %p133 = scmp.ne.s32.totalorder %s121, %s122
    %p134 = scmp.eq.s32.totalorder %s30, 1
    %p135 = por %p133, %p134
    %p137 = scmp.ne.s32.totalorder %s122, %s136
    %p138 = scmp.eq.s32.totalorder %s30, 0
    %p139 = por %p137, %p138
    %s141 = sadd.s32 %s140, 1
    %p144 = scmp.eq.s32.totalorder %s24, 1
    %p145 = scmp.ne.s32.totalorder %s140, %s142
    %p146 = scmp.eq.s32.totalorder %s24, 0
    %p147 = por %p145, %p146
    %p148 = scmp.ne.s32.totalorder %s140, %s142
    %p149 = scmp.eq.s32.totalorder %s29, 1
    %p150 = por %p148, %p149
    %p151 = scmp.ne.s32.totalorder %s142, %s143
    %p152 = scmp.eq.s32.totalorder %s29, 0
    %p153 = por %p151, %p152
    %p154 = scmp.ne.s32.totalorder %s142, %s143
    %p155 = scmp.eq.s32.totalorder %s30, 1
    %p156 = por %p154, %p155
    %p158 = scmp.ne.s32.totalorder %s143, %s157
    %p159 = scmp.eq.s32.totalorder %s30, 0
    %p160 = por %p158, %p159
    %s162 = sadd.s32 %s161, 1
    %p165 = scmp.eq.s32.totalorder %s24, 1
    %p166 = scmp.ne.s32.totalorder %s161, %s163
    %p167 = scmp.eq.s32.totalorder %s24, 0
    %p168 = por %p166, %p167
    %p169 = scmp.ne.s32.totalorder %s161, %s163
    %p170 = scmp.eq.s32.totalorder %s29, 1
    %p171 = por %p169, %p170
    %p172 = scmp.ne.s32.totalorder %s163, %s164
    %p173 = scmp.eq.s32.totalorder %s29, 0
    %p174 = por %p172, %p173
    %p175 = scmp.ne.s32.totalorder %s163, %s164
    %p176 = scmp.eq.s32.totalorder %s30, 1
    %p177 = por %p175, %p176
    %p179 = scmp.ne.s32.totalorder %s164, %s178
    %p180 = scmp.eq.s32.totalorder %s30, 0
    %p181 = por %p179, %p180
    %s183 = sadd.s32 %s182, 1
    %p186 = scmp.eq.s32.totalorder %s24, 1
    %p187 = scmp.ne.s32.totalorder %s182, %s184
    %p188 = scmp.eq.s32.totalorder %s24, 0
    %p189 = por %p187, %p188
    %p190 = scmp.ne.s32.totalorder %s182, %s184
    %p191 = scmp.eq.s32.totalorder %s29, 1
    %p192 = por %p190, %p191
    %p193 = scmp.ne.s32.totalorder %s184, %s185
    %p194 = scmp.eq.s32.totalorder %s29, 0
    %p195 = por %p193, %p194
    %p196 = scmp.ne.s32.totalorder %s184, %s185
    %p197 = scmp.eq.s32.totalorder %s30, 1
    %p198 = por %p196, %p197
    %p200 = scmp.ne.s32.totalorder %s185, %s199
    %p201 = scmp.eq.s32.totalorder %s30, 0
    %p202 = por %p200, %p201
    %s204 = sadd.s32 %s203, 1
    %p207 = scmp.eq.s32.totalorder %s24, 1
    %p208 = scmp.ne.s32.totalorder %s203, %s205
    %p209 = scmp.eq.s32.totalorder %s24, 0
    %p210 = por %p208, %p209
    %p211 = scmp.ne.s32.totalorder %s203, %s205
    %p212 = scmp.eq.s32.totalorder %s29, 1
    %p213 = por %p211, %p212
    %p214 = scmp.ne.s32.totalorder %s205, %s206
    %p215 = scmp.eq.s32.totalorder %s29, 0
    %p216 = por %p214, %p215
    %p217 = scmp.ne.s32.totalorder %s205, %s206
    %p218 = scmp.eq.s32.totalorder %s30, 1
    %p219 = por %p217, %p218
    %p221 = scmp.ne.s32.totalorder %s206, %s220
    %p222 = scmp.eq.s32.totalorder %s30, 0
    %p223 = por %p221, %p222
    %s225 = sadd.s32 %s224, 1
    %p228 = scmp.eq.s32.totalorder %s24, 1
    %p229 = scmp.ne.s32.totalorder %s224, %s226
    %p230 = scmp.eq.s32.totalorder %s24, 0
    %p231 = por %p229, %p230
    %p232 = scmp.ne.s32.totalorder %s224, %s226
    %p233 = scmp.eq.s32.totalorder %s29, 1
    %p234 = por %p232, %p233
    %p235 = scmp.ne.s32.totalorder %s226, %s227
    %p236 = scmp.eq.s32.totalorder %s29, 0
    %p237 = por %p235, %p236
    %p238 = scmp.ne.s32.totalorder %s226, %s227
    %p239 = scmp.eq.s32.totalorder %s30, 1
    %p240 = por %p238, %p239
    %p242 = scmp.ne.s32.totalorder %s227, %s241
    %p243 = scmp.eq.s32.totalorder %s30, 0
    %p244 = por %p242, %p243
    %s246 = sadd.s32 %s245, 1
    %p249 = scmp.eq.s32.totalorder %s24, 1
    %p250 = scmp.ne.s32.totalorder %s245, %s247
    %p251 = scmp.eq.s32.totalorder %s24, 0
    %p252 = por %p250, %p251
    %p253 = scmp.ne.s32.totalorder %s245, %s247
    %p254 = scmp.eq.s32.totalorder %s29, 1
    %p255 = por %p253, %p254
    %p256 = scmp.ne.s32.totalorder %s247, %s248
    %p257 = scmp.eq.s32.totalorder %s29, 0
    %p258 = por %p256, %p257
    %p259 = scmp.ne.s32.totalorder %s247, %s248
    %p260 = scmp.eq.s32.totalorder %s30, 1
    %p261 = por %p259, %p260
    %p263 = scmp.ne.s32.totalorder %s248, %s262
    %p264 = scmp.eq.s32.totalorder %s30, 0
    %p265 = por %p263, %p264
    %s267 = sadd.s32 %s266, 1
    %p270 = scmp.eq.s32.totalorder %s24, 1
    %p271 = scmp.ne.s32.totalorder %s266, %s268
    %p272 = scmp.eq.s32.totalorder %s24, 0
    %p273 = por %p271, %p272
    %p274 = scmp.ne.s32.totalorder %s266, %s268
    %p275 = scmp.eq.s32.totalorder %s29, 1
    %p276 = por %p274, %p275
    %p277 = scmp.ne.s32.totalorder %s268, %s269
    %p278 = scmp.eq.s32.totalorder %s29, 0
    %p279 = por %p277, %p278
    %p280 = scmp.ne.s32.totalorder %s268, %s269
    %p281 = scmp.eq.s32.totalorder %s30, 1
    %p282 = por %p280, %p281
    %p284 = scmp.ne.s32.totalorder %s269, %s283
    %p285 = scmp.eq.s32.totalorder %s30, 0
    %p286 = por %p284, %p285
    %s288 = sadd.s32 %s287, 1
    %p291 = scmp.eq.s32.totalorder %s24, 1
    %p292 = scmp.ne.s32.totalorder %s287, %s289
    %p293 = scmp.eq.s32.totalorder %s24, 0
    %p294 = por %p292, %p293
    %p295 = scmp.ne.s32.totalorder %s287, %s289
    %p296 = scmp.eq.s32.totalorder %s29, 1
    %p297 = por %p295, %p296
    %p298 = scmp.ne.s32.totalorder %s289, %s290
    %p299 = scmp.eq.s32.totalorder %s29, 0
    %p300 = por %p298, %p299
    %p301 = scmp.ne.s32.totalorder %s289, %s290
    %p302 = scmp.eq.s32.totalorder %s30, 1
    %p303 = por %p301, %p302
    %p305 = scmp.ne.s32.totalorder %s290, %s304
    %p306 = scmp.eq.s32.totalorder %s30, 0
    %p307 = por %p305, %p306
    %s309 = sadd.s32 %s308, 1
    %p312 = scmp.eq.s32.totalorder %s24, 1
    %p313 = scmp.ne.s32.totalorder %s308, %s310
    %p314 = scmp.eq.s32.totalorder %s24, 0
    %p315 = por %p313, %p314
    %p316 = scmp.ne.s32.totalorder %s308, %s310
    %p317 = scmp.eq.s32.totalorder %s29, 1
    %p318 = por %p316, %p317
    %p319 = scmp.ne.s32.totalorder %s310, %s311
    %p320 = scmp.eq.s32.totalorder %s29, 0
    %p321 = por %p319, %p320
    %p322 = scmp.ne.s32.totalorder %s310, %s311
    %p323 = scmp.eq.s32.totalorder %s30, 1
    %p324 = por %p322, %p323
    %p326 = scmp.ne.s32.totalorder %s311, %s325
    %p327 = scmp.eq.s32.totalorder %s30, 0
    %p328 = por %p326, %p327
    %s330 = sadd.s32 %s329, 1
    %p333 = scmp.eq.s32.totalorder %s24, 1
    %p334 = scmp.ne.s32.totalorder %s329, %s331
    %p335 = scmp.eq.s32.totalorder %s24, 0
    %p336 = por %p334, %p335
    %p337 = scmp.ne.s32.totalorder %s329, %s331
    %p338 = scmp.eq.s32.totalorder %s29, 1
    %p339 = por %p337, %p338
    %p340 = scmp.ne.s32.totalorder %s331, %s332
    %p341 = scmp.eq.s32.totalorder %s29, 0
    %p342 = por %p340, %p341
    %p343 = scmp.ne.s32.totalorder %s331, %s332
    %p344 = scmp.eq.s32.totalorder %s30, 1
    %p345 = por %p343, %p344
    %p347 = scmp.ne.s32.totalorder %s332, %s346
    %p348 = scmp.eq.s32.totalorder %s30, 0
    %p349 = por %p347, %p348
    %s351 = sadd.s32 %s350, 1
    %p354 = scmp.eq.s32.totalorder %s24, 1
    %p355 = scmp.ne.s32.totalorder %s350, %s352
    %p356 = scmp.eq.s32.totalorder %s24, 0
    %p357 = por %p355, %p356
    %p358 = scmp.ne.s32.totalorder %s350, %s352
    %p359 = scmp.eq.s32.totalorder %s29, 1
    %p360 = por %p358, %p359
    %p361 = scmp.ne.s32.totalorder %s352, %s353
    %p362 = scmp.eq.s32.totalorder %s29, 0
    %p363 = por %p361, %p362
    %p364 = scmp.ne.s32.totalorder %s352, %s353
    %p365 = scmp.eq.s32.totalorder %s30, 1
    %p366 = por %p364, %p365
    %p368 = scmp.ne.s32.totalorder %s353, %s367
    %p369 = scmp.eq.s32.totalorder %s30, 0
    %p370 = por %p368, %p369
    %s372 = sadd.s32 %s371, 1
    %p375 = scmp.eq.s32.totalorder %s24, 1
    %p376 = scmp.ne.s32.totalorder %s371, %s373
    %p377 = scmp.eq.s32.totalorder %s24, 0
    %p378 = por %p376, %p377
    %p379 = scmp.ne.s32.totalorder %s371, %s373
    %p380 = scmp.eq.s32.totalorder %s29, 1
    %p381 = por %p379, %p380
    %p382 = scmp.ne.s32.totalorder %s373, %s374
    %p383 = scmp.eq.s32.totalorder %s29, 0
    %p384 = por %p382, %p383
    %p385 = scmp.ne.s32.totalorder %s373, %s374
    %p386 = scmp.eq.s32.totalorder %s30, 1
    %p387 = por %p385, %p386
    %p389 = scmp.ne.s32.totalorder %s374, %s388
    %p390 = scmp.eq.s32.totalorder %s30, 0
    %p391 = por %p389, %p390
    %s393 = sadd.s32 %s392, 1
    %p396 = scmp.eq.s32.totalorder %s24, 1
    %p397 = scmp.ne.s32.totalorder %s392, %s394
    %p398 = scmp.eq.s32.totalorder %s24, 0
    %p399 = por %p397, %p398
    %p400 = scmp.ne.s32.totalorder %s392, %s394
    %p401 = scmp.eq.s32.totalorder %s29, 1
    %p402 = por %p400, %p401
    %p403 = scmp.ne.s32.totalorder %s394, %s395
    %p404 = scmp.eq.s32.totalorder %s29, 0
    %p405 = por %p403, %p404
    %p406 = scmp.ne.s32.totalorder %s394, %s395
    %p407 = scmp.eq.s32.totalorder %s30, 1
    %p408 = por %p406, %p407
    %p410 = scmp.ne.s32.totalorder %s395, %s409
    %p411 = scmp.eq.s32.totalorder %s30, 0
    %p412 = por %p410, %p411
    %s414 = sadd.s32 %s413, 1
    %p417 = scmp.eq.s32.totalorder %s24, 1
    %p418 = scmp.ne.s32.totalorder %s413, %s415
    %p419 = scmp.eq.s32.totalorder %s24, 0
    %p420 = por %p418, %p419
    %p421 = scmp.ne.s32.totalorder %s413, %s415
    %p422 = scmp.eq.s32.totalorder %s29, 1
    %p423 = por %p421, %p422
    %p424 = scmp.ne.s32.totalorder %s415, %s416
    %p425 = scmp.eq.s32.totalorder %s29, 0
    %p426 = por %p424, %p425
    %p427 = scmp.ne.s32.totalorder %s415, %s416
    %p428 = scmp.eq.s32.totalorder %s30, 1
    %p429 = por %p427, %p428
    %p431 = scmp.ne.s32.totalorder %s416, %s430
    %p432 = scmp.eq.s32.totalorder %s30, 0
    %p433 = por %p431, %p432
    %s434 = ssub.s32 %s31, %s43
    %s435 = ssub.s32 %s32, %s39
    %s436 = sor.u32 %s434, %s435
    %p437 = scmp.eq.s32.totalorder %s436, 0
    %s439 = sadd.s32 %s438, 1
    %s440 = scalar_select %p437, %s438, %s439
    %p443 = pneg %p437
    %p444 = scmp.eq.s32.totalorder %s24, 1
    %p445 = por %p443, %p444
    %p446 = scmp.ne.s32.totalorder %s438, %s441
    %p447 = scmp.eq.s32.totalorder %s24, 0
    %p448 = por %p446, %p447
    %p449 = scmp.ne.s32.totalorder %s438, %s441
    %p450 = scmp.eq.s32.totalorder %s29, 1
    %p451 = por %p449, %p450
    %p452 = scmp.ne.s32.totalorder %s441, %s442
    %p453 = scmp.eq.s32.totalorder %s29, 0
    %p454 = por %p452, %p453
    %p455 = scmp.ne.s32.totalorder %s441, %s442
    %p456 = scmp.eq.s32.totalorder %s30, 1
    %p457 = por %p455, %p456
    %p459 = scmp.ne.s32.totalorder %s442, %s458
    %p460 = scmp.eq.s32.totalorder %s30, 0
    %p461 = por %p459, %p460
    %p462 = scmp.le.s32.totalorder 1, %s24
    %p463 = scmp.lt.s32.totalorder %s24, 3
    %p464 = pnand %p462, %p463
    %p465 = pneg %p464
    // Predicated region
    $region9: #{vq_decoder_forward.5} parent=5 // pred_check
      _
    $region10: #{vq_decoder_forward.5} parent=5 // pred_check_branch
      %467 = sbr.rel (%p464) target = $region12
    $region11: #{vq_decoder_forward.5} parent=5 // pred_region
      %s468 = ssub.s32 %s24, 1
      // Predicated region
      $region13: #{vq_decoder_forward.5} parent=11 // pred_check
        %p469 = pneg %p90
      $region14: #{vq_decoder_forward.5} parent=11 // pred_check_branch
        %471 = sbr.rel (%p469) target = $region16
      $region15: #{vq_decoder_forward.5} parent=11 // pred_region
        %p472 = scmp.lt.s32.totalorder %s34, 0
        %s473 = scalar_select %p472, %s34, 0
        %s474 = smul.addr %s473, 4
        %s475 = smul.addr %s474, 4
        %s476 = scalar_lea.vmem %s1, %s475
      $region16: #{vq_decoder_forward.5} parent=11 // pred_fallthru
        _
      // Predicated region
      $region17: #{vq_decoder_forward.5} parent=11 // pred_check
        %p477 = pneg %p111
      $region18: #{vq_decoder_forward.5} parent=11 // pred_check_branch
        %479 = sbr.rel (%p477) target = $region20
      $region19: #{vq_decoder_forward.5} parent=11 // pred_region
        _
      $region20: #{vq_decoder_forward.5} parent=11 // pred_fallthru
        _
      // Predicated region
      $region21: #{vq_decoder_forward.5} parent=11 // pred_check
        %p480 = pneg %p132
      $region22: #{vq_decoder_forward.5} parent=11 // pred_check_branch
        %482 = sbr.rel (%p480) target = $region24
      $region23: #{vq_decoder_forward.5} parent=11 // pred_region
        _
      $region24: #{vq_decoder_forward.5} parent=11 // pred_fallthru
        _
      // Predicated region
      $region25: #{vq_decoder_forward.5} parent=11 // pred_check
        %p483 = pneg %p153
      $region26: #{vq_decoder_forward.5} parent=11 // pred_check_branch
        %485 = sbr.rel (%p483) target = $region28
      $region27: #{vq_decoder_forward.5} parent=11 // pred_region
        _
      $region28: #{vq_decoder_forward.5} parent=11 // pred_fallthru
        _
      // Predicated region
      $region29: #{vq_decoder_forward.5} parent=11 // pred_check
        %p486 = pneg %p174
      $region30: #{vq_decoder_forward.5} parent=11 // pred_check_branch
        %488 = sbr.rel (%p486) target = $region32
      $region31: #{vq_decoder_forward.5} parent=11 // pred_region
        _
      $region32: #{vq_decoder_forward.5} parent=11 // pred_fallthru
        _
      // Predicated region
      $region33: #{vq_decoder_forward.5} parent=11 // pred_check
        %p489 = pneg %p195
      $region34: #{vq_decoder_forward.5} parent=11 // pred_check_branch
        %491 = sbr.rel (%p489) target = $region36
      $region35: #{vq_decoder_forward.5} parent=11 // pred_region
        _
      $region36: #{vq_decoder_forward.5} parent=11 // pred_fallthru
        _
      // Predicated region
      $region37: #{vq_decoder_forward.5} parent=11 // pred_check
        %p492 = pneg %p216
      $region38: #{vq_decoder_forward.5} parent=11 // pred_check_branch
        %494 = sbr.rel (%p492) target = $region40
      $region39: #{vq_decoder_forward.5} parent=11 // pred_region
        _
      $region40: #{vq_decoder_forward.5} parent=11 // pred_fallthru
        _
      // Predicated region
      $region41: #{vq_decoder_forward.5} parent=11 // pred_check
        %p495 = pneg %p237
      $region42: #{vq_decoder_forward.5} parent=11 // pred_check_branch
        %497 = sbr.rel (%p495) target = $region44
      $region43: #{vq_decoder_forward.5} parent=11 // pred_region
        _
      $region44: #{vq_decoder_forward.5} parent=11 // pred_fallthru
        _
      // Predicated region
      $region45: #{vq_decoder_forward.5} parent=11 // pred_check
        %p498 = pneg %p258
      $region46: #{vq_decoder_forward.5} parent=11 // pred_check_branch
        %500 = sbr.rel (%p498) target = $region48
      $region47: #{vq_decoder_forward.5} parent=11 // pred_region
        _
      $region48: #{vq_decoder_forward.5} parent=11 // pred_fallthru
        _
      // Predicated region
      $region49: #{vq_decoder_forward.5} parent=11 // pred_check
        %p501 = pneg %p279
      $region50: #{vq_decoder_forward.5} parent=11 // pred_check_branch
        %503 = sbr.rel (%p501) target = $region52
      $region51: #{vq_decoder_forward.5} parent=11 // pred_region
        _
      $region52: #{vq_decoder_forward.5} parent=11 // pred_fallthru
        _
      // Predicated region
      $region53: #{vq_decoder_forward.5} parent=11 // pred_check
        %p504 = pneg %p300
      $region54: #{vq_decoder_forward.5} parent=11 // pred_check_branch
        %506 = sbr.rel (%p504) target = $region56
      $region55: #{vq_decoder_forward.5} parent=11 // pred_region
        _
      $region56: #{vq_decoder_forward.5} parent=11 // pred_fallthru
        _
      // Predicated region
      $region57: #{vq_decoder_forward.5} parent=11 // pred_check
        %p507 = pneg %p321
      $region58: #{vq_decoder_forward.5} parent=11 // pred_check_branch
        %509 = sbr.rel (%p507) target = $region60
      $region59: #{vq_decoder_forward.5} parent=11 // pred_region
        _
      $region60: #{vq_decoder_forward.5} parent=11 // pred_fallthru
        _
      // Predicated region
      $region61: #{vq_decoder_forward.5} parent=11 // pred_check
        %p510 = pneg %p342
      $region62: #{vq_decoder_forward.5} parent=11 // pred_check_branch
        %512 = sbr.rel (%p510) target = $region64
      $region63: #{vq_decoder_forward.5} parent=11 // pred_region
        _
      $region64: #{vq_decoder_forward.5} parent=11 // pred_fallthru
        _
      // Predicated region
      $region65: #{vq_decoder_forward.5} parent=11 // pred_check
        %p513 = pneg %p363
      $region66: #{vq_decoder_forward.5} parent=11 // pred_check_branch
        %515 = sbr.rel (%p513) target = $region68
      $region67: #{vq_decoder_forward.5} parent=11 // pred_region
        _
      $region68: #{vq_decoder_forward.5} parent=11 // pred_fallthru
        _
      // Predicated region
      $region69: #{vq_decoder_forward.5} parent=11 // pred_check
        %p516 = pneg %p384
      $region70: #{vq_decoder_forward.5} parent=11 // pred_check_branch
        %518 = sbr.rel (%p516) target = $region72
      $region71: #{vq_decoder_forward.5} parent=11 // pred_region
        _
      $region72: #{vq_decoder_forward.5} parent=11 // pred_fallthru
        _
      // Predicated region
      $region73: #{vq_decoder_forward.5} parent=11 // pred_check
        %p519 = pneg %p405
      $region74: #{vq_decoder_forward.5} parent=11 // pred_check_branch
        %521 = sbr.rel (%p519) target = $region76
      $region75: #{vq_decoder_forward.5} parent=11 // pred_region
        _
      $region76: #{vq_decoder_forward.5} parent=11 // pred_fallthru
        _
      // Predicated region
      $region77: #{vq_decoder_forward.5} parent=11 // pred_check
        %p522 = pneg %p426
      $region78: #{vq_decoder_forward.5} parent=11 // pred_check_branch
        %524 = sbr.rel (%p522) target = $region80
      $region79: #{vq_decoder_forward.5} parent=11 // pred_region
        _
      $region80: #{vq_decoder_forward.5} parent=11 // pred_fallthru
        _
    $region12: #{vq_decoder_forward.5} parent=5 // pred_fallthru
      _
    %p525 = scmp.lt.s32.totalorder %s24, 2
    // Predicated region
    $region81: #{vq_decoder_forward.5} parent=5 // pred_check
      %p526 = pneg %p525
    $region82: #{vq_decoder_forward.5} parent=5 // pred_check_branch
      %528 = sbr.rel (%p526) target = $region84
    $region83: #{vq_decoder_forward.5} parent=5 // pred_region
      // Predicated region
      $region85: #{vq_decoder_forward.5} parent=83 // pred_check
        %p529 = pneg %p58
      $region86: #{vq_decoder_forward.5} parent=83 // pred_check_branch
        %531 = sbr.rel (%p529) target = $region88
      $region87: #{vq_decoder_forward.5} parent=83 // pred_region
        %p532 = scmp.lt.s32.totalorder %s31, 1
        %s533 = scalar_select %p532, %s31, 1
        %p534 = scmp.lt.s32.totalorder %s32, 0
        %s535 = scalar_select %p534, %s32, 0
        %s536 = sadd.s32 %s535, %s533
        %s537 = smul.addr %s536, 4
        %s538 = scalar_lea.vmem %s0, %s537
      $region88: #{vq_decoder_forward.5} parent=83 // pred_fallthru
        _
    $region84: #{vq_decoder_forward.5} parent=5 // pred_fallthru
      _
    %p539 = scmp.le.s32.totalorder 1, %s24
    %p540 = scmp.lt.s32.totalorder %s24, 3
    %p541 = pnand %p539, %p540
    %p542 = pneg %p541
    // Predicated region
    $region89: #{vq_decoder_forward.5} parent=5 // pred_check
      _
    $region90: #{vq_decoder_forward.5} parent=5 // pred_check_branch
      %544 = sbr.rel (%p541) target = $region92
    $region91: #{vq_decoder_forward.5} parent=5 // pred_region
      %s545 = ssub.s32 %s24, 1
      %p546 = scmp.lt.s32.totalorder %s33, 1
      %s547 = scalar_select %p546, %s33, 1
      %p548 = scmp.lt.s32.totalorder %s34, 0
      %s549 = scalar_select %p548, %s34, 0
      %s550 = sadd.s32 %s549, %s547
      %s551 = smul.addr %s550, 4
      %s552 = scalar_lea.vmem %s0, %s551
      %p553 = pneg %p64
      %p554 = pneg %p61
      %p555 = scmp.lt.s32.totalorder %s34, 0
      %s556 = scalar_select %p555, %s34, 0
      %s557 = smul.addr %s556, 4
      %s558 = smul.addr %s557, 4
      %s559 = scalar_lea.vmem %s1, %s558
      %p560 = pneg %p90
      %p561 = pneg %p87
      %p562 = pneg %p111
      %p563 = pneg %p108
      %p564 = pneg %p132
      %p565 = pneg %p129
      %p566 = pneg %p153
      %p567 = pneg %p150
      %p568 = pneg %p174
      %p569 = pneg %p171
      %p570 = pneg %p195
      %p571 = pneg %p192
      %p572 = pneg %p216
      %p573 = pneg %p213
      %p574 = pneg %p237
      %p575 = pneg %p234
      %p576 = pneg %p258
      %p577 = pneg %p255
      %p578 = pneg %p279
      %p579 = pneg %p276
      %p580 = pneg %p300
      %p581 = pneg %p297
      %p582 = pneg %p321
      %p583 = pneg %p318
      %p584 = pneg %p342
      %p585 = pneg %p339
      %p586 = pneg %p363
      %p587 = pneg %p360
      %p588 = pneg %p384
      %p589 = pneg %p381
      %p590 = pneg %p405
      %p591 = pneg %p402
      %p592 = pneg %p426
      %p593 = pneg %p423
      %p594 = pneg %p454
      %p595 = pneg %p451
      %p596 = scmp.lt.s32.totalorder %s33, 1
      %s597 = scalar_select %p596, %s33, 1
      %p598 = scmp.lt.s32.totalorder %s34, 0
      %s599 = scalar_select %p598, %s34, 0
      %s600 = sadd.s32 %s599, %s597
      %s601 = smul.addr %s600, 4
      %s602 = scalar_lea.vmem %s18, %s601
      %p603 = scmp.lt.s32.totalorder %s33, 1
      %s604 = scalar_select %p603, %s33, 1
      %p605 = scmp.lt.s32.totalorder %s34, 0
      %s606 = scalar_select %p605, %s34, 0
      %s607 = sadd.s32 %s606, %s604
      %s608 = smul.addr %s607, 4
      %s609 = scalar_lea.vmem %s0, %s608
      %p610 = scmp.lt.s32.totalorder %s34, 0
      %s611 = scalar_select %p610, %s34, 0
      %s612 = smul.addr %s611, 4
      %s613 = smul.addr %s612, 4
      %s614 = scalar_lea.vmem %s1, %s613
      %p615 = scmp.lt.s32.totalorder %s33, 1
      %s616 = scalar_select %p615, %s33, 1
      %p617 = scmp.lt.s32.totalorder %s34, 0
      %s618 = scalar_select %p617, %s34, 0
      %s619 = sadd.s32 %s618, %s616
      %s620 = smul.addr %s619, 4
      %s621 = scalar_lea.vmem %s18, %s620
      %v623 = vld [vmem:[%s609] sm:$0xf]
      %v624 = vld [vmem:[%s2] sm:$0x1]
      %v625 = vld [vmem:[%s3] sm:$0x1]
      %vm626 = vcmask 257024
      %v627 = vsel %vm626, %v623, 0.0
      %628 = vadd.xlane.f32.xlu0 %v627
      %v629 = vpop.xlane.xlu0 %628
      %v630 = vrcp.pop 32.0
      %v631 = vmul.f32 %v629, %v630
      %v632 = vsub.f32 %v623, %v631
      %v633 = vmul.f32 %v632, %v632
      %v634 = vsel %vm626, %v633, 0.0
      %635 = vadd.xlane.f32.xlu0 %v634
      %v636 = vpop.xlane.xlu0 %635
      %v637 = vmul.f32 %v636, %v630
      %v638 = vadd.f32 %v637, 1e-05
      %v639 = vrsqrt.pop %v638
      %v640 = vmul.f32 %v632, %v639
      %v642 = vlaneseq
      %v643 = vshrl.u32 %v642, 7
      %v644 = vsub.s32 0, %v643
      %v645 = vrot.slane %v624, %v644
      %v647 = vmul.f32 %v640, %v645
      %v649 = vlaneseq
      %v650 = vshrl.u32 %v649, 7
      %v651 = vsub.s32 0, %v650
      %v652 = vrot.slane %v625, %v651
      %v654 = vadd.f32 %v647, %v652
      %v655 = vpack.c.bf16 %v654, %v654
      %v656 = vld [vmem:[%s4] sm:$0xf]
      %v657 = vld [vmem:[%s4 + $0x4] sm:$0xf]
      %v658 = vld [vmem:[%s4 + $0x8] sm:$0xf]
      %v659 = vld [vmem:[%s4 + $0xc] sm:$0xf]
      %v660 = vld [vmem:[%s5] sm:$0x1]
      %v662 = vlaneseq
      %v663 = vshrl.u32 %v662, 7
      %v664 = vsub.s32 0, %v663
      %v665 = vrot.slane %v660, %v664
      %v671 = vunpack.c.l.b16 %v656
      %v672 = vunpack.c.l.b16 %v657
      %v673 = vunpack.c.l.b16 %v658
      %v674 = vunpack.c.l.b16 %v659
      %v675 = vpack.c.b16 %v672, %v671
      %v676 = vpack.c.b16 %v674, %v673
      %vm679 = vcmask 261120
      %v681 = vsel %vm679, %v655, 0
      %683 = vmatprep.subr.bf16.mxu0 0
      %684 = vmatpush1.bf16.msra.mxu0 %v675
      %685 = vmatprep.subr.bf16.mxu0 0
      %686 = vmatpush1.bf16.msra.mxu0 %v676
      %687 = vmatprep.subr.bf16.mxu0 0
      %688 = vmatpush1.bf16.msra.mxu0 0
      %689 = vmatprep.subr.bf16.mxu0 0
      %690 = vmatpush1.bf16.msra.mxu0 0
      %691 = vmatprep.subr.bf16.mxu0 0
      %692 = vmatpush1.bf16.msra.mxu0 0
      %693 = vmatprep.subr.bf16.mxu0 0
      %694 = vmatpush1.bf16.msra.mxu0 0
      %695 = vmatprep.subr.bf16.mxu0 0
      %696 = vmatpush1.bf16.msra.mxu0 0
      %697 = vmatprep.subr.bf16.mxu0 0
      %698 = vmatpush1.bf16.msra.mxu0 0
      %699 = vmatprep.subr.bf16.mxu0 0
      %700 = vmatpush1.bf16.msra.mxu0 0
      %701 = vmatprep.subr.bf16.mxu0 0
      %702 = vmatpush1.bf16.msra.mxu0 0
      %703 = vmatprep.subr.bf16.mxu0 0
      %704 = vmatpush1.bf16.msra.mxu0 0
      %705 = vmatprep.subr.bf16.mxu0 0
      %706 = vmatpush1.bf16.msra.mxu0 0
      %707 = vmatprep.subr.bf16.mxu0 0
      %708 = vmatpush1.bf16.msra.mxu0 0
      %709 = vmatprep.subr.bf16.mxu0 0
      %710 = vmatpush1.bf16.msra.mxu0 0
      %711 = vmatprep.subr.bf16.mxu0 0
      %712 = vmatpush1.bf16.msra.mxu0 0
      %713 = vmatprep.subr.bf16.mxu0 0
      %714 = vmatpush1.bf16.msra.mxu0 0
      %715 = vmatprep.mubr.bf16.mxu0 0
      %716 = vmatmul.mubr.bf16.gmra.mrb[0].mxu0 %v681
      %v717 = vpop.f32.mrb[0].mxu0
      %v718 = vadd.f32 %v665, %v717
      %v719 = vpop.f32.mrb[0].mxu0
      %v720 = vpop.f32.mrb[0].mxu0
      %v721 = vpop.f32.mrb[0].mxu0
      %722 = vdwg.mxu0
      %v723 = vld [vmem:[%s6] sm:$0xf]
      %v724 = vld [vmem:[%s6 + $0x4] sm:$0xf]
      %v725 = vld [vmem:[%s6 + $0x8] sm:$0xf]
      %v726 = vld [vmem:[%s6 + $0xc] sm:$0xf]
      %v727 = vld [vmem:[%s7] sm:$0x1]
      %v729 = vlaneseq
      %v730 = vshrl.u32 %v729, 7
      %v731 = vsub.s32 0, %v730
      %v732 = vrot.slane %v727, %v731
      %v738 = vunpack.c.l.b16 %v723
      %v739 = vunpack.c.l.b16 %v724
      %v740 = vunpack.c.l.b16 %v725
      %v741 = vunpack.c.l.b16 %v726
      %v742 = vpack.c.b16 %v739, %v738
      %v743 = vpack.c.b16 %v741, %v740
      %746 = vmatprep.subr.bf16.mxu0 0
      %747 = vmatpush1.bf16.msra.mxu0 %v742
      %748 = vmatprep.subr.bf16.mxu0 0
      %749 = vmatpush1.bf16.msra.mxu0 %v743
      %750 = vmatprep.subr.bf16.mxu0 0
      %751 = vmatpush1.bf16.msra.mxu0 0
      %752 = vmatprep.subr.bf16.mxu0 0
      %753 = vmatpush1.bf16.msra.mxu0 0
      %754 = vmatprep.subr.bf16.mxu0 0
      %755 = vmatpush1.bf16.msra.mxu0 0
      %756 = vmatprep.subr.bf16.mxu0 0
      %757 = vmatpush1.bf16.msra.mxu0 0
      %758 = vmatprep.subr.bf16.mxu0 0
      %759 = vmatpush1.bf16.msra.mxu0 0
      %760 = vmatprep.subr.bf16.mxu0 0
      %761 = vmatpush1.bf16.msra.mxu0 0
      %762 = vmatprep.subr.bf16.mxu0 0
      %763 = vmatpush1.bf16.msra.mxu0 0
      %764 = vmatprep.subr.bf16.mxu0 0
      %765 = vmatpush1.bf16.msra.mxu0 0
      %766 = vmatprep.subr.bf16.mxu0 0
      %767 = vmatpush1.bf16.msra.mxu0 0
      %768 = vmatprep.subr.bf16.mxu0 0
      %769 = vmatpush1.bf16.msra.mxu0 0
      %770 = vmatprep.subr.bf16.mxu0 0
      %771 = vmatpush1.bf16.msra.mxu0 0
      %772 = vmatprep.subr.bf16.mxu0 0
      %773 = vmatpush1.bf16.msra.mxu0 0
      %774 = vmatprep.subr.bf16.mxu0 0
      %775 = vmatpush1.bf16.msra.mxu0 0
      %776 = vmatprep.subr.bf16.mxu0 0
      %777 = vmatpush1.bf16.msra.mxu0 0
      %778 = vmatprep.mubr.bf16.mxu0 0
      %779 = vmatmul.mubr.bf16.gmra.mrb[0].mxu0 %v681
      %v780 = vpop.f32.mrb[0].mxu0
      %v781 = vadd.f32 %v732, %v780
      %v782 = vpop.f32.mrb[0].mxu0
      %v783 = vpop.f32.mrb[0].mxu0
      %v784 = vpop.f32.mrb[0].mxu0
      %785 = vdwg.mxu0
      %v786 = vld [vmem:[%s8] sm:$0xf]
      %v787 = vld [vmem:[%s8 + $0x4] sm:$0xf]
      %v788 = vld [vmem:[%s8 + $0x8] sm:$0xf]
      %v789 = vld [vmem:[%s8 + $0xc] sm:$0xf]
      %v790 = vld [vmem:[%s9] sm:$0x1]
      %v792 = vlaneseq
      %v793 = vshrl.u32 %v792, 7
      %v794 = vsub.s32 0, %v793
      %v795 = vrot.slane %v790, %v794
      %v801 = vunpack.c.l.b16 %v786
      %v802 = vunpack.c.l.b16 %v787
      %v803 = vunpack.c.l.b16 %v788
      %v804 = vunpack.c.l.b16 %v789
      %v805 = vpack.c.b16 %v802, %v801
      %v806 = vpack.c.b16 %v804, %v803
      %809 = vmatprep.subr.bf16.mxu0 0
      %810 = vmatpush1.bf16.msra.mxu0 %v805
      %811 = vmatprep.subr.bf16.mxu0 0
      %812 = vmatpush1.bf16.msra.mxu0 %v806
      %813 = vmatprep.subr.bf16.mxu0 0
      %814 = vmatpush1.bf16.msra.mxu0 0
      %815 = vmatprep.subr.bf16.mxu0 0
      %816 = vmatpush1.bf16.msra.mxu0 0
      %817 = vmatprep.subr.bf16.mxu0 0
      %818 = vmatpush1.bf16.msra.mxu0 0
      %819 = vmatprep.subr.bf16.mxu0 0
      %820 = vmatpush1.bf16.msra.mxu0 0
      %821 = vmatprep.subr.bf16.mxu0 0
      %822 = vmatpush1.bf16.msra.mxu0 0
      %823 = vmatprep.subr.bf16.mxu0 0
      %824 = vmatpush1.bf16.msra.mxu0 0
      %825 = vmatprep.subr.bf16.mxu0 0
      %826 = vmatpush1.bf16.msra.mxu0 0
      %827 = vmatprep.subr.bf16.mxu0 0
      %828 = vmatpush1.bf16.msra.mxu0 0
      %829 = vmatprep.subr.bf16.mxu0 0
      %830 = vmatpush1.bf16.msra.mxu0 0
      %831 = vmatprep.subr.bf16.mxu0 0
      %832 = vmatpush1.bf16.msra.mxu0 0
      %833 = vmatprep.subr.bf16.mxu0 0
      %834 = vmatpush1.bf16.msra.mxu0 0
      %835 = vmatprep.subr.bf16.mxu0 0
      %836 = vmatpush1.bf16.msra.mxu0 0
      %837 = vmatprep.subr.bf16.mxu0 0
      %838 = vmatpush1.bf16.msra.mxu0 0
      %839 = vmatprep.subr.bf16.mxu0 0
      %840 = vmatpush1.bf16.msra.mxu0 0
      %841 = vmatprep.mubr.bf16.mxu0 0
      %842 = vmatmul.mubr.bf16.gmra.mrb[0].mxu0 %v681
      %v843 = vpop.f32.mrb[0].mxu0
      %v844 = vadd.f32 %v795, %v843
      %v845 = vpop.f32.mrb[0].mxu0
      %v846 = vpop.f32.mrb[0].mxu0
      %v847 = vpop.f32.mrb[0].mxu0
      %848 = vdwg.mxu0
      %v849 = vpack.c.bf16 %v718, %v718
      %v850 = vpack.c.bf16 %v781, %v781
      %vm851 = vcmask 64512
      %v853 = vsel %vm851, %v849, 0
      %v856 = vsel %vm851, %v850, 0
      %858 = vmatprep.subr.bf16.mxu0 0
      %859 = vmatpush1.bf16.xpose.msra.mxu0 %v856
      %860 = vmatprep.subr.bf16.mxu0 0
      %861 = vmatpush1.bf16.xpose.msra.mxu0 0
      %862 = vmatprep.subr.bf16.mxu0 0
      %863 = vmatpush1.bf16.xpose.msra.mxu0 0
      %864 = vmatprep.subr.bf16.mxu0 0
      %865 = vmatpush1.bf16.xpose.msra.mxu0 0
      %866 = vmatprep.subr.bf16.mxu0 0
      %867 = vmatpush1.bf16.xpose.msra.mxu0 0
      %868 = vmatprep.subr.bf16.mxu0 0
      %869 = vmatpush1.bf16.xpose.msra.mxu0 0
      %870 = vmatprep.subr.bf16.mxu0 0
      %871 = vmatpush1.bf16.xpose.msra.mxu0 0
      %872 = vmatprep.subr.bf16.mxu0 0
      %873 = vmatpush1.bf16.xpose.msra.mxu0 0
      %874 = vmatprep.subr.bf16.mxu0 0
      %875 = vmatpush1.bf16.xpose.msra.mxu0 0
      %876 = vmatprep.subr.bf16.mxu0 0
      %877 = vmatpush1.bf16.xpose.msra.mxu0 0
      %878 = vmatprep.subr.bf16.mxu0 0
      %879 = vmatpush1.bf16.xpose.msra.mxu0 0
      %880 = vmatprep.subr.bf16.mxu0 0
      %881 = vmatpush1.bf16.xpose.msra.mxu0 0
      %882 = vmatprep.subr.bf16.mxu0 0
      %883 = vmatpush1.bf16.xpose.msra.mxu0 0
      %884 = vmatprep.subr.bf16.mxu0 0
      %885 = vmatpush1.bf16.xpose.msra.mxu0 0
      %886 = vmatprep.subr.bf16.mxu0 0
      %887 = vmatpush1.bf16.xpose.msra.mxu0 0
      %888 = vmatprep.subr.bf16.mxu0 0
      %889 = vmatpush1.bf16.xpose.msra.mxu0 0
      %890 = vmatprep.mubr.bf16.mxu0 0
      %891 = vmatmul.mubr.bf16.gmra.mrb[0].mxu0 %v853
      %v892 = vpop.f32.mrb[0].mxu0
      %v893 = vadd.f32 0.0, %v892
      %v894 = vpop.f32.mrb[0].mxu0
      %v895 = vpop.f32.mrb[0].mxu0
      %v896 = vpop.f32.mrb[0].mxu0
      %897 = vdwg.mxu0
      %v898 = vmul.f32 %v893, 0.35355338
      %v899 = vld [vmem:[%s614] sm:$0xf]
      %v900 = vadd.f32 %v898, %v899
      %vm901 = vcmask 27648
      %v902 = vsel %vm901, %v900, -inf
      %903 = vmax.xlane.f32.xlu0 %v902
      %v904 = vpop.xlane.xlu0 %903
      %v905 = vsub.f32 %v900, %v904
      %v906 = vmul.f32 %v905, 1.442695
      %v907 = vpow.pop %v906
      %v908 = vsel %vm901, %v907, 0.0
      %909 = vadd.xlane.f32.xlu0 %v908
      %v910 = vpop.xlane.xlu0 %909
      %v911 = vrcp.pop %v910
      %v912 = vmul.f32 %v907, %v911
      %v913 = vpack.c.bf16 %v912, %v912
      %v914 = vpack.c.bf16 %v844, %v844
      %vm915 = vcmask 31744
      %v917 = vsel %vm915, %v913, 0
      %vm919 = vcmask 1041408
      %v921 = vsel %vm919, %v914, 0
      %923 = vmatprep.subr.bf16.mxu0 0
      %924 = vmatpush1.bf16.msra.mxu0 %v921
      %925 = vmatprep.subr.bf16.mxu0 0
      %926 = vmatpush1.bf16.msra.mxu0 0
      %927 = vmatprep.subr.bf16.mxu0 0
      %928 = vmatpush1.bf16.msra.mxu0 0
      %929 = vmatprep.subr.bf16.mxu0 0
      %930 = vmatpush1.bf16.msra.mxu0 0
      %931 = vmatprep.subr.bf16.mxu0 0
      %932 = vmatpush1.bf16.msra.mxu0 0
      %933 = vmatprep.subr.bf16.mxu0 0
      %934 = vmatpush1.bf16.msra.mxu0 0
      %935 = vmatprep.subr.bf16.mxu0 0
      %936 = vmatpush1.bf16.msra.mxu0 0
      %937 = vmatprep.subr.bf16.mxu0 0
      %938 = vmatpush1.bf16.msra.mxu0 0
      %939 = vmatprep.subr.bf16.mxu0 0
      %940 = vmatpush1.bf16.msra.mxu0 0
      %941 = vmatprep.subr.bf16.mxu0 0
      %942 = vmatpush1.bf16.msra.mxu0 0
      %943 = vmatprep.subr.bf16.mxu0 0
      %944 = vmatpush1.bf16.msra.mxu0 0
      %945 = vmatprep.subr.bf16.mxu0 0
      %946 = vmatpush1.bf16.msra.mxu0 0
      %947 = vmatprep.subr.bf16.mxu0 0
      %948 = vmatpush1.bf16.msra.mxu0 0
      %949 = vmatprep.subr.bf16.mxu0 0
      %950 = vmatpush1.bf16.msra.mxu0 0
      %951 = vmatprep.subr.bf16.mxu0 0
      %952 = vmatpush1.bf16.msra.mxu0 0
      %953 = vmatprep.subr.bf16.mxu0 0
      %954 = vmatpush1.bf16.msra.mxu0 0
      %955 = vmatprep.mubr.bf16.mxu0 0
      %956 = vmatmul.mubr.bf16.gmra.mrb[0].mxu0 %v917
      %v957 = vpop.f32.mrb[0].mxu0
      %v958 = vadd.f32 0.0, %v957
      %v959 = vpop.f32.mrb[0].mxu0
      %v960 = vpop.f32.mrb[0].mxu0
      %v961 = vpop.f32.mrb[0].mxu0
      %962 = vdwg.mxu0
      %v963 = vpack.c.bf16 %v958, %v958
      %v964 = vld [vmem:[%s10] sm:$0xf]
      %s965 = scalar_lea.vmem %s4, 16
      %v966 = vld [vmem:[%s965] sm:$0xf]
      %v967 = vld [vmem:[%s965 + $0x4] sm:$0xf]
      %v968 = vld [vmem:[%s965 + $0x8] sm:$0xf]
      %v969 = vld [vmem:[%s965 + $0xc] sm:$0xf]
      %s970 = scalar_lea.vmem %s5, 1
      %v971 = vld [vmem:[%s970] sm:$0x1]
      %v973 = vlaneseq
      %v974 = vshrl.u32 %v973, 7
      %v975 = vsub.s32 0, %v974
      %v976 = vrot.slane %v971, %v975
      %v982 = vunpack.c.l.b16 %v966
      %v983 = vunpack.c.l.b16 %v967
      %v984 = vunpack.c.l.b16 %v968
      %v985 = vunpack.c.l.b16 %v969
      %v986 = vpack.c.b16 %v983, %v982
      %v987 = vpack.c.b16 %v985, %v984
      %990 = vmatprep.subr.bf16.mxu0 0
      %991 = vmatpush1.bf16.msra.mxu0 %v986
      %992 = vmatprep.subr.bf16.mxu0 0
      %993 = vmatpush1.bf16.msra.mxu0 %v987
      %994 = vmatprep.subr.bf16.mxu0 0
      %995 = vmatpush1.bf16.msra.mxu0 0
      %996 = vmatprep.subr.bf16.mxu0 0
      %997 = vmatpush1.bf16.msra.mxu0 0
      %998 = vmatprep.subr.bf16.mxu0 0
      %999 = vmatpush1.bf16.msra.mxu0 0
      %1000 = vmatprep.subr.bf16.mxu0 0
      %1001 = vmatpush1.bf16.msra.mxu0 0
      %1002 = vmatprep.subr.bf16.mxu0 0
      %1003 = vmatpush1.bf16.msra.mxu0 0
      %1004 = vmatprep.subr.bf16.mxu0 0
      %1005 = vmatpush1.bf16.msra.mxu0 0
      %1006 = vmatprep.subr.bf16.mxu0 0
      %1007 = vmatpush1.bf16.msra.mxu0 0
      %1008 = vmatprep.subr.bf16.mxu0 0
      %1009 = vmatpush1.bf16.msra.mxu0 0
      %1010 = vmatprep.subr.bf16.mxu0 0
      %1011 = vmatpush1.bf16.msra.mxu0 0
      %1012 = vmatprep.subr.bf16.mxu0 0
      %1013 = vmatpush1.bf16.msra.mxu0 0
      %1014 = vmatprep.subr.bf16.mxu0 0
      %1015 = vmatpush1.bf16.msra.mxu0 0
      %1016 = vmatprep.subr.bf16.mxu0 0
      %1017 = vmatpush1.bf16.msra.mxu0 0
      %1018 = vmatprep.subr.bf16.mxu0 0
      %1019 = vmatpush1.bf16.msra.mxu0 0
      %1020 = vmatprep.subr.bf16.mxu0 0
      %1021 = vmatpush1.bf16.msra.mxu0 0
      %1022 = vmatprep.mubr.bf16.mxu0 0
      %1023 = vmatmul.mubr.bf16.gmra.mrb[0].mxu0 %v681
      %v1024 = vpop.f32.mrb[0].mxu0
      %v1025 = vadd.f32 %v976, %v1024
      %v1026 = vpop.f32.mrb[0].mxu0
      %v1027 = vpop.f32.mrb[0].mxu0
      %v1028 = vpop.f32.mrb[0].mxu0
      %1029 = vdwg.mxu0
      %s1030 = scalar_lea.vmem %s6, 16
      %v1031 = vld [vmem:[%s1030] sm:$0xf]
      %v1032 = vld [vmem:[%s1030 + $0x4] sm:$0xf]
      %v1033 = vld [vmem:[%s1030 + $0x8] sm:$0xf]
      %v1034 = vld [vmem:[%s1030 + $0xc] sm:$0xf]
      %s1035 = scalar_lea.vmem %s7, 1
      %v1036 = vld [vmem:[%s1035] sm:$0x1]
      %v1038 = vlaneseq
      %v1039 = vshrl.u32 %v1038, 7
      %v1040 = vsub.s32 0, %v1039
      %v1041 = vrot.slane %v1036, %v1040
      %v1047 = vunpack.c.l.b16 %v1031
      %v1048 = vunpack.c.l.b16 %v1032
      %v1049 = vunpack.c.l.b16 %v1033
      %v1050 = vunpack.c.l.b16 %v1034
      %v1051 = vpack.c.b16 %v1048, %v1047
      %v1052 = vpack.c.b16 %v1050, %v1049
      %1055 = vmatprep.subr.bf16.mxu0 0
      %1056 = vmatpush1.bf16.msra.mxu0 %v1051
      %1057 = vmatprep.subr.bf16.mxu0 0
      %1058 = vmatpush1.bf16.msra.mxu0 %v1052
      %1059 = vmatprep.subr.bf16.mxu0 0
      %1060 = vmatpush1.bf16.msra.mxu0 0
      %1061 = vmatprep.subr.bf16.mxu0 0
      %1062 = vmatpush1.bf16.msra.mxu0 0
      %1063 = vmatprep.subr.bf16.mxu0 0
      %1064 = vmatpush1.bf16.msra.mxu0 0
      %1065 = vmatprep.subr.bf16.mxu0 0
      %1066 = vmatpush1.bf16.msra.mxu0 0
      %1067 = vmatprep.subr.bf16.mxu0 0
      %1068 = vmatpush1.bf16.msra.mxu0 0
      %1069 = vmatprep.subr.bf16.mxu0 0
      %1070 = vmatpush1.bf16.msra.mxu0 0
      %1071 = vmatprep.subr.bf16.mxu0 0
      %1072 = vmatpush1.bf16.msra.mxu0 0
      %1073 = vmatprep.subr.bf16.mxu0 0
      %1074 = vmatpush1.bf16.msra.mxu0 0
      %1075 = vmatprep.subr.bf16.mxu0 0
      %1076 = vmatpush1.bf16.msra.mxu0 0
      %1077 = vmatprep.subr.bf16.mxu0 0
      %1078 = vmatpush1.bf16.msra.mxu0 0
      %1079 = vmatprep.subr.bf16.mxu0 0
      %1080 = vmatpush1.bf16.msra.mxu0 0
      %1081 = vmatprep.subr.bf16.mxu0 0
      %1082 = vmatpush1.bf16.msra.mxu0 0
      %1083 = vmatprep.subr.bf16.mxu0 0
      %1084 = vmatpush1.bf16.msra.mxu0 0
      %1085 = vmatprep.subr.bf16.mxu0 0
      %1086 = vmatpush1.bf16.msra.mxu0 0
      %1087 = vmatprep.mubr.bf16.mxu0 0
      %1088 = vmatmul.mubr.bf16.gmra.mrb[0].mxu0 %v681
      %v1089 = vpop.f32.mrb[0].mxu0
      %v1090 = vadd.f32 %v1041, %v1089
      %v1091 = vpop.f32.mrb[0].mxu0
      %v1092 = vpop.f32.mrb[0].mxu0
      %v1093 = vpop.f32.mrb[0].mxu0
      %1094 = vdwg.mxu0
      %s1095 = scalar_lea.vmem %s8, 16
      %v1096 = vld [vmem:[%s1095] sm:$0xf]
      %v1097 = vld [vmem:[%s1095 + $0x4] sm:$0xf]
      %v1098 = vld [vmem:[%s1095 + $0x8] sm:$0xf]
      %v1099 = vld [vmem:[%s1095 + $0xc] sm:$0xf]
      %s1100 = scalar_lea.vmem %s9, 1
      %v1101 = vld [vmem:[%s1100] sm:$0x1]
      %v1103 = vlaneseq
      %v1104 = vshrl.u32 %v1103, 7
      %v1105 = vsub.s32 0, %v1104
      %v1106 = vrot.slane %v1101, %v1105
      %v1112 = vunpack.c.l.b16 %v1096
      %v1113 = vunpack.c.l.b16 %v1097
      %v1114 = vunpack.c.l.b16 %v1098
      %v1115 = vunpack.c.l.b16 %v1099
      %v1116 = vpack.c.b16 %v1113, %v1112
      %v1117 = vpack.c.b16 %v1115, %v1114
      %1120 = vmatprep.subr.bf16.mxu0 0
      %1121 = vmatpush1.bf16.msra.mxu0 %v1116
      %1122 = vmatprep.subr.bf16.mxu0 0
      %1123 = vmatpush1.bf16.msra.mxu0 %v1117
      %1124 = vmatprep.subr.bf16.mxu0 0
      %1125 = vmatpush1.bf16.msra.mxu0 0
      %1126 = vmatprep.subr.bf16.mxu0 0
      %1127 = vmatpush1.bf16.msra.mxu0 0
      %1128 = vmatprep.subr.bf16.mxu0 0
      %1129 = vmatpush1.bf16.msra.mxu0 0
      %1130 = vmatprep.subr.bf16.mxu0 0
      %1131 = vmatpush1.bf16.msra.mxu0 0
      %1132 = vmatprep.subr.bf16.mxu0 0
      %1133 = vmatpush1.bf16.msra.mxu0 0
      %1134 = vmatprep.subr.bf16.mxu0 0
      %1135 = vmatpush1.bf16.msra.mxu0 0
      %1136 = vmatprep.subr.bf16.mxu0 0
      %1137 = vmatpush1.bf16.msra.mxu0 0
      %1138 = vmatprep.subr.bf16.mxu0 0
      %1139 = vmatpush1.bf16.msra.mxu0 0
      %1140 = vmatprep.subr.bf16.mxu0 0
      %1141 = vmatpush1.bf16.msra.mxu0 0
      %1142 = vmatprep.subr.bf16.mxu0 0
      %1143 = vmatpush1.bf16.msra.mxu0 0
      %1144 = vmatprep.subr.bf16.mxu0 0
      %1145 = vmatpush1.bf16.msra.mxu0 0
      %1146 = vmatprep.subr.bf16.mxu0 0
      %1147 = vmatpush1.bf16.msra.mxu0 0
      %1148 = vmatprep.subr.bf16.mxu0 0
      %1149 = vmatpush1.bf16.msra.mxu0 0
      %1150 = vmatprep.subr.bf16.mxu0 0
      %1151 = vmatpush1.bf16.msra.mxu0 0
      %1152 = vmatprep.mubr.bf16.mxu0 0
      %1153 = vmatmul.mubr.bf16.gmra.mrb[0].mxu0 %v681
      %v1154 = vpop.f32.mrb[0].mxu0
      %v1155 = vadd.f32 %v1106, %v1154
      %v1156 = vpop.f32.mrb[0].mxu0
      %v1157 = vpop.f32.mrb[0].mxu0
      %v1158 = vpop.f32.mrb[0].mxu0
      %1159 = vdwg.mxu0
      %v1160 = vpack.c.bf16 %v1025, %v1025
      %v1161 = vpack.c.bf16 %v1090, %v1090
      %v1163 = vsel %vm851, %v1160, 0
      %v1166 = vsel %vm851, %v1161, 0
      %1168 = vmatprep.subr.bf16.mxu0 0
      %1169 = vmatpush1.bf16.xpose.msra.mxu0 %v1166
      %1170 = vmatprep.subr.bf16.mxu0 0
      %1171 = vmatpush1.bf16.xpose.msra.mxu0 0
      %1172 = vmatprep.subr.bf16.mxu0 0
      %1173 = vmatpush1.bf16.xpose.msra.mxu0 0
      %1174 = vmatprep.subr.bf16.mxu0 0
      %1175 = vmatpush1.bf16.xpose.msra.mxu0 0
      %1176 = vmatprep.subr.bf16.mxu0 0
      %1177 = vmatpush1.bf16.xpose.msra.mxu0 0
      %1178 = vmatprep.subr.bf16.mxu0 0
      %1179 = vmatpush1.bf16.xpose.msra.mxu0 0
      %1180 = vmatprep.subr.bf16.mxu0 0
      %1181 = vmatpush1.bf16.xpose.msra.mxu0 0
      %1182 = vmatprep.subr.bf16.mxu0 0
      %1183 = vmatpush1.bf16.xpose.msra.mxu0 0
      %1184 = vmatprep.subr.bf16.mxu0 0
      %1185 = vmatpush1.bf16.xpose.msra.mxu0 0
      %1186 = vmatprep.subr.bf16.mxu0 0
      %1187 = vmatpush1.bf16.xpose.msra.mxu0 0
      %1188 = vmatprep.subr.bf16.mxu0 0
      %1189 = vmatpush1.bf16.xpose.msra.mxu0 0
      %1190 = vmatprep.subr.bf16.mxu0 0
      %1191 = vmatpush1.bf16.xpose.msra.mxu0 0
      %1192 = vmatprep.subr.bf16.mxu0 0
      %1193 = vmatpush1.bf16.xpose.msra.mxu0 0
      %1194 = vmatprep.subr.bf16.mxu0 0
      %1195 = vmatpush1.bf16.xpose.msra.mxu0 0
      %1196 = vmatprep.subr.bf16.mxu0 0
      %1197 = vmatpush1.bf16.xpose.msra.mxu0 0
      %1198 = vmatprep.subr.bf16.mxu0 0
      %1199 = vmatpush1.bf16.xpose.msra.mxu0 0
      %1200 = vmatprep.mubr.bf16.mxu0 0
      %1201 = vmatmul.mubr.bf16.gmra.mrb[0].mxu0 %v1163
      %v1202 = vpop.f32.mrb[0].mxu0
      %v1203 = vadd.f32 0.0, %v1202
      %v1204 = vpop.f32.mrb[0].mxu0
      %v1205 = vpop.f32.mrb[0].mxu0
      %v1206 = vpop.f32.mrb[0].mxu0
      %1207 = vdwg.mxu0
      %v1208 = vmul.f32 %v1203, 0.35355338
      %s1209 = scalar_lea.vmem %s614, 4
      %v1210 = vld [vmem:[%s1209] sm:$0xf]
      %v1211 = vadd.f32 %v1208, %v1210
      %v1212 = vsel %vm901, %v1211, -inf
      %1213 = vmax.xlane.f32.xlu0 %v1212
      %v1214 = vpop.xlane.xlu0 %1213
      %v1215 = vsub.f32 %v1211, %v1214
      %v1216 = vmul.f32 %v1215, 1.442695
      %v1217 = vpow.pop %v1216
      %v1218 = vsel %vm901, %v1217, 0.0
      %1219 = vadd.xlane.f32.xlu0 %v1218
      %v1220 = vpop.xlane.xlu0 %1219
      %v1221 = vrcp.pop %v1220
      %v1222 = vmul.f32 %v1217, %v1221
      %v1223 = vpack.c.bf16 %v1222, %v1222
      %v1224 = vpack.c.bf16 %v1155, %v1155
      %v1226 = vsel %vm915, %v1223, 0
      %v1229 = vsel %vm919, %v1224, 0
      %1231 = vmatprep.subr.bf16.mxu0 0
      %1232 = vmatpush1.bf16.msra.mxu0 %v1229
      %1233 = vmatprep.subr.bf16.mxu0 0
      %1234 = vmatpush1.bf16.msra.mxu0 0
      %1235 = vmatprep.subr.bf16.mxu0 0
      %1236 = vmatpush1.bf16.msra.mxu0 0
      %1237 = vmatprep.subr.bf16.mxu0 0
      %1238 = vmatpush1.bf16.msra.mxu0 0
      %1239 = vmatprep.subr.bf16.mxu0 0
      %1240 = vmatpush1.bf16.msra.mxu0 0
      %1241 = vmatprep.subr.bf16.mxu0 0
      %1242 = vmatpush1.bf16.msra.mxu0 0
      %1243 = vmatprep.subr.bf16.mxu0 0
      %1244 = vmatpush1.bf16.msra.mxu0 0
      %1245 = vmatprep.subr.bf16.mxu0 0
      %1246 = vmatpush1.bf16.msra.mxu0 0
      %1247 = vmatprep.subr.bf16.mxu0 0
      %1248 = vmatpush1.bf16.msra.mxu0 0
      %1249 = vmatprep.subr.bf16.mxu0 0
      %1250 = vmatpush1.bf16.msra.mxu0 0
      %1251 = vmatprep.subr.bf16.mxu0 0
      %1252 = vmatpush1.bf16.msra.mxu0 0
      %1253 = vmatprep.subr.bf16.mxu0 0
      %1254 = vmatpush1.bf16.msra.mxu0 0
      %1255 = vmatprep.subr.bf16.mxu0 0
      %1256 = vmatpush1.bf16.msra.mxu0 0
      %1257 = vmatprep.subr.bf16.mxu0 0
      %1258 = vmatpush1.bf16.msra.mxu0 0
      %1259 = vmatprep.subr.bf16.mxu0 0
      %1260 = vmatpush1.bf16.msra.mxu0 0
      %1261 = vmatprep.subr.bf16.mxu0 0
      %1262 = vmatpush1.bf16.msra.mxu0 0
      %1263 = vmatprep.mubr.bf16.mxu0 0
      %1264 = vmatmul.mubr.bf16.gmra.mrb[0].mxu0 %v1226
      %v1265 = vpop.f32.mrb[0].mxu0
      %v1266 = vadd.f32 0.0, %v1265
      %v1267 = vpop.f32.mrb[0].mxu0
      %v1268 = vpop.f32.mrb[0].mxu0
      %v1269 = vpop.f32.mrb[0].mxu0
      %1270 = vdwg.mxu0
      %v1271 = vpack.c.bf16 %v1266, %v1266
      %s1272 = scalar_lea.vmem %s10, 4
      %v1273 = vld [vmem:[%s1272] sm:$0xf]
      %v1275 = vsel %vm851, %v1271, 0
      %vm1277 = vcmask 1043456
      %v1279 = vsel %vm1277, %v1273, 0
      %1281 = vmatprep.subr.bf16.mxu0 0
      %1282 = vmatpush1.bf16.msra.mxu0 %v1279
      %1283 = vmatprep.subr.bf16.mxu0 0
      %1284 = vmatpush1.bf16.msra.mxu0 0
      %1285 = vmatprep.subr.bf16.mxu0 0
      %1286 = vmatpush1.bf16.msra.mxu0 0
      %1287 = vmatprep.subr.bf16.mxu0 0
      %1288 = vmatpush1.bf16.msra.mxu0 0
      %1289 = vmatprep.subr.bf16.mxu0 0
      %1290 = vmatpush1.bf16.msra.mxu0 0
      %1291 = vmatprep.subr.bf16.mxu0 0
      %1292 = vmatpush1.bf16.msra.mxu0 0
      %1293 = vmatprep.subr.bf16.mxu0 0
      %1294 = vmatpush1.bf16.msra.mxu0 0
      %1295 = vmatprep.subr.bf16.mxu0 0
      %1296 = vmatpush1.bf16.msra.mxu0 0
      %1297 = vmatprep.subr.bf16.mxu0 0
      %1298 = vmatpush1.bf16.msra.mxu0 0
      %1299 = vmatprep.subr.bf16.mxu0 0
      %1300 = vmatpush1.bf16.msra.mxu0 0
      %1301 = vmatprep.subr.bf16.mxu0 0
      %1302 = vmatpush1.bf16.msra.mxu0 0
      %1303 = vmatprep.subr.bf16.mxu0 0
      %1304 = vmatpush1.bf16.msra.mxu0 0
      %1305 = vmatprep.subr.bf16.mxu0 0
      %1306 = vmatpush1.bf16.msra.mxu0 0
      %1307 = vmatprep.subr.bf16.mxu0 0
      %1308 = vmatpush1.bf16.msra.mxu0 0
      %1309 = vmatprep.subr.bf16.mxu0 0
      %1310 = vmatpush1.bf16.msra.mxu0 0
      %1311 = vmatprep.subr.bf16.mxu0 0
      %1312 = vmatpush1.bf16.msra.mxu0 0
      %1313 = vmatprep.mubr.bf16.mxu0 0
      %1314 = vmatmul.mubr.bf16.gmra.mrb[0].mxu0 %v1275
      %v1315 = vpop.f32.mrb[0].mxu0
      %v1316 = vadd.f32 0.0, %v1315
      %v1317 = vpop.f32.mrb[0].mxu0
      %v1318 = vpop.f32.mrb[0].mxu0
      %v1319 = vpop.f32.mrb[0].mxu0
      %1320 = vdwg.mxu0
      %v1322 = vsel %vm851, %v963, 0
      %v1325 = vsel %vm1277, %v964, 0
      %1327 = vmatprep.subr.bf16.mxu0 0
      %1328 = vmatpush1.bf16.msra.mxu0 %v1325
      %1329 = vmatprep.subr.bf16.mxu0 0
      %1330 = vmatpush1.bf16.msra.mxu0 0
      %1331 = vmatprep.subr.bf16.mxu0 0
      %1332 = vmatpush1.bf16.msra.mxu0 0
      %1333 = vmatprep.subr.bf16.mxu0 0
      %1334 = vmatpush1.bf16.msra.mxu0 0
      %1335 = vmatprep.subr.bf16.mxu0 0
      %1336 = vmatpush1.bf16.msra.mxu0 0
      %1337 = vmatprep.subr.bf16.mxu0 0
      %1338 = vmatpush1.bf16.msra.mxu0 0
      %1339 = vmatprep.subr.bf16.mxu0 0
      %1340 = vmatpush1.bf16.msra.mxu0 0
      %1341 = vmatprep.subr.bf16.mxu0 0
      %1342 = vmatpush1.bf16.msra.mxu0 0
      %1343 = vmatprep.subr.bf16.mxu0 0
      %1344 = vmatpush1.bf16.msra.mxu0 0
      %1345 = vmatprep.subr.bf16.mxu0 0
      %1346 = vmatpush1.bf16.msra.mxu0 0
      %1347 = vmatprep.subr.bf16.mxu0 0
      %1348 = vmatpush1.bf16.msra.mxu0 0
      %1349 = vmatprep.subr.bf16.mxu0 0
      %1350 = vmatpush1.bf16.msra.mxu0 0
      %1351 = vmatprep.subr.bf16.mxu0 0
      %1352 = vmatpush1.bf16.msra.mxu0 0
      %1353 = vmatprep.subr.bf16.mxu0 0
      %1354 = vmatpush1.bf16.msra.mxu0 0
      %1355 = vmatprep.subr.bf16.mxu0 0
      %1356 = vmatpush1.bf16.msra.mxu0 0
      %1357 = vmatprep.subr.bf16.mxu0 0
      %1358 = vmatpush1.bf16.msra.mxu0 0
      %1359 = vmatprep.mubr.bf16.mxu0 0
      %1360 = vmatmul.mubr.bf16.gmra.mrb[0].mxu0 %v1322
      %v1361 = vpop.f32.mrb[0].mxu0
      %v1362 = vadd.f32 %v1316, %v1361
      %v1363 = vpop.f32.mrb[0].mxu0
      %v1364 = vpop.f32.mrb[0].mxu0
      %v1365 = vpop.f32.mrb[0].mxu0
      %1366 = vdwg.mxu0
      %s1367 = scalar_lea.vmem %s4, 32
      %v1368 = vld [vmem:[%s1367] sm:$0xf]
      %v1369 = vld [vmem:[%s1367 + $0x4] sm:$0xf]
      %v1370 = vld [vmem:[%s1367 + $0x8] sm:$0xf]
      %v1371 = vld [vmem:[%s1367 + $0xc] sm:$0xf]
      %s1372 = scalar_lea.vmem %s5, 2
      %v1373 = vld [vmem:[%s1372] sm:$0x1]
      %v1375 = vlaneseq
      %v1376 = vshrl.u32 %v1375, 7
      %v1377 = vsub.s32 0, %v1376
      %v1378 = vrot.slane %v1373, %v1377
      %v1384 = vunpack.c.l.b16 %v1368
      %v1385 = vunpack.c.l.b16 %v1369
      %v1386 = vunpack.c.l.b16 %v1370
      %v1387 = vunpack.c.l.b16 %v1371
      %v1388 = vpack.c.b16 %v1385, %v1384
      %v1389 = vpack.c.b16 %v1387, %v1386
      %1392 = vmatprep.subr.bf16.mxu0 0
      %1393 = vmatpush1.bf16.msra.mxu0 %v1388
      %1394 = vmatprep.subr.bf16.mxu0 0
      %1395 = vmatpush1.bf16.msra.mxu0 %v1389
      %1396 = vmatprep.subr.bf16.mxu0 0
      %1397 = vmatpush1.bf16.msra.mxu0 0
      %1398 = vmatprep.subr.bf16.mxu0 0
      %1399 = vmatpush1.bf16.msra.mxu0 0
      %1400 = vmatprep.subr.bf16.mxu0 0
      %1401 = vmatpush1.bf16.msra.mxu0 0
      %1402 = vmatprep.subr.bf16.mxu0 0
      %1403 = vmatpush1.bf16.msra.mxu0 0
      %1404 = vmatprep.subr.bf16.mxu0 0
      %1405 = vmatpush1.bf16.msra.mxu0 0
      %1406 = vmatprep.subr.bf16.mxu0 0
      %1407 = vmatpush1.bf16.msra.mxu0 0
      %1408 = vmatprep.subr.bf16.mxu0 0
      %1409 = vmatpush1.bf16.msra.mxu0 0
      %1410 = vmatprep.subr.bf16.mxu0 0
      %1411 = vmatpush1.bf16.msra.mxu0 0
      %1412 = vmatprep.subr.bf16.mxu0 0
      %1413 = vmatpush1.bf16.msra.mxu0 0
      %1414 = vmatprep.subr.bf16.mxu0 0
      %1415 = vmatpush1.bf16.msra.mxu0 0
      %1416 = vmatprep.subr.bf16.mxu0 0
      %1417 = vmatpush1.bf16.msra.mxu0 0
      %1418 = vmatprep.subr.bf16.mxu0 0
      %1419 = vmatpush1.bf16.msra.mxu0 0
      %1420 = vmatprep.subr.bf16.mxu0 0
      %1421 = vmatpush1.bf16.msra.mxu0 0
      %1422 = vmatprep.subr.bf16.mxu0 0
      %1423 = vmatpush1.bf16.msra.mxu0 0
      %1424 = vmatprep.mubr.bf16.mxu0 0
      %1425 = vmatmul.mubr.bf16.gmra.mrb[0].mxu0 %v681
      %v1426 = vpop.f32.mrb[0].mxu0
      %v1427 = vadd.f32 %v1378, %v1426
      %v1428 = vpop.f32.mrb[0].mxu0
      %v1429 = vpop.f32.mrb[0].mxu0
      %v1430 = vpop.f32.mrb[0].mxu0
      %1431 = vdwg.mxu0
      %s1432 = scalar_lea.vmem %s6, 32
      %v1433 = vld [vmem:[%s1432] sm:$0xf]
      %v1434 = vld [vmem:[%s1432 + $0x4] sm:$0xf]
      %v1435 = vld [vmem:[%s1432 + $0x8] sm:$0xf]
      %v1436 = vld [vmem:[%s1432 + $0xc] sm:$0xf]
      %s1437 = scalar_lea.vmem %s7, 2
      %v1438 = vld [vmem:[%s1437] sm:$0x1]
      %v1440 = vlaneseq
      %v1441 = vshrl.u32 %v1440, 7
      %v1442 = vsub.s32 0, %v1441
      %v1443 = vrot.slane %v1438, %v1442
      %v1449 = vunpack.c.l.b16 %v1433
      %v1450 = vunpack.c.l.b16 %v1434
      %v1451 = vunpack.c.l.b16 %v1435
      %v1452 = vunpack.c.l.b16 %v1436
      %v1453 = vpack.c.b16 %v1450, %v1449
      %v1454 = vpack.c.b16 %v1452, %v1451
      %1457 = vmatprep.subr.bf16.mxu0 0
      %1458 = vmatpush1.bf16.msra.mxu0 %v1453
      %1459 = vmatprep.subr.bf16.mxu0 0
      %1460 = vmatpush1.bf16.msra.mxu0 %v1454
      %1461 = vmatprep.subr.bf16.mxu0 0
      %1462 = vmatpush1.bf16.msra.mxu0 0
      %1463 = vmatprep.subr.bf16.mxu0 0
      %1464 = vmatpush1.bf16.msra.mxu0 0
      %1465 = vmatprep.subr.bf16.mxu0 0
      %1466 = vmatpush1.bf16.msra.mxu0 0
      %1467 = vmatprep.subr.bf16.mxu0 0
      %1468 = vmatpush1.bf16.msra.mxu0 0
      %1469 = vmatprep.subr.bf16.mxu0 0
      %1470 = vmatpush1.bf16.msra.mxu0 0
      %1471 = vmatprep.subr.bf16.mxu0 0
      %1472 = vmatpush1.bf16.msra.mxu0 0
      %1473 = vmatprep.subr.bf16.mxu0 0
      %1474 = vmatpush1.bf16.msra.mxu0 0
      %1475 = vmatprep.subr.bf16.mxu0 0
      %1476 = vmatpush1.bf16.msra.mxu0 0
      %1477 = vmatprep.subr.bf16.mxu0 0
      %1478 = vmatpush1.bf16.msra.mxu0 0
      %1479 = vmatprep.subr.bf16.mxu0 0
      %1480 = vmatpush1.bf16.msra.mxu0 0
      %1481 = vmatprep.subr.bf16.mxu0 0
      %1482 = vmatpush1.bf16.msra.mxu0 0
      %1483 = vmatprep.subr.bf16.mxu0 0
      %1484 = vmatpush1.bf16.msra.mxu0 0
      %1485 = vmatprep.subr.bf16.mxu0 0
      %1486 = vmatpush1.bf16.msra.mxu0 0
      %1487 = vmatprep.subr.bf16.mxu0 0
      %1488 = vmatpush1.bf16.msra.mxu0 0
      %1489 = vmatprep.mubr.bf16.mxu0 0
      %1490 = vmatmul.mubr.bf16.gmra.mrb[0].mxu0 %v681
      %v1491 = vpop.f32.mrb[0].mxu0
      %v1492 = vadd.f32 %v1443, %v1491
      %v1493 = vpop.f32.mrb[0].mxu0
      %v1494 = vpop.f32.mrb[0].mxu0
      %v1495 = vpop.f32.mrb[0].mxu0
      %1496 = vdwg.mxu0
      %s1497 = scalar_lea.vmem %s8, 32
      %v1498 = vld [vmem:[%s1497] sm:$0xf]
      %v1499 = vld [vmem:[%s1497 + $0x4] sm:$0xf]
      %v1500 = vld [vmem:[%s1497 + $0x8] sm:$0xf]
      %v1501 = vld [vmem:[%s1497 + $0xc] sm:$0xf]
      %s1502 = scalar_lea.vmem %s9, 2
      %v1503 = vld [vmem:[%s1502] sm:$0x1]
      %v1505 = vlaneseq
      %v1506 = vshrl.u32 %v1505, 7
      %v1507 = vsub.s32 0, %v1506
      %v1508 = vrot.slane %v1503, %v1507
      %v1514 = vunpack.c.l.b16 %v1498
      %v1515 = vunpack.c.l.b16 %v1499
      %v1516 = vunpack.c.l.b16 %v1500
      %v1517 = vunpack.c.l.b16 %v1501
      %v1518 = vpack.c.b16 %v1515, %v1514
      %v1519 = vpack.c.b16 %v1517, %v1516
      %1522 = vmatprep.subr.bf16.mxu0 0
      %1523 = vmatpush1.bf16.msra.mxu0 %v1518
      %1524 = vmatprep.subr.bf16.mxu0 0
      %1525 = vmatpush1.bf16.msra.mxu0 %v1519
      %1526 = vmatprep.subr.bf16.mxu0 0
      %1527 = vmatpush1.bf16.msra.mxu0 0
      %1528 = vmatprep.subr.bf16.mxu0 0
      %1529 = vmatpush1.bf16.msra.mxu0 0
      %1530 = vmatprep.subr.bf16.mxu0 0
      %1531 = vmatpush1.bf16.msra.mxu0 0
      %1532 = vmatprep.subr.bf16.mxu0 0
      %1533 = vmatpush1.bf16.msra.mxu0 0
      %1534 = vmatprep.subr.bf16.mxu0 0
      %1535 = vmatpush1.bf16.msra.mxu0 0
      %1536 = vmatprep.subr.bf16.mxu0 0
      %1537 = vmatpush1.bf16.msra.mxu0 0
      %1538 = vmatprep.subr.bf16.mxu0 0
      %1539 = vmatpush1.bf16.msra.mxu0 0
      %1540 = vmatprep.subr.bf16.mxu0 0
      %1541 = vmatpush1.bf16.msra.mxu0 0
      %1542 = vmatprep.subr.bf16.mxu0 0
      %1543 = vmatpush1.bf16.msra.mxu0 0
      %1544 = vmatprep.subr.bf16.mxu0 0
      %1545 = vmatpush1.bf16.msra.mxu0 0
      %1546 = vmatprep.subr.bf16.mxu0 0
      %1547 = vmatpush1.bf16.msra.mxu0 0
      %1548 = vmatprep.subr.bf16.mxu0 0
      %1549 = vmatpush1.bf16.msra.mxu0 0
      %1550 = vmatprep.subr.bf16.mxu0 0
      %1551 = vmatpush1.bf16.msra.mxu0 0
      %1552 = vmatprep.subr.bf16.mxu0 0
      %1553 = vmatpush1.bf16.msra.mxu0 0
      %1554 = vmatprep.mubr.bf16.mxu0 0
      %1555 = vmatmul.mubr.bf16.gmra.mrb[0].mxu0 %v681
      %v1556 = vpop.f32.mrb[0].mxu0
      %v1557 = vadd.f32 %v1508, %v1556
      %v1558 = vpop.f32.mrb[0].mxu0
      %v1559 = vpop.f32.mrb[0].mxu0
      %v1560 = vpop.f32.mrb[0].mxu0
      %1561 = vdwg.mxu0
      %v1562 = vpack.c.bf16 %v1427, %v1427
      %v1563 = vpack.c.bf16 %v1492, %v1492
      %v1565 = vsel %vm851, %v1562, 0
      %v1568 = vsel %vm851, %v1563, 0
      %1570 = vmatprep.subr.bf16.mxu0 0
      %1571 = vmatpush1.bf16.xpose.msra.mxu0 %v1568
      %1572 = vmatprep.subr.bf16.mxu0 0
      %1573 = vmatpush1.bf16.xpose.msra.mxu0 0
      %1574 = vmatprep.subr.bf16.mxu0 0
      %1575 = vmatpush1.bf16.xpose.msra.mxu0 0
      %1576 = vmatprep.subr.bf16.mxu0 0
      %1577 = vmatpush1.bf16.xpose.msra.mxu0 0
      %1578 = vmatprep.subr.bf16.mxu0 0
      %1579 = vmatpush1.bf16.xpose.msra.mxu0 0
      %1580 = vmatprep.subr.bf16.mxu0 0
      %1581 = vmatpush1.bf16.xpose.msra.mxu0 0
      %1582 = vmatprep.subr.bf16.mxu0 0
      %1583 = vmatpush1.bf16.xpose.msra.mxu0 0
      %1584 = vmatprep.subr.bf16.mxu0 0
      %1585 = vmatpush1.bf16.xpose.msra.mxu0 0
      %1586 = vmatprep.subr.bf16.mxu0 0
      %1587 = vmatpush1.bf16.xpose.msra.mxu0 0
      %1588 = vmatprep.subr.bf16.mxu0 0
      %1589 = vmatpush1.bf16.xpose.msra.mxu0 0
      %1590 = vmatprep.subr.bf16.mxu0 0
      %1591 = vmatpush1.bf16.xpose.msra.mxu0 0
      %1592 = vmatprep.subr.bf16.mxu0 0
      %1593 = vmatpush1.bf16.xpose.msra.mxu0 0
      %1594 = vmatprep.subr.bf16.mxu0 0
      %1595 = vmatpush1.bf16.xpose.msra.mxu0 0
      %1596 = vmatprep.subr.bf16.mxu0 0
      %1597 = vmatpush1.bf16.xpose.msra.mxu0 0
      %1598 = vmatprep.subr.bf16.mxu0 0
      %1599 = vmatpush1.bf16.xpose.msra.mxu0 0
      %1600 = vmatprep.subr.bf16.mxu0 0
      %1601 = vmatpush1.bf16.xpose.msra.mxu0 0
      %1602 = vmatprep.mubr.bf16.mxu0 0
      %1603 = vmatmul.mubr.bf16.gmra.mrb[0].mxu0 %v1565
      %v1604 = vpop.f32.mrb[0].mxu0
      %v1605 = vadd.f32 0.0, %v1604
      %v1606 = vpop.f32.mrb[0].mxu0
      %v1607 = vpop.f32.mrb[0].mxu0
      %v1608 = vpop.f32.mrb[0].mxu0
      %1609 = vdwg.mxu0
      %v1610 = vmul.f32 %v1605, 0.35355338
      %s1611 = scalar_lea.vmem %s614, 8
      %v1612 = vld [vmem:[%s1611] sm:$0xf]
      %v1613 = vadd.f32 %v1610, %v1612
      %v1614 = vsel %vm901, %v1613, -inf
      %1615 = vmax.xlane.f32.xlu0 %v1614
      %v1616 = vpop.xlane.xlu0 %1615
      %v1617 = vsub.f32 %v1613, %v1616
      %v1618 = vmul.f32 %v1617, 1.442695
      %v1619 = vpow.pop %v1618
      %v1620 = vsel %vm901, %v1619, 0.0
      %1621 = vadd.xlane.f32.xlu0 %v1620
      %v1622 = vpop.xlane.xlu0 %1621
      %v1623 = vrcp.pop %v1622
      %v1624 = vmul.f32 %v1619, %v1623
      %v1625 = vpack.c.bf16 %v1624, %v1624
      %v1626 = vpack.c.bf16 %v1557, %v1557
      %v1628 = vsel %vm915, %v1625, 0
      %v1631 = vsel %vm919, %v1626, 0
      %1633 = vmatprep.subr.bf16.mxu0 0
      %1634 = vmatpush1.bf16.msra.mxu0 %v1631
      %1635 = vmatprep.subr.bf16.mxu0 0
      %1636 = vmatpush1.bf16.msra.mxu0 0
      %1637 = vmatprep.subr.bf16.mxu0 0
      %1638 = vmatpush1.bf16.msra.mxu0 0
      %1639 = vmatprep.subr.bf16.mxu0 0
      %1640 = vmatpush1.bf16.msra.mxu0 0
      %1641 = vmatprep.subr.bf16.mxu0 0
      %1642 = vmatpush1.bf16.msra.mxu0 0
      %1643 = vmatprep.subr.bf16.mxu0 0
      %1644 = vmatpush1.bf16.msra.mxu0 0
      %1645 = vmatprep.subr.bf16.mxu0 0
      %1646 = vmatpush1.bf16.msra.mxu0 0
      %1647 = vmatprep.subr.bf16.mxu0 0
      %1648 = vmatpush1.bf16.msra.mxu0 0
      %1649 = vmatprep.subr.bf16.mxu0 0
      %1650 = vmatpush1.bf16.msra.mxu0 0
      %1651 = vmatprep.subr.bf16.mxu0 0
      %1652 = vmatpush1.bf16.msra.mxu0 0
      %1653 = vmatprep.subr.bf16.mxu0 0
      %1654 = vmatpush1.bf16.msra.mxu0 0
      %1655 = vmatprep.subr.bf16.mxu0 0
      %1656 = vmatpush1.bf16.msra.mxu0 0
      %1657 = vmatprep.subr.bf16.mxu0 0
      %1658 = vmatpush1.bf16.msra.mxu0 0
      %1659 = vmatprep.subr.bf16.mxu0 0
      %1660 = vmatpush1.bf16.msra.mxu0 0
      %1661 = vmatprep.subr.bf16.mxu0 0
      %1662 = vmatpush1.bf16.msra.mxu0 0
      %1663 = vmatprep.subr.bf16.mxu0 0
      %1664 = vmatpush1.bf16.msra.mxu0 0
      %1665 = vmatprep.mubr.bf16.mxu0 0
      %1666 = vmatmul.mubr.bf16.gmra.mrb[0].mxu0 %v1628
      %v1667 = vpop.f32.mrb[0].mxu0
      %v1668 = vadd.f32 0.0, %v1667
      %v1669 = vpop.f32.mrb[0].mxu0
      %v1670 = vpop.f32.mrb[0].mxu0
      %v1671 = vpop.f32.mrb[0].mxu0
      %1672 = vdwg.mxu0
      %v1673 = vpack.c.bf16 %v1668, %v1668
      %s1674 = scalar_lea.vmem %s10, 8
      %v1675 = vld [vmem:[%s1674] sm:$0xf]
      %v1677 = vsel %vm851, %v1673, 0
      %v1680 = vsel %vm1277, %v1675, 0
      %1682 = vmatprep.subr.bf16.mxu0 0
      %1683 = vmatpush1.bf16.msra.mxu0 %v1680
      %1684 = vmatprep.subr.bf16.mxu0 0
      %1685 = vmatpush1.bf16.msra.mxu0 0
      %1686 = vmatprep.subr.bf16.mxu0 0
      %1687 = vmatpush1.bf16.msra.mxu0 0
      %1688 = vmatprep.subr.bf16.mxu0 0
      %1689 = vmatpush1.bf16.msra.mxu0 0
      %1690 = vmatprep.subr.bf16.mxu0 0
      %1691 = vmatpush1.bf16.msra.mxu0 0
      %1692 = vmatprep.subr.bf16.mxu0 0
      %1693 = vmatpush1.bf16.msra.mxu0 0
      %1694 = vmatprep.subr.bf16.mxu0 0
      %1695 = vmatpush1.bf16.msra.mxu0 0
      %1696 = vmatprep.subr.bf16.mxu0 0
      %1697 = vmatpush1.bf16.msra.mxu0 0
      %1698 = vmatprep.subr.bf16.mxu0 0
      %1699 = vmatpush1.bf16.msra.mxu0 0
      %1700 = vmatprep.subr.bf16.mxu0 0
      %1701 = vmatpush1.bf16.msra.mxu0 0
      %1702 = vmatprep.subr.bf16.mxu0 0
      %1703 = vmatpush1.bf16.msra.mxu0 0
      %1704 = vmatprep.subr.bf16.mxu0 0
      %1705 = vmatpush1.bf16.msra.mxu0 0
      %1706 = vmatprep.subr.bf16.mxu0 0
      %1707 = vmatpush1.bf16.msra.mxu0 0
      %1708 = vmatprep.subr.bf16.mxu0 0
      %1709 = vmatpush1.bf16.msra.mxu0 0
      %1710 = vmatprep.subr.bf16.mxu0 0
      %1711 = vmatpush1.bf16.msra.mxu0 0
      %1712 = vmatprep.subr.bf16.mxu0 0
      %1713 = vmatpush1.bf16.msra.mxu0 0
      %1714 = vmatprep.mubr.bf16.mxu0 0
      %1715 = vmatmul.mubr.bf16.gmra.mrb[0].mxu0 %v1677
      %v1716 = vpop.f32.mrb[0].mxu0
      %v1717 = vadd.f32 0.0, %v1716
      %v1718 = vpop.f32.mrb[0].mxu0
      %v1719 = vpop.f32.mrb[0].mxu0
      %v1720 = vpop.f32.mrb[0].mxu0
      %1721 = vdwg.mxu0
      %v1722 = vadd.f32 %v1362, %v1717
      %s1723 = scalar_lea.vmem %s4, 48
      %v1724 = vld [vmem:[%s1723] sm:$0xf]
      %v1725 = vld [vmem:[%s1723 + $0x4] sm:$0xf]
      %v1726 = vld [vmem:[%s1723 + $0x8] sm:$0xf]
      %v1727 = vld [vmem:[%s1723 + $0xc] sm:$0xf]
      %s1728 = scalar_lea.vmem %s5, 3
      %v1729 = vld [vmem:[%s1728] sm:$0x1]
      %v1731 = vlaneseq
      %v1732 = vshrl.u32 %v1731, 7
      %v1733 = vsub.s32 0, %v1732
      %v1734 = vrot.slane %v1729, %v1733
      %v1740 = vunpack.c.l.b16 %v1724
      %v1741 = vunpack.c.l.b16 %v1725
      %v1742 = vunpack.c.l.b16 %v1726
      %v1743 = vunpack.c.l.b16 %v1727
      %v1744 = vpack.c.b16 %v1741, %v1740
      %v1745 = vpack.c.b16 %v1743, %v1742
      %1748 = vmatprep.subr.bf16.mxu0 0
      %1749 = vmatpush1.bf16.msra.mxu0 %v1744
      %1750 = vmatprep.subr.bf16.mxu0 0
      %1751 = vmatpush1.bf16.msra.mxu0 %v1745
      %1752 = vmatprep.subr.bf16.mxu0 0
      %1753 = vmatpush1.bf16.msra.mxu0 0
      %1754 = vmatprep.subr.bf16.mxu0 0
      %1755 = vmatpush1.bf16.msra.mxu0 0
      %1756 = vmatprep.subr.bf16.mxu0 0
      %1757 = vmatpush1.bf16.msra.mxu0 0
      %1758 = vmatprep.subr.bf16.mxu0 0
      %1759 = vmatpush1.bf16.msra.mxu0 0
      %1760 = vmatprep.subr.bf16.mxu0 0
      %1761 = vmatpush1.bf16.msra.mxu0 0
      %1762 = vmatprep.subr.bf16.mxu0 0
      %1763 = vmatpush1.bf16.msra.mxu0 0
      %1764 = vmatprep.subr.bf16.mxu0 0
      %1765 = vmatpush1.bf16.msra.mxu0 0
      %1766 = vmatprep.subr.bf16.mxu0 0
      %1767 = vmatpush1.bf16.msra.mxu0 0
      %1768 = vmatprep.subr.bf16.mxu0 0
      %1769 = vmatpush1.bf16.msra.mxu0 0
      %1770 = vmatprep.subr.bf16.mxu0 0
      %1771 = vmatpush1.bf16.msra.mxu0 0
      %1772 = vmatprep.subr.bf16.mxu0 0
      %1773 = vmatpush1.bf16.msra.mxu0 0
      %1774 = vmatprep.subr.bf16.mxu0 0
      %1775 = vmatpush1.bf16.msra.mxu0 0
      %1776 = vmatprep.subr.bf16.mxu0 0
      %1777 = vmatpush1.bf16.msra.mxu0 0
      %1778 = vmatprep.subr.bf16.mxu0 0
      %1779 = vmatpush1.bf16.msra.mxu0 0
      %1780 = vmatprep.mubr.bf16.mxu0 0
      %1781 = vmatmul.mubr.bf16.gmra.mrb[0].mxu0 %v681
      %v1782 = vpop.f32.mrb[0].mxu0
      %v1783 = vadd.f32 %v1734, %v1782
      %v1784 = vpop.f32.mrb[0].mxu0
      %v1785 = vpop.f32.mrb[0].mxu0
      %v1786 = vpop.f32.mrb[0].mxu0
      %1787 = vdwg.mxu0
      %s1788 = scalar_lea.vmem %s6, 48
      %v1789 = vld [vmem:[%s1788] sm:$0xf]
      %v1790 = vld [vmem:[%s1788 + $0x4] sm:$0xf]
      %v1791 = vld [vmem:[%s1788 + $0x8] sm:$0xf]
      %v1792 = vld [vmem:[%s1788 + $0xc] sm:$0xf]
      %s1793 = scalar_lea.vmem %s7, 3
      %v1794 = vld [vmem:[%s1793] sm:$0x1]
      %v1796 = vlaneseq
      %v1797 = vshrl.u32 %v1796, 7
      %v1798 = vsub.s32 0, %v1797
      %v1799 = vrot.slane %v1794, %v1798
      %v1805 = vunpack.c.l.b16 %v1789
      %v1806 = vunpack.c.l.b16 %v1790
      %v1807 = vunpack.c.l.b16 %v1791
      %v1808 = vunpack.c.l.b16 %v1792
      %v1809 = vpack.c.b16 %v1806, %v1805
      %v1810 = vpack.c.b16 %v1808, %v1807
      %1813 = vmatprep.subr.bf16.mxu0 0
      %1814 = vmatpush1.bf16.msra.mxu0 %v1809
      %1815 = vmatprep.subr.bf16.mxu0 0
      %1816 = vmatpush1.bf16.msra.mxu0 %v1810
      %1817 = vmatprep.subr.bf16.mxu0 0
      %1818 = vmatpush1.bf16.msra.mxu0 0
      %1819 = vmatprep.subr.bf16.mxu0 0
      %1820 = vmatpush1.bf16.msra.mxu0 0
      %1821 = vmatprep.subr.bf16.mxu0 0
      %1822 = vmatpush1.bf16.msra.mxu0 0
      %1823 = vmatprep.subr.bf16.mxu0 0
      %1824 = vmatpush1.bf16.msra.mxu0 0
      %1825 = vmatprep.subr.bf16.mxu0 0
      %1826 = vmatpush1.bf16.msra.mxu0 0
      %1827 = vmatprep.subr.bf16.mxu0 0
      %1828 = vmatpush1.bf16.msra.mxu0 0
      %1829 = vmatprep.subr.bf16.mxu0 0
      %1830 = vmatpush1.bf16.msra.mxu0 0
      %1831 = vmatprep.subr.bf16.mxu0 0
      %1832 = vmatpush1.bf16.msra.mxu0 0
      %1833 = vmatprep.subr.bf16.mxu0 0
      %1834 = vmatpush1.bf16.msra.mxu0 0
      %1835 = vmatprep.subr.bf16.mxu0 0
      %1836 = vmatpush1.bf16.msra.mxu0 0
      %1837 = vmatprep.subr.bf16.mxu0 0
      %1838 = vmatpush1.bf16.msra.mxu0 0
      %1839 = vmatprep.subr.bf16.mxu0 0
      %1840 = vmatpush1.bf16.msra.mxu0 0
      %1841 = vmatprep.subr.bf16.mxu0 0
      %1842 = vmatpush1.bf16.msra.mxu0 0
      %1843 = vmatprep.subr.bf16.mxu0 0
      %1844 = vmatpush1.bf16.msra.mxu0 0
      %1845 = vmatprep.mubr.bf16.mxu0 0
      %1846 = vmatmul.mubr.bf16.gmra.mrb[0].mxu0 %v681
      %v1847 = vpop.f32.mrb[0].mxu0
      %v1848 = vadd.f32 %v1799, %v1847
      %v1849 = vpop.f32.mrb[0].mxu0
      %v1850 = vpop.f32.mrb[0].mxu0
      %v1851 = vpop.f32.mrb[0].mxu0
      %1852 = vdwg.mxu0
      %s1853 = scalar_lea.vmem %s8, 48
      %v1854 = vld [vmem:[%s1853] sm:$0xf]
      %v1855 = vld [vmem:[%s1853 + $0x4] sm:$0xf]
      %v1856 = vld [vmem:[%s1853 + $0x8] sm:$0xf]
      %v1857 = vld [vmem:[%s1853 + $0xc] sm:$0xf]
      %s1858 = scalar_lea.vmem %s9, 3
      %v1859 = vld [vmem:[%s1858] sm:$0x1]
      %v1861 = vlaneseq
      %v1862 = vshrl.u32 %v1861, 7
      %v1863 = vsub.s32 0, %v1862
      %v1864 = vrot.slane %v1859, %v1863
      %v1870 = vunpack.c.l.b16 %v1854
      %v1871 = vunpack.c.l.b16 %v1855
      %v1872 = vunpack.c.l.b16 %v1856
      %v1873 = vunpack.c.l.b16 %v1857
      %v1874 = vpack.c.b16 %v1871, %v1870
      %v1875 = vpack.c.b16 %v1873, %v1872
      %1878 = vmatprep.subr.bf16.mxu0 0
      %1879 = vmatpush1.bf16.msra.mxu0 %v1874
      %1880 = vmatprep.subr.bf16.mxu0 0
      %1881 = vmatpush1.bf16.msra.mxu0 %v1875
      %1882 = vmatprep.subr.bf16.mxu0 0
      %1883 = vmatpush1.bf16.msra.mxu0 0
      %1884 = vmatprep.subr.bf16.mxu0 0
      %1885 = vmatpush1.bf16.msra.mxu0 0
      %1886 = vmatprep.subr.bf16.mxu0 0
      %1887 = vmatpush1.bf16.msra.mxu0 0
      %1888 = vmatprep.subr.bf16.mxu0 0
      %1889 = vmatpush1.bf16.msra.mxu0 0
      %1890 = vmatprep.subr.bf16.mxu0 0
      %1891 = vmatpush1.bf16.msra.mxu0 0
      %1892 = vmatprep.subr.bf16.mxu0 0
      %1893 = vmatpush1.bf16.msra.mxu0 0
      %1894 = vmatprep.subr.bf16.mxu0 0
      %1895 = vmatpush1.bf16.msra.mxu0 0
      %1896 = vmatprep.subr.bf16.mxu0 0
      %1897 = vmatpush1.bf16.msra.mxu0 0
      %1898 = vmatprep.subr.bf16.mxu0 0
      %1899 = vmatpush1.bf16.msra.mxu0 0
      %1900 = vmatprep.subr.bf16.mxu0 0
      %1901 = vmatpush1.bf16.msra.mxu0 0
      %1902 = vmatprep.subr.bf16.mxu0 0
      %1903 = vmatpush1.bf16.msra.mxu0 0
      %1904 = vmatprep.subr.bf16.mxu0 0
      %1905 = vmatpush1.bf16.msra.mxu0 0
      %1906 = vmatprep.subr.bf16.mxu0 0
      %1907 = vmatpush1.bf16.msra.mxu0 0
      %1908 = vmatprep.subr.bf16.mxu0 0
      %1909 = vmatpush1.bf16.msra.mxu0 0
      %1910 = vmatprep.mubr.bf16.mxu0 0
      %1911 = vmatmul.mubr.bf16.gmra.mrb[0].mxu0 %v681
      %v1912 = vpop.f32.mrb[0].mxu0
      %v1913 = vadd.f32 %v1864, %v1912
      %v1914 = vpop.f32.mrb[0].mxu0
      %v1915 = vpop.f32.mrb[0].mxu0
      %v1916 = vpop.f32.mrb[0].mxu0
      %1917 = vdwg.mxu0
      %v1918 = vpack.c.bf16 %v1783, %v1783
      %v1919 = vpack.c.bf16 %v1848, %v1848
      %v1921 = vsel %vm851, %v1918, 0
      %v1924 = vsel %vm851, %v1919, 0
      %1926 = vmatprep.subr.bf16.mxu0 0
      %1927 = vmatpush1.bf16.xpose.msra.mxu0 %v1924
      %1928 = vmatprep.subr.bf16.mxu0 0
      %1929 = vmatpush1.bf16.xpose.msra.mxu0 0
      %1930 = vmatprep.subr.bf16.mxu0 0
      %1931 = vmatpush1.bf16.xpose.msra.mxu0 0
      %1932 = vmatprep.subr.bf16.mxu0 0
      %1933 = vmatpush1.bf16.xpose.msra.mxu0 0
      %1934 = vmatprep.subr.bf16.mxu0 0
      %1935 = vmatpush1.bf16.xpose.msra.mxu0 0
      %1936 = vmatprep.subr.bf16.mxu0 0
      %1937 = vmatpush1.bf16.xpose.msra.mxu0 0
      %1938 = vmatprep.subr.bf16.mxu0 0
      %1939 = vmatpush1.bf16.xpose.msra.mxu0 0
      %1940 = vmatprep.subr.bf16.mxu0 0
      %1941 = vmatpush1.bf16.xpose.msra.mxu0 0
      %1942 = vmatprep.subr.bf16.mxu0 0
      %1943 = vmatpush1.bf16.xpose.msra.mxu0 0
      %1944 = vmatprep.subr.bf16.mxu0 0
      %1945 = vmatpush1.bf16.xpose.msra.mxu0 0
      %1946 = vmatprep.subr.bf16.mxu0 0
      %1947 = vmatpush1.bf16.xpose.msra.mxu0 0
      %1948 = vmatprep.subr.bf16.mxu0 0
      %1949 = vmatpush1.bf16.xpose.msra.mxu0 0
      %1950 = vmatprep.subr.bf16.mxu0 0
      %1951 = vmatpush1.bf16.xpose.msra.mxu0 0
      %1952 = vmatprep.subr.bf16.mxu0 0
      %1953 = vmatpush1.bf16.xpose.msra.mxu0 0
      %1954 = vmatprep.subr.bf16.mxu0 0
      %1955 = vmatpush1.bf16.xpose.msra.mxu0 0
      %1956 = vmatprep.subr.bf16.mxu0 0
      %1957 = vmatpush1.bf16.xpose.msra.mxu0 0
      %1958 = vmatprep.mubr.bf16.mxu0 0
      %1959 = vmatmul.mubr.bf16.gmra.mrb[0].mxu0 %v1921
      %v1960 = vpop.f32.mrb[0].mxu0
      %v1961 = vadd.f32 0.0, %v1960
      %v1962 = vpop.f32.mrb[0].mxu0
      %v1963 = vpop.f32.mrb[0].mxu0
      %v1964 = vpop.f32.mrb[0].mxu0
      %1965 = vdwg.mxu0
      %v1966 = vmul.f32 %v1961, 0.35355338
      %s1967 = scalar_lea.vmem %s614, 12
      %v1968 = vld [vmem:[%s1967] sm:$0xf]
      %v1969 = vadd.f32 %v1966, %v1968
      %v1970 = vsel %vm901, %v1969, -inf
      %1971 = vmax.xlane.f32.xlu0 %v1970
      %v1972 = vpop.xlane.xlu0 %1971
      %v1973 = vsub.f32 %v1969, %v1972
      %v1974 = vmul.f32 %v1973, 1.442695
      %v1975 = vpow.pop %v1974
      %v1976 = vsel %vm901, %v1975, 0.0
      %1977 = vadd.xlane.f32.xlu0 %v1976
      %v1978 = vpop.xlane.xlu0 %1977
      %v1979 = vrcp.pop %v1978
      %v1980 = vmul.f32 %v1975, %v1979
      %v1981 = vpack.c.bf16 %v1980, %v1980
      %v1982 = vpack.c.bf16 %v1913, %v1913
      %v1984 = vsel %vm915, %v1981, 0
      %v1987 = vsel %vm919, %v1982, 0
      %1989 = vmatprep.subr.bf16.mxu0 0
      %1990 = vmatpush1.bf16.msra.mxu0 %v1987
      %1991 = vmatprep.subr.bf16.mxu0 0
      %1992 = vmatpush1.bf16.msra.mxu0 0
      %1993 = vmatprep.subr.bf16.mxu0 0
      %1994 = vmatpush1.bf16.msra.mxu0 0
      %1995 = vmatprep.subr.bf16.mxu0 0
      %1996 = vmatpush1.bf16.msra.mxu0 0
      %1997 = vmatprep.subr.bf16.mxu0 0
      %1998 = vmatpush1.bf16.msra.mxu0 0
      %1999 = vmatprep.subr.bf16.mxu0 0
      %2000 = vmatpush1.bf16.msra.mxu0 0
      %2001 = vmatprep.subr.bf16.mxu0 0
      %2002 = vmatpush1.bf16.msra.mxu0 0
      %2003 = vmatprep.subr.bf16.mxu0 0
      %2004 = vmatpush1.bf16.msra.mxu0 0
      %2005 = vmatprep.subr.bf16.mxu0 0
      %2006 = vmatpush1.bf16.msra.mxu0 0
      %2007 = vmatprep.subr.bf16.mxu0 0
      %2008 = vmatpush1.bf16.msra.mxu0 0
      %2009 = vmatprep.subr.bf16.mxu0 0
      %2010 = vmatpush1.bf16.msra.mxu0 0
      %2011 = vmatprep.subr.bf16.mxu0 0
      %2012 = vmatpush1.bf16.msra.mxu0 0
      %2013 = vmatprep.subr.bf16.mxu0 0
      %2014 = vmatpush1.bf16.msra.mxu0 0
      %2015 = vmatprep.subr.bf16.mxu0 0
      %2016 = vmatpush1.bf16.msra.mxu0 0
      %2017 = vmatprep.subr.bf16.mxu0 0
      %2018 = vmatpush1.bf16.msra.mxu0 0
      %2019 = vmatprep.subr.bf16.mxu0 0
      %2020 = vmatpush1.bf16.msra.mxu0 0
      %2021 = vmatprep.mubr.bf16.mxu0 0
      %2022 = vmatmul.mubr.bf16.gmra.mrb[0].mxu0 %v1984
      %v2023 = vpop.f32.mrb[0].mxu0
      %v2024 = vadd.f32 0.0, %v2023
      %v2025 = vpop.f32.mrb[0].mxu0
      %v2026 = vpop.f32.mrb[0].mxu0
      %v2027 = vpop.f32.mrb[0].mxu0
      %2028 = vdwg.mxu0
      %v2029 = vpack.c.bf16 %v2024, %v2024
      %s2030 = scalar_lea.vmem %s10, 12
      %v2031 = vld [vmem:[%s2030] sm:$0xf]
      %v2033 = vsel %vm851, %v2029, 0
      %v2036 = vsel %vm1277, %v2031, 0
      %2038 = vmatprep.subr.bf16.mxu0 0
      %2039 = vmatpush1.bf16.msra.mxu0 %v2036
      %2040 = vmatprep.subr.bf16.mxu0 0
      %2041 = vmatpush1.bf16.msra.mxu0 0
      %2042 = vmatprep.subr.bf16.mxu0 0
      %2043 = vmatpush1.bf16.msra.mxu0 0
      %2044 = vmatprep.subr.bf16.mxu0 0
      %2045 = vmatpush1.bf16.msra.mxu0 0
      %2046 = vmatprep.subr.bf16.mxu0 0
      %2047 = vmatpush1.bf16.msra.mxu0 0
      %2048 = vmatprep.subr.bf16.mxu0 0
      %2049 = vmatpush1.bf16.msra.mxu0 0
      %2050 = vmatprep.subr.bf16.mxu0 0
      %2051 = vmatpush1.bf16.msra.mxu0 0
      %2052 = vmatprep.subr.bf16.mxu0 0
      %2053 = vmatpush1.bf16.msra.mxu0 0
      %2054 = vmatprep.subr.bf16.mxu0 0
      %2055 = vmatpush1.bf16.msra.mxu0 0
      %2056 = vmatprep.subr.bf16.mxu0 0
      %2057 = vmatpush1.bf16.msra.mxu0 0
      %2058 = vmatprep.subr.bf16.mxu0 0
      %2059 = vmatpush1.bf16.msra.mxu0 0
      %2060 = vmatprep.subr.bf16.mxu0 0
      %2061 = vmatpush1.bf16.msra.mxu0 0
      %2062 = vmatprep.subr.bf16.mxu0 0
      %2063 = vmatpush1.bf16.msra.mxu0 0
      %2064 = vmatprep.subr.bf16.mxu0 0
      %2065 = vmatpush1.bf16.msra.mxu0 0
      %2066 = vmatprep.subr.bf16.mxu0 0
      %2067 = vmatpush1.bf16.msra.mxu0 0
      %2068 = vmatprep.subr.bf16.mxu0 0
      %2069 = vmatpush1.bf16.msra.mxu0 0
      %2070 = vmatprep.mubr.bf16.mxu0 0
      %2071 = vmatmul.mubr.bf16.gmra.mrb[0].mxu0 %v2033
      %v2072 = vpop.f32.mrb[0].mxu0
      %v2073 = vadd.f32 0.0, %v2072
      %v2074 = vpop.f32.mrb[0].mxu0
      %v2075 = vpop.f32.mrb[0].mxu0
      %v2076 = vpop.f32.mrb[0].mxu0
      %2077 = vdwg.mxu0
      %v2078 = vadd.f32 %v1722, %v2073
      %v2079 = vadd.f32 %v623, %v2078
      %v2080 = vld [vmem:[%s11] sm:$0x1]
      %v2082 = vlaneseq
      %v2083 = vshrl.u32 %v2082, 7
      %v2084 = vsub.s32 0, %v2083
      %v2085 = vrot.slane %v2080, %v2084
      %v2087 = vadd.f32 %v2079, %v2085
      %v2088 = vld [vmem:[%s12] sm:$0x1]
      %v2089 = vld [vmem:[%s13] sm:$0x1]
      %v2090 = vsel %vm626, %v2087, 0.0
      %2091 = vadd.xlane.f32.xlu0 %v2090
      %v2092 = vpop.xlane.xlu0 %2091
      %v2093 = vmul.f32 %v2092, %v630
      %v2094 = vsub.f32 %v2087, %v2093
      %v2095 = vmul.f32 %v2094, %v2094
      %v2096 = vsel %vm626, %v2095, 0.0
      %2097 = vadd.xlane.f32.xlu0 %v2096
      %v2098 = vpop.xlane.xlu0 %2097
      %v2099 = vmul.f32 %v2098, %v630
      %v2100 = vadd.f32 %v2099, 1e-05
      %v2101 = vrsqrt.pop %v2100
      %v2102 = vmul.f32 %v2094, %v2101
      %v2104 = vlaneseq
      %v2105 = vshrl.u32 %v2104, 7
      %v2106 = vsub.s32 0, %v2105
      %v2107 = vrot.slane %v2088, %v2106
      %v2109 = vmul.f32 %v2102, %v2107
      %v2111 = vlaneseq
      %v2112 = vshrl.u32 %v2111, 7
      %v2113 = vsub.s32 0, %v2112
      %v2114 = vrot.slane %v2089, %v2113
      %v2116 = vadd.f32 %v2109, %v2114
      %v2117 = vpack.c.bf16 %v2116, %v2116
      %v2118 = vld [vmem:[%s14] sm:$0xf]
      %v2119 = vld [vmem:[%s14 + $0x4] sm:$0xf]
      %v2120 = vld [vmem:[%s14 + $0x8] sm:$0xf]
      %v2121 = vld [vmem:[%s14 + $0xc] sm:$0xf]
      %v2122 = vld [vmem:[%s15] sm:$0x1]
      %v2124 = vlaneseq
      %v2125 = vshrl.u32 %v2124, 7
      %v2126 = vsub.s32 0, %v2125
      %v2127 = vrot.slane %v2122, %v2126
      %v2133 = vunpack.c.l.b16 %v2118
      %v2134 = vunpack.c.l.b16 %v2119
      %v2135 = vunpack.c.l.b16 %v2120
      %v2136 = vunpack.c.l.b16 %v2121
      %v2137 = vpack.c.b16 %v2134, %v2133
      %v2138 = vpack.c.b16 %v2136, %v2135
      %v2142 = vsel %vm679, %v2117, 0
      %2144 = vmatprep.subr.bf16.mxu0 0
      %2145 = vmatpush1.bf16.msra.mxu0 %v2137
      %2146 = vmatprep.subr.bf16.mxu0 0
      %2147 = vmatpush1.bf16.msra.mxu0 %v2138
      %2148 = vmatprep.subr.bf16.mxu0 0
      %2149 = vmatpush1.bf16.msra.mxu0 0
      %2150 = vmatprep.subr.bf16.mxu0 0
      %2151 = vmatpush1.bf16.msra.mxu0 0
      %2152 = vmatprep.subr.bf16.mxu0 0
      %2153 = vmatpush1.bf16.msra.mxu0 0
      %2154 = vmatprep.subr.bf16.mxu0 0
      %2155 = vmatpush1.bf16.msra.mxu0 0
      %2156 = vmatprep.subr.bf16.mxu0 0
      %2157 = vmatpush1.bf16.msra.mxu0 0
      %2158 = vmatprep.subr.bf16.mxu0 0
      %2159 = vmatpush1.bf16.msra.mxu0 0
      %2160 = vmatprep.subr.bf16.mxu0 0
      %2161 = vmatpush1.bf16.msra.mxu0 0
      %2162 = vmatprep.subr.bf16.mxu0 0
      %2163 = vmatpush1.bf16.msra.mxu0 0
      %2164 = vmatprep.subr.bf16.mxu0 0
      %2165 = vmatpush1.bf16.msra.mxu0 0
      %2166 = vmatprep.subr.bf16.mxu0 0
      %2167 = vmatpush1.bf16.msra.mxu0 0
      %2168 = vmatprep.subr.bf16.mxu0 0
      %2169 = vmatpush1.bf16.msra.mxu0 0
      %2170 = vmatprep.subr.bf16.mxu0 0
      %2171 = vmatpush1.bf16.msra.mxu0 0
      %2172 = vmatprep.subr.bf16.mxu0 0
      %2173 = vmatpush1.bf16.msra.mxu0 0
      %2174 = vmatprep.subr.bf16.mxu0 0
      %2175 = vmatpush1.bf16.msra.mxu0 0
      %2176 = vmatprep.mubr.bf16.mxu0 0
      %2177 = vmatmul.mubr.bf16.gmra.mrb[0].mxu0 %v2142
      %v2178 = vpop.f32.mrb[0].mxu0
      %v2179 = vadd.f32 %v2127, %v2178
      %v2180 = vpop.f32.mrb[0].mxu0
      %v2181 = vpop.f32.mrb[0].mxu0
      %v2182 = vpop.f32.mrb[0].mxu0
      %2183 = vdwg.mxu0
      %v2184 = vmul.f32 %v2179, 0.5
      %v2185 = vmul.f32 %v2179, %v2179
      %v2186 = vmul.f32 %v2185, %v2179
      %v2187 = vmul.f32 %v2186, 0.044715
      %v2188 = vadd.f32 %v2179, %v2187
      %v2189 = vmul.f32 %v2188, 0.7978846
      %v2190 = vtanh.pop %v2189
      %v2191 = vadd.f32 %v2190, 1.0
      %v2192 = vmul.f32 %v2184, %v2191
      %v2193 = vpack.c.bf16 %v2192, %v2192
      %v2194 = vld [vmem:[%s16] sm:$0xf]
      %v2195 = vld [vmem:[%s16 + $0x4] sm:$0xf]
      %v2196 = vld [vmem:[%s16 + $0x8] sm:$0xf]
      %v2197 = vld [vmem:[%s16 + $0xc] sm:$0xf]
      %v2198 = vld [vmem:[%s16 + $0x10] sm:$0xf]
      %v2199 = vld [vmem:[%s16 + $0x14] sm:$0xf]
      %v2200 = vld [vmem:[%s16 + $0x18] sm:$0xf]
      %v2201 = vld [vmem:[%s16 + $0x1c] sm:$0xf]
      %v2202 = vld [vmem:[%s16 + $0x20] sm:$0xf]
      %v2203 = vld [vmem:[%s16 + $0x24] sm:$0xf]
      %v2204 = vld [vmem:[%s16 + $0x28] sm:$0xf]
      %v2205 = vld [vmem:[%s16 + $0x2c] sm:$0xf]
      %v2206 = vld [vmem:[%s16 + $0x30] sm:$0xf]
      %v2207 = vld [vmem:[%s16 + $0x34] sm:$0xf]
      %v2208 = vld [vmem:[%s16 + $0x38] sm:$0xf]
      %v2209 = vld [vmem:[%s16 + $0x3c] sm:$0xf]
      %v2210 = vld [vmem:[%s17] sm:$0x1]
      %v2212 = vlaneseq
      %v2213 = vshrl.u32 %v2212, 7
      %v2214 = vsub.s32 0, %v2213
      %v2215 = vrot.slane %v2210, %v2214
      %v2233 = vunpack.c.l.b16 %v2194
      %v2234 = vunpack.c.l.b16 %v2195
      %v2235 = vunpack.c.l.b16 %v2196
      %v2236 = vunpack.c.l.b16 %v2197
      %v2237 = vunpack.c.l.b16 %v2198
      %v2238 = vunpack.c.l.b16 %v2199
      %v2239 = vunpack.c.l.b16 %v2200
      %v2240 = vunpack.c.l.b16 %v2201
      %v2241 = vunpack.c.l.b16 %v2202
      %v2242 = vunpack.c.l.b16 %v2203
      %v2243 = vunpack.c.l.b16 %v2204
      %v2244 = vunpack.c.l.b16 %v2205
      %v2245 = vunpack.c.l.b16 %v2206
      %v2246 = vunpack.c.l.b16 %v2207
      %v2247 = vunpack.c.l.b16 %v2208
      %v2248 = vunpack.c.l.b16 %v2209
      %v2249 = vpack.c.b16 %v2234, %v2233
      %v2250 = vpack.c.b16 %v2236, %v2235
      %v2251 = vpack.c.b16 %v2238, %v2237
      %v2252 = vpack.c.b16 %v2240, %v2239
      %v2253 = vpack.c.b16 %v2242, %v2241
      %v2254 = vpack.c.b16 %v2244, %v2243
      %v2255 = vpack.c.b16 %v2246, %v2245
      %v2256 = vpack.c.b16 %v2248, %v2247
      %2265 = vmatprep.subr.bf16.mxu0 0
      %2266 = vmatpush1.bf16.msra.mxu0 %v2249
      %2267 = vmatprep.subr.bf16.mxu0 0
      %2268 = vmatpush1.bf16.msra.mxu0 %v2250
      %2269 = vmatprep.subr.bf16.mxu0 0
      %2270 = vmatpush1.bf16.msra.mxu0 %v2251
      %2271 = vmatprep.subr.bf16.mxu0 0
      %2272 = vmatpush1.bf16.msra.mxu0 %v2252
      %2273 = vmatprep.subr.bf16.mxu0 0
      %2274 = vmatpush1.bf16.msra.mxu0 %v2253
      %2275 = vmatprep.subr.bf16.mxu0 0
      %2276 = vmatpush1.bf16.msra.mxu0 %v2254
      %2277 = vmatprep.subr.bf16.mxu0 0
      %2278 = vmatpush1.bf16.msra.mxu0 %v2255
      %2279 = vmatprep.subr.bf16.mxu0 0
      %2280 = vmatpush1.bf16.msra.mxu0 %v2256
      %2281 = vmatprep.subr.bf16.mxu0 0
      %2282 = vmatpush1.bf16.msra.mxu0 0
      %2283 = vmatprep.subr.bf16.mxu0 0
      %2284 = vmatpush1.bf16.msra.mxu0 0
      %2285 = vmatprep.subr.bf16.mxu0 0
      %2286 = vmatpush1.bf16.msra.mxu0 0
      %2287 = vmatprep.subr.bf16.mxu0 0
      %2288 = vmatpush1.bf16.msra.mxu0 0
      %2289 = vmatprep.subr.bf16.mxu0 0
      %2290 = vmatpush1.bf16.msra.mxu0 0
      %2291 = vmatprep.subr.bf16.mxu0 0
      %2292 = vmatpush1.bf16.msra.mxu0 0
      %2293 = vmatprep.subr.bf16.mxu0 0
      %2294 = vmatpush1.bf16.msra.mxu0 0
      %2295 = vmatprep.subr.bf16.mxu0 0
      %2296 = vmatpush1.bf16.msra.mxu0 0
      %2297 = vmatprep.mubr.bf16.mxu0 0
      %2298 = vmatmul.mubr.bf16.gmra.mrb[0].mxu0 %v2193
      %v2299 = vpop.f32.mrb[0].mxu0
      %v2300 = vadd.f32 %v2215, %v2299
      %v2301 = vpop.f32.mrb[0].mxu0
      %v2302 = vpop.f32.mrb[0].mxu0
      %v2303 = vpop.f32.mrb[0].mxu0
      %2304 = vdwg.mxu0
      %v2305 = vadd.f32 %v2087, %v2300
      %2306 = vst.msk [vmem:[%s621] sm:$0xf] %vm626, %v2305
      %p2307 = scmp.lt.s32.totalorder %s33, 1
      %s2308 = scalar_select %p2307, %s33, 1
      %p2309 = scmp.lt.s32.totalorder %s34, 0
      %s2310 = scalar_select %p2309, %s34, 0
      %s2311 = sadd.s32 %s2310, %s2308
      %s2312 = smul.addr %s2311, 4
      %s2313 = scalar_lea.vmem %s18, %s2312
      // Predicated region
      $region93: #{vq_decoder_forward.5} parent=91 // pred_check
        %p2314 = pneg %p451
      $region94: #{vq_decoder_forward.5} parent=91 // pred_check_branch
        %2316 = sbr.rel (%p2314) target = $region96
      $region95: #{vq_decoder_forward.5} parent=91 // pred_region
        _
      $region96: #{vq_decoder_forward.5} parent=91 // pred_fallthru
        _
    $region92: #{vq_decoder_forward.5} parent=5 // pred_fallthru
      _
    %p2317 = scmp.le.s32.totalorder 2, %s24
    // Predicated region
    $region97: #{vq_decoder_forward.5} parent=5 // pred_check
      %p2318 = pneg %p2317
    $region98: #{vq_decoder_forward.5} parent=5 // pred_check_branch
      %2320 = sbr.rel (%p2318) target = $region100
    $region99: #{vq_decoder_forward.5} parent=5 // pred_region
      %s2321 = ssub.s32 %s24, 2
      // Predicated region
      $region101: #{vq_decoder_forward.5} parent=99 // pred_check
        %p2322 = pneg %p457
      $region102: #{vq_decoder_forward.5} parent=99 // pred_check_branch
        %2324 = sbr.rel (%p2322) target = $region104
      $region103: #{vq_decoder_forward.5} parent=99 // pred_region
        %p2325 = scmp.lt.s32.totalorder %s35, 1
        %s2326 = scalar_select %p2325, %s35, 1
        %p2327 = scmp.lt.s32.totalorder %s36, 0
        %s2328 = scalar_select %p2327, %s36, 0
        %s2329 = sadd.s32 %s2328, %s2326
        %s2330 = smul.addr %s2329, 4
        %s2331 = scalar_lea.vmem %s18, %s2330
      $region104: #{vq_decoder_forward.5} parent=99 // pred_fallthru
        _
    $region100: #{vq_decoder_forward.5} parent=5 // pred_fallthru
      _
  $region6: #{vq_decoder_forward.5} parent=0 // loop_footer
    %s28 = sadd.s32 1, %s24
  $region7: #{vq_decoder_forward.5} parent=0 // loop_footer_branch
    %23 = sbr.rel target = $region3
  $region8: #{vq_decoder_forward.5} parent=0 // loop_exit
    _

</llo_original>
